<compile_context>
chip_gen: v7x
topology: tpu7x:2x2x1
jax: 0.10.0
libtpu: 0.0.40
codegen_flags: <defaults>
</compile_context>

<pallas_src>
import functools

import jax
import jax.numpy as jnp
from jax.experimental import pallas as pl
from jax.experimental.pallas import tpu as pltpu


# -----------------------------------------------------------------------------
# Pallas kernel: the whole bottleneck block for one image per grid step
# -----------------------------------------------------------------------------
def _bottleneck_kernel(x_ref, w1_ref, b1_ref, w2_ref, b2_ref, o_ref, pad_ref,
                       *, H, W, has_downsample, use_leaky_relu, alpha):
    Cp = x_ref.shape[-1]

    def act(v):
        if use_leaky_relu:
            # module default alpha_leaky_relu = 0.001
            return jnp.where(v > 0, v, alpha * v)
        return jnp.maximum(v, 0.0)

    x = x_ref[0]                                    # (H*W, Cp) f32 (also the residual)
    xb = x.astype(jnp.bfloat16)

    # conv1 (+ fused downsample 1x1 when present): one bf16 MXU matmul, f32 accumulate.
    # RHS is (Cp, Cp) without downsample, (Cp, 2*Cp) with (conv1 | downsample stacked).
    y = jnp.dot(xb, w1_ref[...], preferred_element_type=jnp.float32) + b1_ref[...]
    if has_downsample:
        y1 = act(y[:, :Cp])                         # conv1 path (BN+bias already folded)
        identity = y[:, Cp:2 * Cp]                  # downsample path: conv+BN, no ReLU
    else:
        y1 = act(y)
        identity = x

    # Zero-padded spatial buffer (padding=1) for conv2's 3x3 window.
    pad_ref[...] = jnp.zeros_like(pad_ref)
    pad_ref[pl.ds(1, H), pl.ds(1, W), :] = y1.reshape(H, W, Cp).astype(pad_ref.dtype)

    # conv2: 3x3 conv (stride 1) as 9 shifted-window matmuls accumulated in f32.
    acc = None
    for ki in range(3):
        for kj in range(3):
            win = pad_ref[pl.ds(ki, H), pl.ds(kj, W), :].reshape(H * W, Cp)
            t = jnp.dot(win, w2_ref[ki * 3 + kj], preferred_element_type=jnp.float32)
            acc = t if acc is None else acc + t
    y2 = act(acc + b2_ref[...])

    # residual shortcut + final activation
    o_ref[0] = act(y2 + identity).astype(o_ref.dtype)


# -----------------------------------------------------------------------------
# Host-side BN folding / padding helpers
# -----------------------------------------------------------------------------
def _round_up(v, m):
    return (v + m - 1) // m * m


def _fold_bn_1x1(p, Cp, eps):
    c_out, c_in = p["w"].shape[:2]
    scale = p["gamma"] * jax.lax.rsqrt(p["var"] + eps)
    w = (p["w"][:, :, 0, 0] * scale[:, None]).T                      # (Cin, Cout)
    b = p["beta"] + (p["b"] - p["mean"]) * scale
    w = jnp.pad(w, ((0, Cp - c_in), (0, Cp - c_out))).astype(jnp.bfloat16)
    b = jnp.pad(b, (0, Cp - c_out)).reshape(1, Cp).astype(jnp.float32)
    return w, b


def _fold_bn_3x3(p, Cp, eps):
    c_out, c_in = p["w"].shape[:2]
    scale = p["gamma"] * jax.lax.rsqrt(p["var"] + eps)
    w = p["w"] * scale[:, None, None, None]                          # (Cout, Cin, 3, 3)
    w = jnp.transpose(w, (2, 3, 1, 0)).reshape(9, c_in, c_out)       # tap-major (ki*3+kj)
    b = p["beta"] + (p["b"] - p["mean"]) * scale
    w = jnp.pad(w, ((0, 0), (0, Cp - c_in), (0, Cp - c_out))).astype(jnp.bfloat16)
    b = jnp.pad(b, (0, Cp - c_out)).reshape(1, Cp).astype(jnp.float32)
    return w, b


# -----------------------------------------------------------------------------
# Forward pass (jit'd so layout glue fuses and dispatch overhead disappears)
# -----------------------------------------------------------------------------
@functools.partial(
    jax.jit,
    static_argnames=("stride", "check_for_downsample", "use_leaky_relu", "alpha", "eps"))
def resnet_bottleneck_block_forward(params, x_nchw, *, stride=1,
                                    check_for_downsample=False,
                                    use_leaky_relu=False,
                                    alpha=1e-3, eps=1e-5):
    if stride != 1:
        # TODO(synk): strided conv2/downsample variant not implemented in the fused kernel.
        raise NotImplementedError("fused kernel supports stride=1 only")

    N, C, H, W = x_nchw.shape
    expansion = 4
    has_downsample = bool(check_for_downsample and (stride != 1 or C != expansion * C))

    Cp = _round_up(C, 128)   # lane-dense channel padding (zero weights/bias on pads)

    # NCHW -> NHWC, pad channels, flatten spatial rows.
    x = jnp.transpose(x_nchw, (0, 2, 3, 1)).astype(jnp.float32)
    x = jnp.pad(x, ((0, 0), (0, 0), (0, 0), (0, Cp - C))).reshape(N, H * W, Cp)

    w1, b1 = _fold_bn_1x1(params["conv1"], Cp, eps)
    w2, b2 = _fold_bn_3x3(params["conv2"], Cp, eps)
    if has_downsample:
        wd, bd = _fold_bn_1x1(params["downsample"], Cp, eps)
        w1 = jnp.concatenate([w1, wd], axis=1)       # (Cp, 2*Cp) bf16
        b1 = jnp.concatenate([b1, bd], axis=1)       # (1, 2*Cp) f32
    C1 = w1.shape[1]                                 # Cp or 2*Cp (static)

    kernel = functools.partial(_bottleneck_kernel, H=H, W=W,
                               has_downsample=has_downsample,
                               use_leaky_relu=use_leaky_relu, alpha=float(alpha))

    out = pl.pallas_call(
        kernel,
        out_shape=jax.ShapeDtypeStruct((N, H * W, Cp), jnp.float32),
        grid=(N,),
        in_specs=[
            pl.BlockSpec((1, H * W, Cp), lambda i: (i, 0, 0)),
            pl.BlockSpec((Cp, C1), lambda i: (0, 0)),
            pl.BlockSpec((1, C1), lambda i: (0, 0)),
            pl.BlockSpec((9, Cp, Cp), lambda i: (0, 0, 0)),
            pl.BlockSpec((1, Cp), lambda i: (0, 0)),
        ],
        out_specs=pl.BlockSpec((1, H * W, Cp), lambda i: (i, 0, 0)),
        scratch_shapes=[pltpu.VMEM((H + 2, W + 2, Cp), jnp.bfloat16)],
        compiler_params=pltpu.CompilerParams(dimension_semantics=("parallel",)),
    )(x, w1, b1, w2, b2)

    out = out.reshape(N, H, W, Cp)[:, :, :, :C]
    return jnp.transpose(out, (0, 3, 1, 2))


# -----------------------------------------------------------------------------
# Deterministic parameters + pure-JAX reference
# -----------------------------------------------------------------------------
def make_bottleneck_params(key, channels):
    # TODO(synk): BatchNorm is applied in eval mode (running stats); training-mode batch
    # statistics are not implemented.
    def conv_bn(key, c_in, c_out, k):
        ks = jax.random.split(key, 6)
        fan_in = c_in * k * k
        return dict(
            w=jax.random.normal(ks[0], (c_out, c_in, k, k), jnp.float32) / jnp.sqrt(float(fan_in)),
            b=0.01 * jax.random.normal(ks[1], (c_out,), jnp.float32),
            gamma=1.0 + 0.1 * jax.random.normal(ks[2], (c_out,), jnp.float32),
            beta=0.1 * jax.random.normal(ks[3], (c_out,), jnp.float32),
            mean=0.1 * jax.random.normal(ks[4], (c_out,), jnp.float32),
            var=0.9 + 0.2 * jnp.abs(jax.random.normal(ks[5], (c_out,), jnp.float32)),
        )

    k1, k2, k3 = jax.random.split(key, 3)
    return {
        "conv1": conv_bn(k1, channels, channels, 1),
        "conv2": conv_bn(k2, channels, channels, 3),
        "downsample": conv_bn(k3, channels, channels, 1),   # only used if configured
    }


def _reference_forward(params, x_nchw, *, check_for_downsample=False,
                       use_leaky_relu=False, alpha=1e-3, eps=1e-5):
    def act(v):
        return jnp.where(v > 0, v, alpha * v) if use_leaky_relu else jnp.maximum(v, 0.0)

    def conv_bn(x, p, pad, relu=True):
        y = jax.lax.conv_general_dilated(
            x, p["w"], window_strides=(1, 1), padding=[(pad, pad), (pad, pad)],
            dimension_numbers=("NCHW", "OIHW", "NCHW"))
        y = y + p["b"][None, :, None, None]
        scale = (p["gamma"] * jax.lax.rsqrt(p["var"] + eps))[None, :, None, None]
        y = (y - p["mean"][None, :, None, None]) * scale + p["beta"][None, :, None, None]
        return act(y) if relu else y

    identity = x_nchw
    y = conv_bn(x_nchw, params["conv1"], 0)
    y = conv_bn(y, params["conv2"], 1)
    if check_for_downsample:
        identity = conv_bn(identity, params["downsample"], 0, relu=False)
    return act(y + identity)


# -----------------------------------------------------------------------------
if __name__ == "__main__":
    key = jax.random.PRNGKey(0)
    pkey, xkey = jax.random.split(key)

    # The module's forward only type-checks when in_channels == out_channels
    # (conv2 is declared with in_channels but consumes conv1's out_channels).
    channels = 4
    params = make_bottleneck_params(pkey, channels)
    x = jax.random.normal(xkey, (2, channels, 16, 16), jnp.float32)

    def run_and_check(**kw):
        out = jax.block_until_ready(resnet_bottleneck_block_forward(params, x, **kw))
        ref = _reference_forward(
            params, x,
            check_for_downsample=kw.get("check_for_downsample", False),
            use_leaky_relu=kw.get("use_leaky_relu", False))
        assert out.shape == x.shape, out.shape
        assert bool(jnp.all(jnp.isfinite(out)))
        rel_err = float(jnp.max(jnp.abs(out - ref) / (jnp.abs(ref) + 1.0)))
        assert rel_err < 0.05, f"max relative error vs reference ({kw}): {rel_err}"
        return out

    # Default config: plain residual, ReLU.
    out = run_and_check()
    assert bool(jnp.all(out >= 0.0))                 # final ReLU

    # Downsample branch active (fused into the conv1 matmul).
    run_and_check(check_for_downsample=True)

    # Leaky-ReLU variant.
    run_and_check(use_leaky_relu=True)

    print("KERNEL_OK")
</pallas_src>

<mosaic_0001>
module attributes {stable_mosaic.version = 11 : i64} {
  func.func @_bottleneck_kernel(%arg0: i32, %arg1: memref<1x256x128xf32, #tpu.memory_space<vmem>>, %arg2: memref<128x128xbf16, #tpu.memory_space<vmem>>, %arg3: memref<1x128xf32, #tpu.memory_space<vmem>>, %arg4: memref<9x128x128xbf16, #tpu.memory_space<vmem>>, %arg5: memref<1x128xf32, #tpu.memory_space<vmem>>, %arg6: memref<1x256x128xf32, #tpu.memory_space<vmem>>, %arg7: memref<18x18x128xbf16, #tpu.memory_space<vmem>>) attributes {dimension_semantics = [#tpu.dimension_semantics<parallel>], iteration_bounds = array<i64: 2>, scalar_prefetch = 0 : i64, scratch_operands = 1 : i64, tpu.core_type = #tpu.core_type<tc>, window_params = [{transform_indices = @transform_0, window_bounds = array<i64: 1, 256, 128>}, {pipeline_mode = #tpu.pipeline_mode<synchronous>, transform_indices = @transform_1, window_bounds = array<i64: 128, 128>}, {pipeline_mode = #tpu.pipeline_mode<synchronous>, transform_indices = @transform_2, window_bounds = array<i64: 1, 128>}, {pipeline_mode = #tpu.pipeline_mode<synchronous>, transform_indices = @transform_3, window_bounds = array<i64: 9, 128, 128>}, {pipeline_mode = #tpu.pipeline_mode<synchronous>, transform_indices = @transform_4, window_bounds = array<i64: 1, 128>}, {transform_indices = @transform_5, window_bounds = array<i64: 1, 256, 128>}]} {
    %c0 = arith.constant 0 : index
    %c0_0 = arith.constant 0 : index
    %c0_1 = arith.constant 0 : index
    %0 = vector.load %arg1[%c0, %c0_0, %c0_1] : memref<1x256x128xf32, #tpu.memory_space<vmem>>, vector<1x256x128xf32>
    %1 = vector.shape_cast %0 : vector<1x256x128xf32> to vector<256x128xf32>
    %2 = arith.truncf %1 : vector<256x128xf32> to vector<256x128xbf16>
    %c0_2 = arith.constant 0 : index
    %c0_3 = arith.constant 0 : index
    %3 = vector.load %arg2[%c0_2, %c0_3] : memref<128x128xbf16, #tpu.memory_space<vmem>>, vector<128x128xbf16>
    %cst = arith.constant dense<0.000000e+00> : vector<256x128xf32>
    %4 = tpu.matmul %2, %3, %cst {dimension_numbers = #tpu.dot_dimension_numbers<[1], [0], [0], [1], [0, 0, 1, 1], [], []>} : vector<256x128xbf16>, vector<128x128xbf16>, vector<256x128xf32> -> vector<256x128xf32>
    %c0_4 = arith.constant 0 : index
    %c0_5 = arith.constant 0 : index
    %5 = vector.load %arg3[%c0_4, %c0_5] : memref<1x128xf32, #tpu.memory_space<vmem>>, vector<1x128xf32>
    %6 = vector.broadcast %5 : vector<1x128xf32> to vector<256x128xf32>
    %7 = arith.addf %4, %6 : vector<256x128xf32>
    %cst_6 = arith.constant 0.000000e+00 : f32
    %8 = vector.broadcast %cst_6 : f32 to vector<256x128xf32>
    %9 = arith.maximumf %7, %8 : vector<256x128xf32>
    %cst_7 = arith.constant 0.000000e+00 : bf16
    %10 = vector.broadcast %cst_7 : bf16 to vector<18x18x128xbf16>
    %c0_8 = arith.constant 0 : index
    %c0_9 = arith.constant 0 : index
    %c0_10 = arith.constant 0 : index
    %11 = vector.load %arg7[%c0_8, %c0_9, %c0_10] : memref<18x18x128xbf16, #tpu.memory_space<vmem>>, vector<18x18x128xbf16>
    tpu.vector_store %arg7[%c0_8, %c0_9, %c0_10], %10 {strides = array<i32>} : memref<18x18x128xbf16, #tpu.memory_space<vmem>>, vector<18x18x128xbf16>,
    %12 = vector.shape_cast %9 : vector<256x128xf32> to vector<16x16x128xf32>
    %13 = arith.truncf %12 : vector<16x16x128xf32> to vector<16x16x128xbf16>
    %c1 = arith.constant 1 : index
    %c1_11 = arith.constant 1 : index
    %c0_12 = arith.constant 0 : index
    %14 = vector.load %arg7[%c1, %c1_11, %c0_12] : memref<18x18x128xbf16, #tpu.memory_space<vmem>>, vector<16x16x128xbf16>
    tpu.vector_store %arg7[%c1, %c1_11, %c0_12], %13 {strides = array<i32>} : memref<18x18x128xbf16, #tpu.memory_space<vmem>>, vector<16x16x128xbf16>,
    %c0_13 = arith.constant 0 : index
    %c0_14 = arith.constant 0 : index
    %c0_15 = arith.constant 0 : index
    %15 = vector.load %arg7[%c0_13, %c0_14, %c0_15] : memref<18x18x128xbf16, #tpu.memory_space<vmem>>, vector<16x16x128xbf16>
    %16 = vector.shape_cast %15 : vector<16x16x128xbf16> to vector<256x128xbf16>
    %c0_16 = arith.constant 0 : index
    %c0_17 = arith.constant 0 : index
    %c0_18 = arith.constant 0 : index
    %17 = vector.load %arg4[%c0_16, %c0_17, %c0_18] : memref<9x128x128xbf16, #tpu.memory_space<vmem>>, vector<1x128x128xbf16>
    %18 = vector.shape_cast %17 : vector<1x128x128xbf16> to vector<128x128xbf16>
    %cst_19 = arith.constant dense<0.000000e+00> : vector<256x128xf32>
    %19 = tpu.matmul %16, %18, %cst_19 {dimension_numbers = #tpu.dot_dimension_numbers<[1], [0], [0], [1], [0, 0, 1, 1], [], []>} : vector<256x128xbf16>, vector<128x128xbf16>, vector<256x128xf32> -> vector<256x128xf32>
    %c0_20 = arith.constant 0 : index
    %c1_21 = arith.constant 1 : index
    %c0_22 = arith.constant 0 : index
    %20 = vector.load %arg7[%c0_20, %c1_21, %c0_22] : memref<18x18x128xbf16, #tpu.memory_space<vmem>>, vector<16x16x128xbf16>
    %21 = vector.shape_cast %20 : vector<16x16x128xbf16> to vector<256x128xbf16>
    %c1_23 = arith.constant 1 : index
    %c0_24 = arith.constant 0 : index
    %c0_25 = arith.constant 0 : index
    %22 = vector.load %arg4[%c1_23, %c0_24, %c0_25] : memref<9x128x128xbf16, #tpu.memory_space<vmem>>, vector<1x128x128xbf16>
    %23 = vector.shape_cast %22 : vector<1x128x128xbf16> to vector<128x128xbf16>
    %cst_26 = arith.constant dense<0.000000e+00> : vector<256x128xf32>
    %24 = tpu.matmul %21, %23, %cst_26 {dimension_numbers = #tpu.dot_dimension_numbers<[1], [0], [0], [1], [0, 0, 1, 1], [], []>} : vector<256x128xbf16>, vector<128x128xbf16>, vector<256x128xf32> -> vector<256x128xf32>
    %25 = arith.addf %19, %24 : vector<256x128xf32>
    %c0_27 = arith.constant 0 : index
    %c2 = arith.constant 2 : index
    %c0_28 = arith.constant 0 : index
    %26 = vector.load %arg7[%c0_27, %c2, %c0_28] : memref<18x18x128xbf16, #tpu.memory_space<vmem>>, vector<16x16x128xbf16>
    %27 = vector.shape_cast %26 : vector<16x16x128xbf16> to vector<256x128xbf16>
    %c2_29 = arith.constant 2 : index
    %c0_30 = arith.constant 0 : index
    %c0_31 = arith.constant 0 : index
    %28 = vector.load %arg4[%c2_29, %c0_30, %c0_31] : memref<9x128x128xbf16, #tpu.memory_space<vmem>>, vector<1x128x128xbf16>
    %29 = vector.shape_cast %28 : vector<1x128x128xbf16> to vector<128x128xbf16>
    %cst_32 = arith.constant dense<0.000000e+00> : vector<256x128xf32>
    %30 = tpu.matmul %27, %29, %cst_32 {dimension_numbers = #tpu.dot_dimension_numbers<[1], [0], [0], [1], [0, 0, 1, 1], [], []>} : vector<256x128xbf16>, vector<128x128xbf16>, vector<256x128xf32> -> vector<256x128xf32>
    %31 = arith.addf %25, %30 : vector<256x128xf32>
    %c1_33 = arith.constant 1 : index
    %c0_34 = arith.constant 0 : index
    %c0_35 = arith.constant 0 : index
    %32 = vector.load %arg7[%c1_33, %c0_34, %c0_35] : memref<18x18x128xbf16, #tpu.memory_space<vmem>>, vector<16x16x128xbf16>
    %33 = vector.shape_cast %32 : vector<16x16x128xbf16> to vector<256x128xbf16>
    %c3 = arith.constant 3 : index
    %c0_36 = arith.constant 0 : index
    %c0_37 = arith.constant 0 : index
    %34 = vector.load %arg4[%c3, %c0_36, %c0_37] : memref<9x128x128xbf16, #tpu.memory_space<vmem>>, vector<1x128x128xbf16>
    %35 = vector.shape_cast %34 : vector<1x128x128xbf16> to vector<128x128xbf16>
    %cst_38 = arith.constant dense<0.000000e+00> : vector<256x128xf32>
    %36 = tpu.matmul %33, %35, %cst_38 {dimension_numbers = #tpu.dot_dimension_numbers<[1], [0], [0], [1], [0, 0, 1, 1], [], []>} : vector<256x128xbf16>, vector<128x128xbf16>, vector<256x128xf32> -> vector<256x128xf32>
    %37 = arith.addf %31, %36 : vector<256x128xf32>
    %c1_39 = arith.constant 1 : index
    %c1_40 = arith.constant 1 : index
    %c0_41 = arith.constant 0 : index
    %38 = vector.load %arg7[%c1_39, %c1_40, %c0_41] : memref<18x18x128xbf16, #tpu.memory_space<vmem>>, vector<16x16x128xbf16>
    %39 = vector.shape_cast %38 : vector<16x16x128xbf16> to vector<256x128xbf16>
    %c4 = arith.constant 4 : index
    %c0_42 = arith.constant 0 : index
    %c0_43 = arith.constant 0 : index
    %40 = vector.load %arg4[%c4, %c0_42, %c0_43] : memref<9x128x128xbf16, #tpu.memory_space<vmem>>, vector<1x128x128xbf16>
    %41 = vector.shape_cast %40 : vector<1x128x128xbf16> to vector<128x128xbf16>
    %cst_44 = arith.constant dense<0.000000e+00> : vector<256x128xf32>
    %42 = tpu.matmul %39, %41, %cst_44 {dimension_numbers = #tpu.dot_dimension_numbers<[1], [0], [0], [1], [0, 0, 1, 1], [], []>} : vector<256x128xbf16>, vector<128x128xbf16>, vector<256x128xf32> -> vector<256x128xf32>
    %43 = arith.addf %37, %42 : vector<256x128xf32>
    %c1_45 = arith.constant 1 : index
    %c2_46 = arith.constant 2 : index
    %c0_47 = arith.constant 0 : index
    %44 = vector.load %arg7[%c1_45, %c2_46, %c0_47] : memref<18x18x128xbf16, #tpu.memory_space<vmem>>, vector<16x16x128xbf16>
    %45 = vector.shape_cast %44 : vector<16x16x128xbf16> to vector<256x128xbf16>
    %c5 = arith.constant 5 : index
    %c0_48 = arith.constant 0 : index
    %c0_49 = arith.constant 0 : index
    %46 = vector.load %arg4[%c5, %c0_48, %c0_49] : memref<9x128x128xbf16, #tpu.memory_space<vmem>>, vector<1x128x128xbf16>
    %47 = vector.shape_cast %46 : vector<1x128x128xbf16> to vector<128x128xbf16>
    %cst_50 = arith.constant dense<0.000000e+00> : vector<256x128xf32>
    %48 = tpu.matmul %45, %47, %cst_50 {dimension_numbers = #tpu.dot_dimension_numbers<[1], [0], [0], [1], [0, 0, 1, 1], [], []>} : vector<256x128xbf16>, vector<128x128xbf16>, vector<256x128xf32> -> vector<256x128xf32>
    %49 = arith.addf %43, %48 : vector<256x128xf32>
    %c2_51 = arith.constant 2 : index
    %c0_52 = arith.constant 0 : index
    %c0_53 = arith.constant 0 : index
    %50 = vector.load %arg7[%c2_51, %c0_52, %c0_53] : memref<18x18x128xbf16, #tpu.memory_space<vmem>>, vector<16x16x128xbf16>
    %51 = vector.shape_cast %50 : vector<16x16x128xbf16> to vector<256x128xbf16>
    %c6 = arith.constant 6 : index
    %c0_54 = arith.constant 0 : index
    %c0_55 = arith.constant 0 : index
    %52 = vector.load %arg4[%c6, %c0_54, %c0_55] : memref<9x128x128xbf16, #tpu.memory_space<vmem>>, vector<1x128x128xbf16>
    %53 = vector.shape_cast %52 : vector<1x128x128xbf16> to vector<128x128xbf16>
    %cst_56 = arith.constant dense<0.000000e+00> : vector<256x128xf32>
    %54 = tpu.matmul %51, %53, %cst_56 {dimension_numbers = #tpu.dot_dimension_numbers<[1], [0], [0], [1], [0, 0, 1, 1], [], []>} : vector<256x128xbf16>, vector<128x128xbf16>, vector<256x128xf32> -> vector<256x128xf32>
    %55 = arith.addf %49, %54 : vector<256x128xf32>
    %c2_57 = arith.constant 2 : index
    %c1_58 = arith.constant 1 : index
    %c0_59 = arith.constant 0 : index
    %56 = vector.load %arg7[%c2_57, %c1_58, %c0_59] : memref<18x18x128xbf16, #tpu.memory_space<vmem>>, vector<16x16x128xbf16>
    %57 = vector.shape_cast %56 : vector<16x16x128xbf16> to vector<256x128xbf16>
    %c7 = arith.constant 7 : index
    %c0_60 = arith.constant 0 : index
    %c0_61 = arith.constant 0 : index
    %58 = vector.load %arg4[%c7, %c0_60, %c0_61] : memref<9x128x128xbf16, #tpu.memory_space<vmem>>, vector<1x128x128xbf16>
    %59 = vector.shape_cast %58 : vector<1x128x128xbf16> to vector<128x128xbf16>
    %cst_62 = arith.constant dense<0.000000e+00> : vector<256x128xf32>
    %60 = tpu.matmul %57, %59, %cst_62 {dimension_numbers = #tpu.dot_dimension_numbers<[1], [0], [0], [1], [0, 0, 1, 1], [], []>} : vector<256x128xbf16>, vector<128x128xbf16>, vector<256x128xf32> -> vector<256x128xf32>
    %61 = arith.addf %55, %60 : vector<256x128xf32>
    %c2_63 = arith.constant 2 : index
    %c2_64 = arith.constant 2 : index
    %c0_65 = arith.constant 0 : index
    %62 = vector.load %arg7[%c2_63, %c2_64, %c0_65] : memref<18x18x128xbf16, #tpu.memory_space<vmem>>, vector<16x16x128xbf16>
    %63 = vector.shape_cast %62 : vector<16x16x128xbf16> to vector<256x128xbf16>
    %c8 = arith.constant 8 : index
    %c0_66 = arith.constant 0 : index
    %c0_67 = arith.constant 0 : index
    %64 = vector.load %arg4[%c8, %c0_66, %c0_67] : memref<9x128x128xbf16, #tpu.memory_space<vmem>>, vector<1x128x128xbf16>
    %65 = vector.shape_cast %64 : vector<1x128x128xbf16> to vector<128x128xbf16>
    %cst_68 = arith.constant dense<0.000000e+00> : vector<256x128xf32>
    %66 = tpu.matmul %63, %65, %cst_68 {dimension_numbers = #tpu.dot_dimension_numbers<[1], [0], [0], [1], [0, 0, 1, 1], [], []>} : vector<256x128xbf16>, vector<128x128xbf16>, vector<256x128xf32> -> vector<256x128xf32>
    %67 = arith.addf %61, %66 : vector<256x128xf32>
    %c0_69 = arith.constant 0 : index
    %c0_70 = arith.constant 0 : index
    %68 = vector.load %arg5[%c0_69, %c0_70] : memref<1x128xf32, #tpu.memory_space<vmem>>, vector<1x128xf32>
    %69 = vector.broadcast %68 : vector<1x128xf32> to vector<256x128xf32>
    %70 = arith.addf %67, %69 : vector<256x128xf32>
    %cst_71 = arith.constant 0.000000e+00 : f32
    %71 = vector.broadcast %cst_71 : f32 to vector<256x128xf32>
    %72 = arith.maximumf %70, %71 : vector<256x128xf32>
    %73 = arith.addf %72, %1 : vector<256x128xf32>
    %cst_72 = arith.constant 0.000000e+00 : f32
    %74 = vector.broadcast %cst_72 : f32 to vector<256x128xf32>
    %75 = arith.maximumf %73, %74 : vector<256x128xf32>
    %c0_73 = arith.constant 0 : index
    %c0_74 = arith.constant 0 : index
    %c0_75 = arith.constant 0 : index
    %76 = vector.load %arg6[%c0_73, %c0_74, %c0_75] : memref<1x256x128xf32, #tpu.memory_space<vmem>>, vector<1x256x128xf32>
    %77 = vector.shape_cast %76 : vector<1x256x128xf32> to vector<256x128xf32>
    %78 = vector.shape_cast %75 : vector<256x128xf32> to vector<1x256x128xf32>
    tpu.vector_store %arg6[%c0_73, %c0_74, %c0_75], %78 {strides = array<i32>} : memref<1x256x128xf32, #tpu.memory_space<vmem>>, vector<1x256x128xf32>,
    return
  }
  func.func @transform_0(%arg0: i32) -> (i32, i32, i32) {
    %c0_i32 = arith.constant 0 : i32
    %c0_i32_0 = arith.constant 0 : i32
    %c0_i32_1 = arith.constant 0 : i32
    return %arg0, %c0_i32, %c0_i32_0 : i32, i32, i32
  }
  func.func @transform_1(%arg0: i32) -> (i32, i32) {
    %c0_i32 = arith.constant 0 : i32
    %c0_i32_0 = arith.constant 0 : i32
    %c0_i32_1 = arith.constant 0 : i32
    return %c0_i32, %c0_i32_0 : i32, i32
  }
  func.func @transform_2(%arg0: i32) -> (i32, i32) {
    %c0_i32 = arith.constant 0 : i32
    %c0_i32_0 = arith.constant 0 : i32
    %c0_i32_1 = arith.constant 0 : i32
    return %c0_i32, %c0_i32_0 : i32, i32
  }
  func.func @transform_3(%arg0: i32) -> (i32, i32, i32) {
    %c0_i32 = arith.constant 0 : i32
    %c0_i32_0 = arith.constant 0 : i32
    %c0_i32_1 = arith.constant 0 : i32
    %c0_i32_2 = arith.constant 0 : i32
    return %c0_i32, %c0_i32_0, %c0_i32_1 : i32, i32, i32
  }
  func.func @transform_4(%arg0: i32) -> (i32, i32) {
    %c0_i32 = arith.constant 0 : i32
    %c0_i32_0 = arith.constant 0 : i32
    %c0_i32_1 = arith.constant 0 : i32
    return %c0_i32, %c0_i32_0 : i32, i32
  }
  func.func @transform_5(%arg0: i32) -> (i32, i32, i32) {
    %c0_i32 = arith.constant 0 : i32
    %c0_i32_0 = arith.constant 0 : i32
    %c0_i32_1 = arith.constant 0 : i32
    return %arg0, %c0_i32, %c0_i32_0 : i32, i32, i32
  }
}

</mosaic_0001>

<llo_original>
// kernel: resnet_bottleneck_block_forward.1
$region0: #{resnet_bottleneck_block_forward.1}
  #allocation0 [shape = 'u32[]', space=smem, size = 0x4, offset = 0x4, fixed_abs, tag = 'smem constant byte address 0x4 - core index']
  #allocation1 [shape = 'u32[144,128]{1,0:T(1,128)}', space=vmem, size = 0x12000, scoped, tag = 'internal scratch']
  #allocation2 [shape = 'bf16[18,18,128]{2,1,0:T(8,128)(2,1)}', space=vmem, size = 0x1b000, scoped, tag = 'scratch operand']
  %s0 = inlined_call_operand.vmem [shape: f32[2,256,128], index: 0, kind: input, shape index: {}]
  %s1 = inlined_call_operand.vmem [shape: bf16[128,128], index: 1, kind: input, shape index: {}]
  %s2 = inlined_call_operand.vmem [shape: f32[1,128], index: 2, kind: input, shape index: {}]
  %s3 = inlined_call_operand.vmem [shape: bf16[9,128,128], index: 3, kind: input, shape index: {}]
  %s4 = inlined_call_operand.vmem [shape: f32[1,128], index: 4, kind: input, shape index: {}]
  %s5 = inlined_call_operand.vmem [shape: f32[2,256,128], index: 5, kind: output, shape index: {}]
  %s6 = sld [smem:[#allocation0]]
  $region53: #{resnet_bottleneck_block_forward.1} parent=0
    _
  %s8 = ssub.s32 1, %s6
  %s9 = scalar_select 0, %s8, %s6
  loop: start=0, step=1, limit=4
  $region2: #{resnet_bottleneck_block_forward.1} parent=0 // loop_pre_header
    _
  $region3: #{resnet_bottleneck_block_forward.1} parent=0 // loop_header
    %s11 = sphi 0, %s15
    %p12 = scmp.ge.s32.totalorder %s11, 4
    %s21 = sphi 0, %s23
    %s24 = sphi 0, %s21
    %s25 = sphi 0, %s24
    %s41 = sphi 0, %s25
    %s45 = sphi 0, %s45
    %s47 = sphi 0, %s45
    %s48 = sphi 0, %s47
    %s62 = sphi 0, %s48
    %s66 = sphi 0, %s66
    %s68 = sphi 0, %s66
    %s69 = sphi 0, %s68
    %s83 = sphi 0, %s69
    %s87 = sphi 0, %s87
    %s89 = sphi 0, %s87
    %s90 = sphi 0, %s89
    %s104 = sphi 0, %s90
    %s108 = sphi 0, %s108
    %s110 = sphi 0, %s108
    %s111 = sphi 0, %s110
    %s125 = sphi 0, %s111
    %s131 = sphi 0, %s133
    %s134 = sphi 0, %s131
    %s135 = sphi 0, %s134
    %s151 = sphi 0, %s135
  $region4: #{resnet_bottleneck_block_forward.1} parent=0 // loop_header_branch
    %14 = sbr.rel (%p12) target = $region8
  $region5: #{resnet_bottleneck_block_forward.1} parent=0 // loop_body
    %s16 = ssub.s32 %s11, 1
    %s17 = ssub.s32 %s11, 2
    %s18 = sadd.s32 %s11, 1
    %s19 = ssub.s32 %s11, %s18
    %p20 = scmp.eq.s32.totalorder %s19, 0
    %s22 = sadd.s32 %s21, 1
    %s23 = scalar_select %p20, %s21, %s22
    %p26 = pneg %p20
    %p27 = scmp.eq.s32.totalorder %s11, 1
    %p28 = por %p26, %p27
    %p29 = scmp.ne.s32.totalorder %s21, %s24
    %p30 = scmp.eq.s32.totalorder %s11, 0
    %p31 = por %p29, %p30
    %p32 = scmp.ne.s32.totalorder %s21, %s24
    %p33 = scmp.eq.s32.totalorder %s16, 1
    %p34 = por %p32, %p33
    %p35 = scmp.ne.s32.totalorder %s24, %s25
    %p36 = scmp.eq.s32.totalorder %s16, 0
    %p37 = por %p35, %p36
    %p38 = scmp.ne.s32.totalorder %s24, %s25
    %p39 = scmp.eq.s32.totalorder %s17, 1
    %p40 = por %p38, %p39
    %p42 = scmp.ne.s32.totalorder %s25, %s41
    %p43 = scmp.eq.s32.totalorder %s17, 0
    %p44 = por %p42, %p43
    %s46 = sadd.s32 %s45, 1
    %p49 = scmp.eq.s32.totalorder %s11, 1
    %p50 = scmp.ne.s32.totalorder %s45, %s47
    %p51 = scmp.eq.s32.totalorder %s11, 0
    %p52 = por %p50, %p51
    %p53 = scmp.ne.s32.totalorder %s45, %s47
    %p54 = scmp.eq.s32.totalorder %s16, 1
    %p55 = por %p53, %p54
    %p56 = scmp.ne.s32.totalorder %s47, %s48
    %p57 = scmp.eq.s32.totalorder %s16, 0
    %p58 = por %p56, %p57
    %p59 = scmp.ne.s32.totalorder %s47, %s48
    %p60 = scmp.eq.s32.totalorder %s17, 1
    %p61 = por %p59, %p60
    %p63 = scmp.ne.s32.totalorder %s48, %s62
    %p64 = scmp.eq.s32.totalorder %s17, 0
    %p65 = por %p63, %p64
    %s67 = sadd.s32 %s66, 1
    %p70 = scmp.eq.s32.totalorder %s11, 1
    %p71 = scmp.ne.s32.totalorder %s66, %s68
    %p72 = scmp.eq.s32.totalorder %s11, 0
    %p73 = por %p71, %p72
    %p74 = scmp.ne.s32.totalorder %s66, %s68
    %p75 = scmp.eq.s32.totalorder %s16, 1
    %p76 = por %p74, %p75
    %p77 = scmp.ne.s32.totalorder %s68, %s69
    %p78 = scmp.eq.s32.totalorder %s16, 0
    %p79 = por %p77, %p78
    %p80 = scmp.ne.s32.totalorder %s68, %s69
    %p81 = scmp.eq.s32.totalorder %s17, 1
    %p82 = por %p80, %p81
    %p84 = scmp.ne.s32.totalorder %s69, %s83
    %p85 = scmp.eq.s32.totalorder %s17, 0
    %p86 = por %p84, %p85
    %s88 = sadd.s32 %s87, 1
    %p91 = scmp.eq.s32.totalorder %s11, 1
    %p92 = scmp.ne.s32.totalorder %s87, %s89
    %p93 = scmp.eq.s32.totalorder %s11, 0
    %p94 = por %p92, %p93
    %p95 = scmp.ne.s32.totalorder %s87, %s89
    %p96 = scmp.eq.s32.totalorder %s16, 1
    %p97 = por %p95, %p96
    %p98 = scmp.ne.s32.totalorder %s89, %s90
    %p99 = scmp.eq.s32.totalorder %s16, 0
    %p100 = por %p98, %p99
    %p101 = scmp.ne.s32.totalorder %s89, %s90
    %p102 = scmp.eq.s32.totalorder %s17, 1
    %p103 = por %p101, %p102
    %p105 = scmp.ne.s32.totalorder %s90, %s104
    %p106 = scmp.eq.s32.totalorder %s17, 0
    %p107 = por %p105, %p106
    %s109 = sadd.s32 %s108, 1
    %p112 = scmp.eq.s32.totalorder %s11, 1
    %p113 = scmp.ne.s32.totalorder %s108, %s110
    %p114 = scmp.eq.s32.totalorder %s11, 0
    %p115 = por %p113, %p114
    %p116 = scmp.ne.s32.totalorder %s108, %s110
    %p117 = scmp.eq.s32.totalorder %s16, 1
    %p118 = por %p116, %p117
    %p119 = scmp.ne.s32.totalorder %s110, %s111
    %p120 = scmp.eq.s32.totalorder %s16, 0
    %p121 = por %p119, %p120
    %p122 = scmp.ne.s32.totalorder %s110, %s111
    %p123 = scmp.eq.s32.totalorder %s17, 1
    %p124 = por %p122, %p123
    %p126 = scmp.ne.s32.totalorder %s111, %s125
    %p127 = scmp.eq.s32.totalorder %s17, 0
    %p128 = por %p126, %p127
    %s129 = ssub.s32 %s11, %s18
    %p130 = scmp.eq.s32.totalorder %s129, 0
    %s132 = sadd.s32 %s131, 1
    %s133 = scalar_select %p130, %s131, %s132
    %p136 = pneg %p130
    %p137 = scmp.eq.s32.totalorder %s11, 1
    %p138 = por %p136, %p137
    %p139 = scmp.ne.s32.totalorder %s131, %s134
    %p140 = scmp.eq.s32.totalorder %s11, 0
    %p141 = por %p139, %p140
    %p142 = scmp.ne.s32.totalorder %s131, %s134
    %p143 = scmp.eq.s32.totalorder %s16, 1
    %p144 = por %p142, %p143
    %p145 = scmp.ne.s32.totalorder %s134, %s135
    %p146 = scmp.eq.s32.totalorder %s16, 0
    %p147 = por %p145, %p146
    %p148 = scmp.ne.s32.totalorder %s134, %s135
    %p149 = scmp.eq.s32.totalorder %s17, 1
    %p150 = por %p148, %p149
    %p152 = scmp.ne.s32.totalorder %s135, %s151
    %p153 = scmp.eq.s32.totalorder %s17, 0
    %p154 = por %p152, %p153
    %p155 = scmp.le.s32.totalorder 1, %s11
    %p156 = scmp.lt.s32.totalorder %s11, 3
    %p157 = pnand %p155, %p156
    %p158 = pneg %p157
    // Predicated region
    $region9: #{resnet_bottleneck_block_forward.1} parent=5 // pred_check
      _
    $region10: #{resnet_bottleneck_block_forward.1} parent=5 // pred_check_branch
      %160 = sbr.rel (%p157) target = $region12
    $region11: #{resnet_bottleneck_block_forward.1} parent=5 // pred_region
      %s161 = ssub.s32 %s11, 1
      // Predicated region
      $region13: #{resnet_bottleneck_block_forward.1} parent=11 // pred_check
        %p162 = pneg %p58
      $region14: #{resnet_bottleneck_block_forward.1} parent=11 // pred_check_branch
        %164 = sbr.rel (%p162) target = $region16
      $region15: #{resnet_bottleneck_block_forward.1} parent=11 // pred_region
        _
      $region16: #{resnet_bottleneck_block_forward.1} parent=11 // pred_fallthru
        _
      // Predicated region
      $region17: #{resnet_bottleneck_block_forward.1} parent=11 // pred_check
        %p165 = pneg %p79
      $region18: #{resnet_bottleneck_block_forward.1} parent=11 // pred_check_branch
        %167 = sbr.rel (%p165) target = $region20
      $region19: #{resnet_bottleneck_block_forward.1} parent=11 // pred_region
        _
      $region20: #{resnet_bottleneck_block_forward.1} parent=11 // pred_fallthru
        _
      // Predicated region
      $region21: #{resnet_bottleneck_block_forward.1} parent=11 // pred_check
        %p168 = pneg %p100
      $region22: #{resnet_bottleneck_block_forward.1} parent=11 // pred_check_branch
        %170 = sbr.rel (%p168) target = $region24
      $region23: #{resnet_bottleneck_block_forward.1} parent=11 // pred_region
        _
      $region24: #{resnet_bottleneck_block_forward.1} parent=11 // pred_fallthru
        _
      // Predicated region
      $region25: #{resnet_bottleneck_block_forward.1} parent=11 // pred_check
        %p171 = pneg %p121
      $region26: #{resnet_bottleneck_block_forward.1} parent=11 // pred_check_branch
        %173 = sbr.rel (%p171) target = $region28
      $region27: #{resnet_bottleneck_block_forward.1} parent=11 // pred_region
        _
      $region28: #{resnet_bottleneck_block_forward.1} parent=11 // pred_fallthru
        _
    $region12: #{resnet_bottleneck_block_forward.1} parent=5 // pred_fallthru
      _
    %p174 = scmp.lt.s32.totalorder %s11, 2
    // Predicated region
    $region29: #{resnet_bottleneck_block_forward.1} parent=5 // pred_check
      %p175 = pneg %p174
    $region30: #{resnet_bottleneck_block_forward.1} parent=5 // pred_check_branch
      %177 = sbr.rel (%p175) target = $region32
    $region31: #{resnet_bottleneck_block_forward.1} parent=5 // pred_region
      // Predicated region
      $region33: #{resnet_bottleneck_block_forward.1} parent=31 // pred_check
        %p178 = pneg %p31
      $region34: #{resnet_bottleneck_block_forward.1} parent=31 // pred_check_branch
        %180 = sbr.rel (%p178) target = $region36
      $region35: #{resnet_bottleneck_block_forward.1} parent=31 // pred_region
        %p181 = scmp.lt.s32.totalorder %s11, 1
        %s182 = scalar_select %p181, %s11, 1
        %s183 = smul.addr %s182, 32
        %s184 = smul.addr %s183, 8
        %s185 = scalar_lea.vmem %s0, %s184
      $region36: #{resnet_bottleneck_block_forward.1} parent=31 // pred_fallthru
        _
    $region32: #{resnet_bottleneck_block_forward.1} parent=5 // pred_fallthru
      _
    %p186 = scmp.le.s32.totalorder 1, %s11
    %p187 = scmp.lt.s32.totalorder %s11, 3
    %p188 = pnand %p186, %p187
    %p189 = pneg %p188
    // Predicated region
    $region37: #{resnet_bottleneck_block_forward.1} parent=5 // pred_check
      _
    $region38: #{resnet_bottleneck_block_forward.1} parent=5 // pred_check_branch
      %191 = sbr.rel (%p188) target = $region40
    $region39: #{resnet_bottleneck_block_forward.1} parent=5 // pred_region
      %s192 = ssub.s32 %s11, 1
      %p193 = scmp.lt.s32.totalorder %s16, 1
      %s194 = scalar_select %p193, %s16, 1
      %s195 = smul.addr %s194, 32
      %s196 = smul.addr %s195, 8
      %s197 = scalar_lea.vmem %s0, %s196
      %p198 = pneg %p37
      %p199 = pneg %p34
      %p200 = pneg %p58
      %p201 = pneg %p55
      %p202 = pneg %p79
      %p203 = pneg %p76
      %p204 = pneg %p100
      %p205 = pneg %p97
      %p206 = pneg %p121
      %p207 = pneg %p118
      %p208 = pneg %p147
      %p209 = pneg %p144
      %p210 = scmp.lt.s32.totalorder %s16, 1
      %s211 = scalar_select %p210, %s16, 1
      %s212 = smul.addr %s211, 32
      %s213 = smul.addr %s212, 8
      %s214 = scalar_lea.vmem %s5, %s213
      %p215 = scmp.lt.s32.totalorder %s16, 1
      %s216 = scalar_select %p215, %s16, 1
      %s217 = smul.addr %s216, 32
      %s218 = smul.addr %s217, 8
      %s219 = scalar_lea.vmem %s0, %s218
      %p220 = scmp.lt.s32.totalorder %s16, 1
      %s221 = scalar_select %p220, %s16, 1
      %s222 = smul.addr %s221, 32
      %s223 = smul.addr %s222, 8
      %s224 = scalar_lea.vmem %s5, %s223
      %v226 = vld [vmem:[%s219] sm:$0xff]
      %v227 = vld [vmem:[%s219 + $0x8] sm:$0xff]
      %v228 = vld [vmem:[%s219 + $0x10] sm:$0xff]
      %v229 = vld [vmem:[%s219 + $0x18] sm:$0xff]
      %v230 = vld [vmem:[%s219 + $0x20] sm:$0xff]
      %v231 = vld [vmem:[%s219 + $0x28] sm:$0xff]
      %v232 = vld [vmem:[%s219 + $0x30] sm:$0xff]
      %v233 = vld [vmem:[%s219 + $0x38] sm:$0xff]
      %v234 = vld [vmem:[%s219 + $0x40] sm:$0xff]
      %v235 = vld [vmem:[%s219 + $0x48] sm:$0xff]
      %v236 = vld [vmem:[%s219 + $0x50] sm:$0xff]
      %v237 = vld [vmem:[%s219 + $0x58] sm:$0xff]
      %v238 = vld [vmem:[%s219 + $0x60] sm:$0xff]
      %v239 = vld [vmem:[%s219 + $0x68] sm:$0xff]
      %v240 = vld [vmem:[%s219 + $0x70] sm:$0xff]
      %v241 = vld [vmem:[%s219 + $0x78] sm:$0xff]
      %v242 = vld [vmem:[%s219 + $0x80] sm:$0xff]
      %v243 = vld [vmem:[%s219 + $0x88] sm:$0xff]
      %v244 = vld [vmem:[%s219 + $0x90] sm:$0xff]
      %v245 = vld [vmem:[%s219 + $0x98] sm:$0xff]
      %v246 = vld [vmem:[%s219 + $0xa0] sm:$0xff]
      %v247 = vld [vmem:[%s219 + $0xa8] sm:$0xff]
      %v248 = vld [vmem:[%s219 + $0xb0] sm:$0xff]
      %v249 = vld [vmem:[%s219 + $0xb8] sm:$0xff]
      %v250 = vld [vmem:[%s219 + $0xc0] sm:$0xff]
      %v251 = vld [vmem:[%s219 + $0xc8] sm:$0xff]
      %v252 = vld [vmem:[%s219 + $0xd0] sm:$0xff]
      %v253 = vld [vmem:[%s219 + $0xd8] sm:$0xff]
      %v254 = vld [vmem:[%s219 + $0xe0] sm:$0xff]
      %v255 = vld [vmem:[%s219 + $0xe8] sm:$0xff]
      %v256 = vld [vmem:[%s219 + $0xf0] sm:$0xff]
      %v257 = vld [vmem:[%s219 + $0xf8] sm:$0xff]
      %v258 = vpack.c.bf16 %v227, %v226
      %v259 = vpack.c.bf16 %v229, %v228
      %v260 = vpack.c.bf16 %v231, %v230
      %v261 = vpack.c.bf16 %v233, %v232
      %v262 = vpack.c.bf16 %v235, %v234
      %v263 = vpack.c.bf16 %v237, %v236
      %v264 = vpack.c.bf16 %v239, %v238
      %v265 = vpack.c.bf16 %v241, %v240
      %v266 = vpack.c.bf16 %v243, %v242
      %v267 = vpack.c.bf16 %v245, %v244
      %v268 = vpack.c.bf16 %v247, %v246
      %v269 = vpack.c.bf16 %v249, %v248
      %v270 = vpack.c.bf16 %v251, %v250
      %v271 = vpack.c.bf16 %v253, %v252
      %v272 = vpack.c.bf16 %v255, %v254
      %v273 = vpack.c.bf16 %v257, %v256
      %v274 = vld [vmem:[%s1] sm:$0xf]
      %v275 = vld [vmem:[%s1 + $0x4] sm:$0xf]
      %v276 = vld [vmem:[%s1 + $0x8] sm:$0xf]
      %v277 = vld [vmem:[%s1 + $0xc] sm:$0xf]
      %v278 = vld [vmem:[%s1 + $0x10] sm:$0xf]
      %v279 = vld [vmem:[%s1 + $0x14] sm:$0xf]
      %v280 = vld [vmem:[%s1 + $0x18] sm:$0xf]
      %v281 = vld [vmem:[%s1 + $0x1c] sm:$0xf]
      %v282 = vld [vmem:[%s1 + $0x20] sm:$0xf]
      %v283 = vld [vmem:[%s1 + $0x24] sm:$0xf]
      %v284 = vld [vmem:[%s1 + $0x28] sm:$0xf]
      %v285 = vld [vmem:[%s1 + $0x2c] sm:$0xf]
      %v286 = vld [vmem:[%s1 + $0x30] sm:$0xf]
      %v287 = vld [vmem:[%s1 + $0x34] sm:$0xf]
      %v288 = vld [vmem:[%s1 + $0x38] sm:$0xf]
      %v289 = vld [vmem:[%s1 + $0x3c] sm:$0xf]
      %v290 = vld [vmem:[%s2] sm:$0x1]
      %v292 = vlaneseq
      %v293 = vshrl.u32 %v292, 7
      %v294 = vsub.s32 0, %v293
      %v295 = vrot.slane %v290, %v294
      %v313 = vunpack.c.l.b16 %v274
      %v314 = vunpack.c.l.b16 %v275
      %v315 = vunpack.c.l.b16 %v276
      %v316 = vunpack.c.l.b16 %v277
      %v317 = vunpack.c.l.b16 %v278
      %v318 = vunpack.c.l.b16 %v279
      %v319 = vunpack.c.l.b16 %v280
      %v320 = vunpack.c.l.b16 %v281
      %v321 = vunpack.c.l.b16 %v282
      %v322 = vunpack.c.l.b16 %v283
      %v323 = vunpack.c.l.b16 %v284
      %v324 = vunpack.c.l.b16 %v285
      %v325 = vunpack.c.l.b16 %v286
      %v326 = vunpack.c.l.b16 %v287
      %v327 = vunpack.c.l.b16 %v288
      %v328 = vunpack.c.l.b16 %v289
      %v329 = vpack.c.b16 %v314, %v313
      %v330 = vpack.c.b16 %v316, %v315
      %v331 = vpack.c.b16 %v318, %v317
      %v332 = vpack.c.b16 %v320, %v319
      %v333 = vpack.c.b16 %v322, %v321
      %v334 = vpack.c.b16 %v324, %v323
      %v335 = vpack.c.b16 %v326, %v325
      %v336 = vpack.c.b16 %v328, %v327
      %345 = vmatprep.subr.bf16.mxu0 0
      %346 = vmatpush1.bf16.msra.mxu0 %v329
      %347 = vmatprep.subr.bf16.mxu0 0
      %348 = vmatpush1.bf16.msra.mxu0 %v330
      %349 = vmatprep.subr.bf16.mxu0 0
      %350 = vmatpush1.bf16.msra.mxu0 %v331
      %351 = vmatprep.subr.bf16.mxu0 0
      %352 = vmatpush1.bf16.msra.mxu0 %v332
      %353 = vmatprep.subr.bf16.mxu0 0
      %354 = vmatpush1.bf16.msra.mxu0 %v333
      %355 = vmatprep.subr.bf16.mxu0 0
      %356 = vmatpush1.bf16.msra.mxu0 %v334
      %357 = vmatprep.subr.bf16.mxu0 0
      %358 = vmatpush1.bf16.msra.mxu0 %v335
      %359 = vmatprep.subr.bf16.mxu0 0
      %360 = vmatpush1.bf16.msra.mxu0 %v336
      %361 = vmatprep.subr.bf16.mxu0 0
      %362 = vmatpush1.bf16.msra.mxu0 0
      %363 = vmatprep.subr.bf16.mxu0 0
      %364 = vmatpush1.bf16.msra.mxu0 0
      %365 = vmatprep.subr.bf16.mxu0 0
      %366 = vmatpush1.bf16.msra.mxu0 0
      %367 = vmatprep.subr.bf16.mxu0 0
      %368 = vmatpush1.bf16.msra.mxu0 0
      %369 = vmatprep.subr.bf16.mxu0 0
      %370 = vmatpush1.bf16.msra.mxu0 0
      %371 = vmatprep.subr.bf16.mxu0 0
      %372 = vmatpush1.bf16.msra.mxu0 0
      %373 = vmatprep.subr.bf16.mxu0 0
      %374 = vmatpush1.bf16.msra.mxu0 0
      %375 = vmatprep.subr.bf16.mxu0 0
      %376 = vmatpush1.bf16.msra.mxu0 0
      %377 = vmatprep.mubr.bf16.mxu0 0
      %378 = vmatmul.mubr.bf16.gmra.mrb[0].mxu0 %v258
      %v379 = vpop.f32.mrb[0].mxu0
      %v380 = vadd.f32 %v295, %v379
      %v381 = vpop.f32.mrb[0].mxu0
      %v382 = vpop.f32.mrb[0].mxu0
      %v383 = vadd.f32 %v295, %v382
      %v384 = vpop.f32.mrb[0].mxu0
      %385 = vmatprep.mubr.bf16.mxu0 0
      %386 = vmatmul.mubr.bf16.gmra.mrb[0].mxu0 %v259
      %v387 = vpop.f32.mrb[0].mxu0
      %v388 = vadd.f32 %v295, %v387
      %v389 = vpop.f32.mrb[0].mxu0
      %v390 = vpop.f32.mrb[0].mxu0
      %v391 = vadd.f32 %v295, %v390
      %v392 = vpop.f32.mrb[0].mxu0
      %393 = vmatprep.mubr.bf16.mxu0 0
      %394 = vmatmul.mubr.bf16.gmra.mrb[0].mxu0 %v260
      %v395 = vpop.f32.mrb[0].mxu0
      %v396 = vadd.f32 %v295, %v395
      %v397 = vpop.f32.mrb[0].mxu0
      %v398 = vpop.f32.mrb[0].mxu0
      %v399 = vadd.f32 %v295, %v398
      %v400 = vpop.f32.mrb[0].mxu0
      %401 = vmatprep.mubr.bf16.mxu0 0
      %402 = vmatmul.mubr.bf16.gmra.mrb[0].mxu0 %v261
      %v403 = vpop.f32.mrb[0].mxu0
      %v404 = vadd.f32 %v295, %v403
      %v405 = vpop.f32.mrb[0].mxu0
      %v406 = vpop.f32.mrb[0].mxu0
      %v407 = vadd.f32 %v295, %v406
      %v408 = vpop.f32.mrb[0].mxu0
      %409 = vmatprep.mubr.bf16.mxu0 0
      %410 = vmatmul.mubr.bf16.gmra.mrb[0].mxu0 %v262
      %v411 = vpop.f32.mrb[0].mxu0
      %v412 = vadd.f32 %v295, %v411
      %v413 = vpop.f32.mrb[0].mxu0
      %v414 = vpop.f32.mrb[0].mxu0
      %v415 = vadd.f32 %v295, %v414
      %v416 = vpop.f32.mrb[0].mxu0
      %417 = vmatprep.mubr.bf16.mxu0 0
      %418 = vmatmul.mubr.bf16.gmra.mrb[0].mxu0 %v263
      %v419 = vpop.f32.mrb[0].mxu0
      %v420 = vadd.f32 %v295, %v419
      %v421 = vpop.f32.mrb[0].mxu0
      %v422 = vpop.f32.mrb[0].mxu0
      %v423 = vadd.f32 %v295, %v422
      %v424 = vpop.f32.mrb[0].mxu0
      %425 = vmatprep.mubr.bf16.mxu0 0
      %426 = vmatmul.mubr.bf16.gmra.mrb[0].mxu0 %v264
      %v427 = vpop.f32.mrb[0].mxu0
      %v428 = vadd.f32 %v295, %v427
      %v429 = vpop.f32.mrb[0].mxu0
      %v430 = vpop.f32.mrb[0].mxu0
      %v431 = vadd.f32 %v295, %v430
      %v432 = vpop.f32.mrb[0].mxu0
      %433 = vmatprep.mubr.bf16.mxu0 0
      %434 = vmatmul.mubr.bf16.gmra.mrb[0].mxu0 %v265
      %v435 = vpop.f32.mrb[0].mxu0
      %v436 = vadd.f32 %v295, %v435
      %v437 = vpop.f32.mrb[0].mxu0
      %v438 = vpop.f32.mrb[0].mxu0
      %v439 = vadd.f32 %v295, %v438
      %v440 = vpop.f32.mrb[0].mxu0
      %441 = vmatprep.mubr.bf16.mxu0 0
      %442 = vmatmul.mubr.bf16.gmra.mrb[0].mxu0 %v266
      %v443 = vpop.f32.mrb[0].mxu0
      %v444 = vadd.f32 %v295, %v443
      %v445 = vpop.f32.mrb[0].mxu0
      %v446 = vpop.f32.mrb[0].mxu0
      %v447 = vadd.f32 %v295, %v446
      %v448 = vpop.f32.mrb[0].mxu0
      %449 = vmatprep.mubr.bf16.mxu0 0
      %450 = vmatmul.mubr.bf16.gmra.mrb[0].mxu0 %v267
      %v451 = vpop.f32.mrb[0].mxu0
      %v452 = vadd.f32 %v295, %v451
      %v453 = vpop.f32.mrb[0].mxu0
      %v454 = vpop.f32.mrb[0].mxu0
      %v455 = vadd.f32 %v295, %v454
      %v456 = vpop.f32.mrb[0].mxu0
      %457 = vmatprep.mubr.bf16.mxu0 0
      %458 = vmatmul.mubr.bf16.gmra.mrb[0].mxu0 %v268
      %v459 = vpop.f32.mrb[0].mxu0
      %v460 = vadd.f32 %v295, %v459
      %v461 = vpop.f32.mrb[0].mxu0
      %v462 = vpop.f32.mrb[0].mxu0
      %v463 = vadd.f32 %v295, %v462
      %v464 = vpop.f32.mrb[0].mxu0
      %465 = vmatprep.mubr.bf16.mxu0 0
      %466 = vmatmul.mubr.bf16.gmra.mrb[0].mxu0 %v269
      %v467 = vpop.f32.mrb[0].mxu0
      %v468 = vadd.f32 %v295, %v467
      %v469 = vpop.f32.mrb[0].mxu0
      %v470 = vpop.f32.mrb[0].mxu0
      %v471 = vadd.f32 %v295, %v470
      %v472 = vpop.f32.mrb[0].mxu0
      %473 = vmatprep.mubr.bf16.mxu0 0
      %474 = vmatmul.mubr.bf16.gmra.mrb[0].mxu0 %v270
      %v475 = vpop.f32.mrb[0].mxu0
      %v476 = vadd.f32 %v295, %v475
      %v477 = vpop.f32.mrb[0].mxu0
      %v478 = vpop.f32.mrb[0].mxu0
      %v479 = vadd.f32 %v295, %v478
      %v480 = vpop.f32.mrb[0].mxu0
      %481 = vmatprep.mubr.bf16.mxu0 0
      %482 = vmatmul.mubr.bf16.gmra.mrb[0].mxu0 %v271
      %v483 = vpop.f32.mrb[0].mxu0
      %v484 = vadd.f32 %v295, %v483
      %v485 = vpop.f32.mrb[0].mxu0
      %v486 = vpop.f32.mrb[0].mxu0
      %v487 = vadd.f32 %v295, %v486
      %v488 = vpop.f32.mrb[0].mxu0
      %489 = vmatprep.mubr.bf16.mxu0 0
      %490 = vmatmul.mubr.bf16.gmra.mrb[0].mxu0 %v272
      %v491 = vpop.f32.mrb[0].mxu0
      %v492 = vadd.f32 %v295, %v491
      %v493 = vpop.f32.mrb[0].mxu0
      %v494 = vpop.f32.mrb[0].mxu0
      %v495 = vadd.f32 %v295, %v494
      %v496 = vpop.f32.mrb[0].mxu0
      %497 = vmatprep.mubr.bf16.mxu0 0
      %498 = vmatmul.mubr.bf16.gmra.mrb[0].mxu0 %v273
      %v499 = vpop.f32.mrb[0].mxu0
      %v500 = vadd.f32 %v295, %v499
      %v501 = vpop.f32.mrb[0].mxu0
      %v502 = vpop.f32.mrb[0].mxu0
      %v503 = vadd.f32 %v295, %v502
      %v504 = vpop.f32.mrb[0].mxu0
      %505 = vdwg.mxu0
      %v506 = vmax.f32 %v380, 0.0
      %v507 = vmax.f32 %v383, 0.0
      %v508 = vmax.f32 %v388, 0.0
      %v509 = vmax.f32 %v391, 0.0
      %v510 = vmax.f32 %v396, 0.0
      %v511 = vmax.f32 %v399, 0.0
      %v512 = vmax.f32 %v404, 0.0
      %v513 = vmax.f32 %v407, 0.0
      %v514 = vmax.f32 %v412, 0.0
      %v515 = vmax.f32 %v415, 0.0
      %v516 = vmax.f32 %v420, 0.0
      %v517 = vmax.f32 %v423, 0.0
      %v518 = vmax.f32 %v428, 0.0
      %v519 = vmax.f32 %v431, 0.0
      %v520 = vmax.f32 %v436, 0.0
      %v521 = vmax.f32 %v439, 0.0
      %v522 = vmax.f32 %v444, 0.0
      %v523 = vmax.f32 %v447, 0.0
      %v524 = vmax.f32 %v452, 0.0
      %v525 = vmax.f32 %v455, 0.0
      %v526 = vmax.f32 %v460, 0.0
      %v527 = vmax.f32 %v463, 0.0
      %v528 = vmax.f32 %v468, 0.0
      %v529 = vmax.f32 %v471, 0.0
      %v530 = vmax.f32 %v476, 0.0
      %v531 = vmax.f32 %v479, 0.0
      %v532 = vmax.f32 %v484, 0.0
      %v533 = vmax.f32 %v487, 0.0
      %v534 = vmax.f32 %v492, 0.0
      %v535 = vmax.f32 %v495, 0.0
      %v536 = vmax.f32 %v500, 0.0
      %v537 = vmax.f32 %v503, 0.0
      %538 = vst [vmem:[#allocation2] sm:$0xf] 0
      %539 = vst [vmem:[#allocation2 + $0x4] sm:$0xf] 0
      %540 = vst [vmem:[#allocation2 + $0x8] sm:$0x1] 0
      %541 = vst [vmem:[#allocation2 + $0xc] sm:$0xf] 0
      %542 = vst [vmem:[#allocation2 + $0x10] sm:$0xf] 0
      %543 = vst [vmem:[#allocation2 + $0x14] sm:$0x1] 0
      %544 = vst [vmem:[#allocation2 + $0x18] sm:$0xf] 0
      %545 = vst [vmem:[#allocation2 + $0x1c] sm:$0xf] 0
      %546 = vst [vmem:[#allocation2 + $0x20] sm:$0x1] 0
      %547 = vst [vmem:[#allocation2 + $0x24] sm:$0xf] 0
      %548 = vst [vmem:[#allocation2 + $0x28] sm:$0xf] 0
      %549 = vst [vmem:[#allocation2 + $0x2c] sm:$0x1] 0
      %550 = vst [vmem:[#allocation2 + $0x30] sm:$0xf] 0
      %551 = vst [vmem:[#allocation2 + $0x34] sm:$0xf] 0
      %552 = vst [vmem:[#allocation2 + $0x38] sm:$0x1] 0
      %553 = vst [vmem:[#allocation2 + $0x3c] sm:$0xf] 0
      %554 = vst [vmem:[#allocation2 + $0x40] sm:$0xf] 0
      %555 = vst [vmem:[#allocation2 + $0x44] sm:$0x1] 0
      %556 = vst [vmem:[#allocation2 + $0x48] sm:$0xf] 0
      %557 = vst [vmem:[#allocation2 + $0x4c] sm:$0xf] 0
      %558 = vst [vmem:[#allocation2 + $0x50] sm:$0x1] 0
      %559 = vst [vmem:[#allocation2 + $0x54] sm:$0xf] 0
      %560 = vst [vmem:[#allocation2 + $0x58] sm:$0xf] 0
      %561 = vst [vmem:[#allocation2 + $0x5c] sm:$0x1] 0
      %562 = vst [vmem:[#allocation2 + $0x60] sm:$0xf] 0
      %563 = vst [vmem:[#allocation2 + $0x64] sm:$0xf] 0
      %564 = vst [vmem:[#allocation2 + $0x68] sm:$0x1] 0
      %565 = vst [vmem:[#allocation2 + $0x6c] sm:$0xf] 0
      %566 = vst [vmem:[#allocation2 + $0x70] sm:$0xf] 0
      %567 = vst [vmem:[#allocation2 + $0x74] sm:$0x1] 0
      %568 = vst [vmem:[#allocation2 + $0x78] sm:$0xf] 0
      %569 = vst [vmem:[#allocation2 + $0x7c] sm:$0xf] 0
      %570 = vst [vmem:[#allocation2 + $0x80] sm:$0x1] 0
      %571 = vst [vmem:[#allocation2 + $0x84] sm:$0xf] 0
      %572 = vst [vmem:[#allocation2 + $0x88] sm:$0xf] 0
      %573 = vst [vmem:[#allocation2 + $0x8c] sm:$0x1] 0
      %574 = vst [vmem:[#allocation2 + $0x90] sm:$0xf] 0
      %575 = vst [vmem:[#allocation2 + $0x94] sm:$0xf] 0
      %576 = vst [vmem:[#allocation2 + $0x98] sm:$0x1] 0
      %577 = vst [vmem:[#allocation2 + $0x9c] sm:$0xf] 0
      %578 = vst [vmem:[#allocation2 + $0xa0] sm:$0xf] 0
      %579 = vst [vmem:[#allocation2 + $0xa4] sm:$0x1] 0
      %580 = vst [vmem:[#allocation2 + $0xa8] sm:$0xf] 0
      %581 = vst [vmem:[#allocation2 + $0xac] sm:$0xf] 0
      %582 = vst [vmem:[#allocation2 + $0xb0] sm:$0x1] 0
      %583 = vst [vmem:[#allocation2 + $0xb4] sm:$0xf] 0
      %584 = vst [vmem:[#allocation2 + $0xb8] sm:$0xf] 0
      %585 = vst [vmem:[#allocation2 + $0xbc] sm:$0x1] 0
      %586 = vst [vmem:[#allocation2 + $0xc0] sm:$0xf] 0
      %587 = vst [vmem:[#allocation2 + $0xc4] sm:$0xf] 0
      %588 = vst [vmem:[#allocation2 + $0xc8] sm:$0x1] 0
      %589 = vst [vmem:[#allocation2 + $0xcc] sm:$0xf] 0
      %590 = vst [vmem:[#allocation2 + $0xd0] sm:$0xf] 0
      %591 = vst [vmem:[#allocation2 + $0xd4] sm:$0x1] 0
      %v592 = vpack.c.bf16 %v507, %v506
      %v593 = vpack.c.bf16 %v509, %v508
      %v594 = vpack.c.bf16 %v511, %v510
      %v595 = vpack.c.bf16 %v513, %v512
      %v596 = vpack.c.bf16 %v515, %v514
      %v597 = vpack.c.bf16 %v517, %v516
      %v598 = vpack.c.bf16 %v519, %v518
      %v599 = vpack.c.bf16 %v521, %v520
      %v600 = vpack.c.bf16 %v523, %v522
      %v601 = vpack.c.bf16 %v525, %v524
      %v602 = vpack.c.bf16 %v527, %v526
      %v603 = vpack.c.bf16 %v529, %v528
      %v604 = vpack.c.bf16 %v531, %v530
      %v605 = vpack.c.bf16 %v533, %v532
      %v606 = vpack.c.bf16 %v535, %v534
      %v607 = vpack.c.bf16 %v537, %v536
      %v624 = vunpack.c.l.b16 %v592
      %v625 = vunpack.c.h.b16 %v592
      %v626 = vunpack.c.l.b16 %v593
      %v627 = vunpack.c.h.b16 %v593
      %v628 = vunpack.c.l.b16 %v594
      %v629 = vunpack.c.h.b16 %v594
      %v630 = vunpack.c.l.b16 %v595
      %v631 = vunpack.c.h.b16 %v595
      %v632 = vunpack.c.l.b16 %v596
      %v633 = vunpack.c.h.b16 %v596
      %v634 = vunpack.c.l.b16 %v597
      %v635 = vunpack.c.h.b16 %v597
      %v636 = vunpack.c.l.b16 %v598
      %v637 = vunpack.c.h.b16 %v598
      %v638 = vunpack.c.l.b16 %v599
      %v639 = vunpack.c.h.b16 %v599
      %v640 = vunpack.c.l.b16 %v600
      %v641 = vunpack.c.h.b16 %v600
      %v642 = vunpack.c.l.b16 %v601
      %v643 = vunpack.c.h.b16 %v601
      %v644 = vunpack.c.l.b16 %v602
      %v645 = vunpack.c.h.b16 %v602
      %v646 = vunpack.c.l.b16 %v603
      %v647 = vunpack.c.h.b16 %v603
      %v648 = vunpack.c.l.b16 %v604
      %v649 = vunpack.c.h.b16 %v604
      %v650 = vunpack.c.l.b16 %v605
      %v651 = vunpack.c.h.b16 %v605
      %v652 = vunpack.c.l.b16 %v606
      %v653 = vunpack.c.h.b16 %v606
      %v654 = vunpack.c.l.b16 %v607
      %v655 = vunpack.c.h.b16 %v607
      %v656 = vpack.c.b16 %v624, %v624
      %v657 = vpack.c.b16 %v625, %v625
      %v658 = vpack.c.b16 %v626, %v626
      %v659 = vpack.c.b16 %v627, %v627
      %v660 = vpack.c.b16 %v628, %v628
      %v661 = vpack.c.b16 %v629, %v629
      %v662 = vpack.c.b16 %v630, %v630
      %v663 = vpack.c.b16 %v631, %v631
      %v664 = vpack.c.b16 %v632, %v632
      %v665 = vpack.c.b16 %v633, %v633
      %v666 = vpack.c.b16 %v634, %v634
      %v667 = vpack.c.b16 %v635, %v635
      %v668 = vpack.c.b16 %v636, %v636
      %v669 = vpack.c.b16 %v637, %v637
      %v670 = vpack.c.b16 %v638, %v638
      %v671 = vpack.c.b16 %v639, %v639
      %v672 = vpack.c.b16 %v640, %v640
      %v673 = vpack.c.b16 %v641, %v641
      %v674 = vpack.c.b16 %v642, %v642
      %v675 = vpack.c.b16 %v643, %v643
      %v676 = vpack.c.b16 %v644, %v644
      %v677 = vpack.c.b16 %v645, %v645
      %v678 = vpack.c.b16 %v646, %v646
      %v679 = vpack.c.b16 %v647, %v647
      %v680 = vpack.c.b16 %v648, %v648
      %v681 = vpack.c.b16 %v649, %v649
      %v682 = vpack.c.b16 %v650, %v650
      %v683 = vpack.c.b16 %v651, %v651
      %v684 = vpack.c.b16 %v652, %v652
      %v685 = vpack.c.b16 %v653, %v653
      %v686 = vpack.c.b16 %v654, %v654
      %v687 = vpack.c.b16 %v655, %v655
      %vm688 = vsmask.f32 256
      %vm689 = vsmask.f32 4368
      %vm690 = vmor %vm688, %vm689
      %v692 = vshrl.u32 %v656, 16
      %v694 = vrot.slane %v692, 7
      %v695 = vshll.u32 %v656, 16
      %v697 = vor.u32 %v694, %v695
      %v698 = vrot.slane %v694, 4
      %v700 = vshrl.u32 %v657, 16
      %v702 = vrot.slane %v700, 7
      %v703 = vshll.u32 %v657, 16
      %v705 = vor.u32 %v702, %v703
      %v706 = vsel %vm690, %v698, %v705
      %v707 = vrot.slane %v702, 4
      %v709 = vshrl.u32 %v658, 16
      %v711 = vrot.slane %v709, 7
      %v712 = vshll.u32 %v658, 16
      %v714 = vor.u32 %v711, %v712
      %v715 = vrot.slane %v711, 4
      %v717 = vshrl.u32 %v659, 16
      %v719 = vrot.slane %v717, 7
      %v720 = vshll.u32 %v659, 16
      %v722 = vor.u32 %v719, %v720
      %v723 = vsel %vm690, %v715, %v722
      %v724 = vrot.slane %v719, 4
      %v726 = vshrl.u32 %v660, 16
      %v728 = vrot.slane %v726, 7
      %v729 = vshll.u32 %v660, 16
      %v731 = vor.u32 %v728, %v729
      %v732 = vrot.slane %v728, 4
      %v734 = vshrl.u32 %v661, 16
      %v736 = vrot.slane %v734, 7
      %v737 = vshll.u32 %v661, 16
      %v739 = vor.u32 %v736, %v737
      %v740 = vsel %vm690, %v732, %v739
      %v741 = vrot.slane %v736, 4
      %v743 = vshrl.u32 %v662, 16
      %v745 = vrot.slane %v743, 7
      %v746 = vshll.u32 %v662, 16
      %v748 = vor.u32 %v745, %v746
      %v749 = vrot.slane %v745, 4
      %v751 = vshrl.u32 %v663, 16
      %v753 = vrot.slane %v751, 7
      %v754 = vshll.u32 %v663, 16
      %v756 = vor.u32 %v753, %v754
      %v757 = vsel %vm690, %v749, %v756
      %v758 = vrot.slane %v753, 4
      %v760 = vshrl.u32 %v664, 16
      %v762 = vrot.slane %v760, 7
      %v763 = vshll.u32 %v664, 16
      %v765 = vor.u32 %v762, %v763
      %v766 = vrot.slane %v762, 4
      %v768 = vshrl.u32 %v665, 16
      %v770 = vrot.slane %v768, 7
      %v771 = vshll.u32 %v665, 16
      %v773 = vor.u32 %v770, %v771
      %v774 = vsel %vm690, %v766, %v773
      %v775 = vrot.slane %v770, 4
      %v777 = vshrl.u32 %v666, 16
      %v779 = vrot.slane %v777, 7
      %v780 = vshll.u32 %v666, 16
      %v782 = vor.u32 %v779, %v780
      %v783 = vrot.slane %v779, 4
      %v785 = vshrl.u32 %v667, 16
      %v787 = vrot.slane %v785, 7
      %v788 = vshll.u32 %v667, 16
      %v790 = vor.u32 %v787, %v788
      %v791 = vsel %vm690, %v783, %v790
      %v792 = vrot.slane %v787, 4
      %v794 = vshrl.u32 %v668, 16
      %v796 = vrot.slane %v794, 7
      %v797 = vshll.u32 %v668, 16
      %v799 = vor.u32 %v796, %v797
      %v800 = vrot.slane %v796, 4
      %v802 = vshrl.u32 %v669, 16
      %v804 = vrot.slane %v802, 7
      %v805 = vshll.u32 %v669, 16
      %v807 = vor.u32 %v804, %v805
      %v808 = vsel %vm690, %v800, %v807
      %v809 = vrot.slane %v804, 4
      %v811 = vshrl.u32 %v670, 16
      %v813 = vrot.slane %v811, 7
      %v814 = vshll.u32 %v670, 16
      %v816 = vor.u32 %v813, %v814
      %v817 = vrot.slane %v813, 4
      %v819 = vshrl.u32 %v671, 16
      %v821 = vrot.slane %v819, 7
      %v822 = vshll.u32 %v671, 16
      %v824 = vor.u32 %v821, %v822
      %v825 = vsel %vm690, %v817, %v824
      %v826 = vrot.slane %v821, 4
      %v828 = vshrl.u32 %v672, 16
      %v830 = vrot.slane %v828, 7
      %v831 = vshll.u32 %v672, 16
      %v833 = vor.u32 %v830, %v831
      %v834 = vrot.slane %v830, 4
      %v836 = vshrl.u32 %v673, 16
      %v838 = vrot.slane %v836, 7
      %v839 = vshll.u32 %v673, 16
      %v841 = vor.u32 %v838, %v839
      %v842 = vsel %vm690, %v834, %v841
      %v843 = vrot.slane %v838, 4
      %v845 = vshrl.u32 %v674, 16
      %v847 = vrot.slane %v845, 7
      %v848 = vshll.u32 %v674, 16
      %v850 = vor.u32 %v847, %v848
      %v851 = vrot.slane %v847, 4
      %v853 = vshrl.u32 %v675, 16
      %v855 = vrot.slane %v853, 7
      %v856 = vshll.u32 %v675, 16
      %v858 = vor.u32 %v855, %v856
      %v859 = vsel %vm690, %v851, %v858
      %v860 = vrot.slane %v855, 4
      %v862 = vshrl.u32 %v676, 16
      %v864 = vrot.slane %v862, 7
      %v865 = vshll.u32 %v676, 16
      %v867 = vor.u32 %v864, %v865
      %v868 = vrot.slane %v864, 4
      %v870 = vshrl.u32 %v677, 16
      %v872 = vrot.slane %v870, 7
      %v873 = vshll.u32 %v677, 16
      %v875 = vor.u32 %v872, %v873
      %v876 = vsel %vm690, %v868, %v875
      %v877 = vrot.slane %v872, 4
      %v879 = vshrl.u32 %v678, 16
      %v881 = vrot.slane %v879, 7
      %v882 = vshll.u32 %v678, 16
      %v884 = vor.u32 %v881, %v882
      %v885 = vrot.slane %v881, 4
      %v887 = vshrl.u32 %v679, 16
      %v889 = vrot.slane %v887, 7
      %v890 = vshll.u32 %v679, 16
      %v892 = vor.u32 %v889, %v890
      %v893 = vsel %vm690, %v885, %v892
      %v894 = vrot.slane %v889, 4
      %v896 = vshrl.u32 %v680, 16
      %v898 = vrot.slane %v896, 7
      %v899 = vshll.u32 %v680, 16
      %v901 = vor.u32 %v898, %v899
      %v902 = vrot.slane %v898, 4
      %v904 = vshrl.u32 %v681, 16
      %v906 = vrot.slane %v904, 7
      %v907 = vshll.u32 %v681, 16
      %v909 = vor.u32 %v906, %v907
      %v910 = vsel %vm690, %v902, %v909
      %v911 = vrot.slane %v906, 4
      %v913 = vshrl.u32 %v682, 16
      %v915 = vrot.slane %v913, 7
      %v916 = vshll.u32 %v682, 16
      %v918 = vor.u32 %v915, %v916
      %v919 = vrot.slane %v915, 4
      %v921 = vshrl.u32 %v683, 16
      %v923 = vrot.slane %v921, 7
      %v924 = vshll.u32 %v683, 16
      %v926 = vor.u32 %v923, %v924
      %v927 = vsel %vm690, %v919, %v926
      %v928 = vrot.slane %v923, 4
      %v930 = vshrl.u32 %v684, 16
      %v932 = vrot.slane %v930, 7
      %v933 = vshll.u32 %v684, 16
      %v935 = vor.u32 %v932, %v933
      %v936 = vrot.slane %v932, 4
      %v938 = vshrl.u32 %v685, 16
      %v940 = vrot.slane %v938, 7
      %v941 = vshll.u32 %v685, 16
      %v943 = vor.u32 %v940, %v941
      %v944 = vsel %vm690, %v936, %v943
      %v945 = vrot.slane %v940, 4
      %v947 = vshrl.u32 %v686, 16
      %v949 = vrot.slane %v947, 7
      %v950 = vshll.u32 %v686, 16
      %v952 = vor.u32 %v949, %v950
      %v953 = vrot.slane %v949, 4
      %v955 = vshrl.u32 %v687, 16
      %v957 = vrot.slane %v955, 7
      %v958 = vshll.u32 %v687, 16
      %v960 = vor.u32 %v957, %v958
      %v961 = vsel %vm690, %v953, %v960
      %v962 = vrot.slane %v957, 4
      %s1011 = scalar_lea.vmem [#allocation2], 12
      %vm1012 = vcmask 1043456
      %vm1013 = vsmask.f32 7938
      %vm1014 = vmand %vm1012, %vm1013
      %v1015 = vld [vmem:[%s1011] sm:$0xf]
      %v1016 = vsel %vm1014, %v697, %v1015
      %1017 = vst [vmem:[%s1011] sm:$0xf] %v1016
      %1018 = vst [vmem:[%s1011 + $0x4] sm:$0xf] %v706
      %vm1019 = vcmask 1040384
      %vm1020 = vmand %vm1019, %vm688
      %v1021 = vld [vmem:[%s1011 + $0x8] sm:$0x1]
      %v1022 = vsel %vm1020, %v707, %v1021
      %1023 = vst [vmem:[%s1011 + $0x8] sm:$0x1] %v1022
      %v1024 = vld [vmem:[%s1011 + $0xc] sm:$0xf]
      %v1025 = vsel %vm1014, %v714, %v1024
      %1026 = vst [vmem:[%s1011 + $0xc] sm:$0xf] %v1025
      %1027 = vst [vmem:[%s1011 + $0x10] sm:$0xf] %v723
      %v1028 = vld [vmem:[%s1011 + $0x14] sm:$0x1]
      %v1029 = vsel %vm1020, %v724, %v1028
      %1030 = vst [vmem:[%s1011 + $0x14] sm:$0x1] %v1029
      %v1031 = vld [vmem:[%s1011 + $0x18] sm:$0xf]
      %v1032 = vsel %vm1014, %v731, %v1031
      %1033 = vst [vmem:[%s1011 + $0x18] sm:$0xf] %v1032
      %1034 = vst [vmem:[%s1011 + $0x1c] sm:$0xf] %v740
      %v1035 = vld [vmem:[%s1011 + $0x20] sm:$0x1]
      %v1036 = vsel %vm1020, %v741, %v1035
      %1037 = vst [vmem:[%s1011 + $0x20] sm:$0x1] %v1036
      %v1038 = vld [vmem:[%s1011 + $0x24] sm:$0xf]
      %v1039 = vsel %vm1014, %v748, %v1038
      %1040 = vst [vmem:[%s1011 + $0x24] sm:$0xf] %v1039
      %1041 = vst [vmem:[%s1011 + $0x28] sm:$0xf] %v757
      %v1042 = vld [vmem:[%s1011 + $0x2c] sm:$0x1]
      %v1043 = vsel %vm1020, %v758, %v1042
      %1044 = vst [vmem:[%s1011 + $0x2c] sm:$0x1] %v1043
      %v1045 = vld [vmem:[%s1011 + $0x30] sm:$0xf]
      %v1046 = vsel %vm1014, %v765, %v1045
      %1047 = vst [vmem:[%s1011 + $0x30] sm:$0xf] %v1046
      %1048 = vst [vmem:[%s1011 + $0x34] sm:$0xf] %v774
      %v1049 = vld [vmem:[%s1011 + $0x38] sm:$0x1]
      %v1050 = vsel %vm1020, %v775, %v1049
      %1051 = vst [vmem:[%s1011 + $0x38] sm:$0x1] %v1050
      %v1052 = vld [vmem:[%s1011 + $0x3c] sm:$0xf]
      %v1053 = vsel %vm1014, %v782, %v1052
      %1054 = vst [vmem:[%s1011 + $0x3c] sm:$0xf] %v1053
      %1055 = vst [vmem:[%s1011 + $0x40] sm:$0xf] %v791
      %v1056 = vld [vmem:[%s1011 + $0x44] sm:$0x1]
      %v1057 = vsel %vm1020, %v792, %v1056
      %1058 = vst [vmem:[%s1011 + $0x44] sm:$0x1] %v1057
      %v1059 = vld [vmem:[%s1011 + $0x48] sm:$0xf]
      %v1060 = vsel %vm1014, %v799, %v1059
      %1061 = vst [vmem:[%s1011 + $0x48] sm:$0xf] %v1060
      %1062 = vst [vmem:[%s1011 + $0x4c] sm:$0xf] %v808
      %v1063 = vld [vmem:[%s1011 + $0x50] sm:$0x1]
      %v1064 = vsel %vm1020, %v809, %v1063
      %1065 = vst [vmem:[%s1011 + $0x50] sm:$0x1] %v1064
      %v1066 = vld [vmem:[%s1011 + $0x54] sm:$0xf]
      %v1067 = vsel %vm1014, %v816, %v1066
      %1068 = vst [vmem:[%s1011 + $0x54] sm:$0xf] %v1067
      %1069 = vst [vmem:[%s1011 + $0x58] sm:$0xf] %v825
      %v1070 = vld [vmem:[%s1011 + $0x5c] sm:$0x1]
      %v1071 = vsel %vm1020, %v826, %v1070
      %1072 = vst [vmem:[%s1011 + $0x5c] sm:$0x1] %v1071
      %v1073 = vld [vmem:[%s1011 + $0x60] sm:$0xf]
      %v1074 = vsel %vm1014, %v833, %v1073
      %1075 = vst [vmem:[%s1011 + $0x60] sm:$0xf] %v1074
      %1076 = vst [vmem:[%s1011 + $0x64] sm:$0xf] %v842
      %v1077 = vld [vmem:[%s1011 + $0x68] sm:$0x1]
      %v1078 = vsel %vm1020, %v843, %v1077
      %1079 = vst [vmem:[%s1011 + $0x68] sm:$0x1] %v1078
      %v1080 = vld [vmem:[%s1011 + $0x6c] sm:$0xf]
      %v1081 = vsel %vm1014, %v850, %v1080
      %1082 = vst [vmem:[%s1011 + $0x6c] sm:$0xf] %v1081
      %1083 = vst [vmem:[%s1011 + $0x70] sm:$0xf] %v859
      %v1084 = vld [vmem:[%s1011 + $0x74] sm:$0x1]
      %v1085 = vsel %vm1020, %v860, %v1084
      %1086 = vst [vmem:[%s1011 + $0x74] sm:$0x1] %v1085
      %v1087 = vld [vmem:[%s1011 + $0x78] sm:$0xf]
      %v1088 = vsel %vm1014, %v867, %v1087
      %1089 = vst [vmem:[%s1011 + $0x78] sm:$0xf] %v1088
      %1090 = vst [vmem:[%s1011 + $0x7c] sm:$0xf] %v876
      %v1091 = vld [vmem:[%s1011 + $0x80] sm:$0x1]
      %v1092 = vsel %vm1020, %v877, %v1091
      %1093 = vst [vmem:[%s1011 + $0x80] sm:$0x1] %v1092
      %v1094 = vld [vmem:[%s1011 + $0x84] sm:$0xf]
      %v1095 = vsel %vm1014, %v884, %v1094
      %1096 = vst [vmem:[%s1011 + $0x84] sm:$0xf] %v1095
      %1097 = vst [vmem:[%s1011 + $0x88] sm:$0xf] %v893
      %v1098 = vld [vmem:[%s1011 + $0x8c] sm:$0x1]
      %v1099 = vsel %vm1020, %v894, %v1098
      %1100 = vst [vmem:[%s1011 + $0x8c] sm:$0x1] %v1099
      %v1101 = vld [vmem:[%s1011 + $0x90] sm:$0xf]
      %v1102 = vsel %vm1014, %v901, %v1101
      %1103 = vst [vmem:[%s1011 + $0x90] sm:$0xf] %v1102
      %1104 = vst [vmem:[%s1011 + $0x94] sm:$0xf] %v910
      %v1105 = vld [vmem:[%s1011 + $0x98] sm:$0x1]
      %v1106 = vsel %vm1020, %v911, %v1105
      %1107 = vst [vmem:[%s1011 + $0x98] sm:$0x1] %v1106
      %v1108 = vld [vmem:[%s1011 + $0x9c] sm:$0xf]
      %v1109 = vsel %vm1014, %v918, %v1108
      %1110 = vst [vmem:[%s1011 + $0x9c] sm:$0xf] %v1109
      %1111 = vst [vmem:[%s1011 + $0xa0] sm:$0xf] %v927
      %v1112 = vld [vmem:[%s1011 + $0xa4] sm:$0x1]
      %v1113 = vsel %vm1020, %v928, %v1112
      %1114 = vst [vmem:[%s1011 + $0xa4] sm:$0x1] %v1113
      %v1115 = vld [vmem:[%s1011 + $0xa8] sm:$0xf]
      %v1116 = vsel %vm1014, %v935, %v1115
      %1117 = vst [vmem:[%s1011 + $0xa8] sm:$0xf] %v1116
      %1118 = vst [vmem:[%s1011 + $0xac] sm:$0xf] %v944
      %v1119 = vld [vmem:[%s1011 + $0xb0] sm:$0x1]
      %v1120 = vsel %vm1020, %v945, %v1119
      %1121 = vst [vmem:[%s1011 + $0xb0] sm:$0x1] %v1120
      %v1122 = vld [vmem:[%s1011 + $0xb4] sm:$0xf]
      %v1123 = vsel %vm1014, %v952, %v1122
      %1124 = vst [vmem:[%s1011 + $0xb4] sm:$0xf] %v1123
      %1125 = vst [vmem:[%s1011 + $0xb8] sm:$0xf] %v961
      %v1126 = vld [vmem:[%s1011 + $0xbc] sm:$0x1]
      %v1127 = vsel %vm1020, %v962, %v1126
      %1128 = vst [vmem:[%s1011 + $0xbc] sm:$0x1] %v1127
      %v1129 = vld [vmem:[#allocation2] sm:$0xf]
      %v1130 = vld [vmem:[#allocation2 + $0x4] sm:$0xf]
      %v1131 = vld [vmem:[#allocation2 + $0xc] sm:$0xf]
      %v1132 = vld [vmem:[#allocation2 + $0x10] sm:$0xf]
      %v1133 = vld [vmem:[#allocation2 + $0x18] sm:$0xf]
      %v1134 = vld [vmem:[#allocation2 + $0x1c] sm:$0xf]
      %v1135 = vld [vmem:[#allocation2 + $0x24] sm:$0xf]
      %v1136 = vld [vmem:[#allocation2 + $0x28] sm:$0xf]
      %v1137 = vld [vmem:[#allocation2 + $0x30] sm:$0xf]
      %v1138 = vld [vmem:[#allocation2 + $0x34] sm:$0xf]
      %v1139 = vld [vmem:[#allocation2 + $0x3c] sm:$0xf]
      %v1140 = vld [vmem:[#allocation2 + $0x40] sm:$0xf]
      %v1141 = vld [vmem:[#allocation2 + $0x48] sm:$0xf]
      %v1142 = vld [vmem:[#allocation2 + $0x4c] sm:$0xf]
      %v1143 = vld [vmem:[#allocation2 + $0x54] sm:$0xf]
      %v1144 = vld [vmem:[#allocation2 + $0x58] sm:$0xf]
      %v1145 = vld [vmem:[#allocation2 + $0x60] sm:$0xf]
      %v1146 = vld [vmem:[#allocation2 + $0x64] sm:$0xf]
      %v1147 = vld [vmem:[#allocation2 + $0x6c] sm:$0xf]
      %v1148 = vld [vmem:[#allocation2 + $0x70] sm:$0xf]
      %v1149 = vld [vmem:[#allocation2 + $0x78] sm:$0xf]
      %v1150 = vld [vmem:[#allocation2 + $0x7c] sm:$0xf]
      %v1151 = vld [vmem:[#allocation2 + $0x84] sm:$0xf]
      %v1152 = vld [vmem:[#allocation2 + $0x88] sm:$0xf]
      %v1153 = vld [vmem:[#allocation2 + $0x90] sm:$0xf]
      %v1154 = vld [vmem:[#allocation2 + $0x94] sm:$0xf]
      %v1155 = vld [vmem:[#allocation2 + $0x9c] sm:$0xf]
      %v1156 = vld [vmem:[#allocation2 + $0xa0] sm:$0xf]
      %v1157 = vld [vmem:[#allocation2 + $0xa8] sm:$0xf]
      %v1158 = vld [vmem:[#allocation2 + $0xac] sm:$0xf]
      %v1159 = vld [vmem:[#allocation2 + $0xb4] sm:$0xf]
      %v1160 = vld [vmem:[#allocation2 + $0xb8] sm:$0xf]
      %v1161 = vld [vmem:[%s3] sm:$0xf]
      %v1162 = vld [vmem:[%s3 + $0x4] sm:$0xf]
      %v1163 = vld [vmem:[%s3 + $0x8] sm:$0xf]
      %v1164 = vld [vmem:[%s3 + $0xc] sm:$0xf]
      %v1165 = vld [vmem:[%s3 + $0x10] sm:$0xf]
      %v1166 = vld [vmem:[%s3 + $0x14] sm:$0xf]
      %v1167 = vld [vmem:[%s3 + $0x18] sm:$0xf]
      %v1168 = vld [vmem:[%s3 + $0x1c] sm:$0xf]
      %v1169 = vld [vmem:[%s3 + $0x20] sm:$0xf]
      %v1170 = vld [vmem:[%s3 + $0x24] sm:$0xf]
      %v1171 = vld [vmem:[%s3 + $0x28] sm:$0xf]
      %v1172 = vld [vmem:[%s3 + $0x2c] sm:$0xf]
      %v1173 = vld [vmem:[%s3 + $0x30] sm:$0xf]
      %v1174 = vld [vmem:[%s3 + $0x34] sm:$0xf]
      %v1175 = vld [vmem:[%s3 + $0x38] sm:$0xf]
      %v1176 = vld [vmem:[%s3 + $0x3c] sm:$0xf]
      %v1177 = vld [vmem:[#allocation2 + $0x8] sm:$0x1]
      %v1178 = vld [vmem:[#allocation2 + $0x14] sm:$0x1]
      %v1179 = vld [vmem:[#allocation2 + $0x20] sm:$0x1]
      %v1180 = vld [vmem:[#allocation2 + $0x2c] sm:$0x1]
      %v1181 = vld [vmem:[#allocation2 + $0x38] sm:$0x1]
      %v1182 = vld [vmem:[#allocation2 + $0x44] sm:$0x1]
      %v1183 = vld [vmem:[#allocation2 + $0x50] sm:$0x1]
      %v1184 = vld [vmem:[#allocation2 + $0x5c] sm:$0x1]
      %v1185 = vld [vmem:[#allocation2 + $0x68] sm:$0x1]
      %v1186 = vld [vmem:[#allocation2 + $0x74] sm:$0x1]
      %v1187 = vld [vmem:[#allocation2 + $0x80] sm:$0x1]
      %v1188 = vld [vmem:[#allocation2 + $0x8c] sm:$0x1]
      %v1189 = vld [vmem:[#allocation2 + $0x98] sm:$0x1]
      %v1190 = vld [vmem:[#allocation2 + $0xa4] sm:$0x1]
      %v1191 = vld [vmem:[#allocation2 + $0xb0] sm:$0x1]
      %v1192 = vld [vmem:[#allocation2 + $0xbc] sm:$0x1]
      %vm1193 = vsmask.f32 3328
      %vm1194 = vsmask.f32 7440
      %vm1195 = vmor %vm1193, %vm1194
      %v1197 = vshrl.u32 %v1129, 16
      %v1199 = vrot.slane %v1197, 4
      %v1200 = vshll.u32 %v1129, 16
      %v1202 = vrot.slane %v1200, 5
      %v1203 = vor.u32 %v1199, %v1202
      %v1204 = vrot.slane %v1203, 4
      %v1206 = vshll.u32 %v1130, 16
      %v1208 = vrot.slane %v1206, 5
      %v1209 = vsel %vm1195, %v1204, %v1208
      %v1210 = vshrl.u32 %v1130, 16
      %v1212 = vrot.slane %v1210, 4
      %v1213 = vor.u32 %v1212, %v1208
      %v1214 = vrot.slane %v1213, 4
      %v1216 = vshll.u32 %v1177, 16
      %v1218 = vrot.slane %v1216, 5
      %v1219 = vsel %vm1195, %v1214, %v1218
      %v1221 = vshrl.u32 %v1131, 16
      %v1223 = vrot.slane %v1221, 4
      %v1224 = vshll.u32 %v1131, 16
      %v1226 = vrot.slane %v1224, 5
      %v1227 = vor.u32 %v1223, %v1226
      %v1228 = vrot.slane %v1227, 4
      %v1230 = vshll.u32 %v1132, 16
      %v1232 = vrot.slane %v1230, 5
      %v1233 = vsel %vm1195, %v1228, %v1232
      %v1234 = vshrl.u32 %v1132, 16
      %v1236 = vrot.slane %v1234, 4
      %v1237 = vor.u32 %v1236, %v1232
      %v1238 = vrot.slane %v1237, 4
      %v1240 = vshll.u32 %v1178, 16
      %v1242 = vrot.slane %v1240, 5
      %v1243 = vsel %vm1195, %v1238, %v1242
      %v1245 = vshrl.u32 %v1133, 16
      %v1247 = vrot.slane %v1245, 4
      %v1248 = vshll.u32 %v1133, 16
      %v1250 = vrot.slane %v1248, 5
      %v1251 = vor.u32 %v1247, %v1250
      %v1252 = vrot.slane %v1251, 4
      %v1254 = vshll.u32 %v1134, 16
      %v1256 = vrot.slane %v1254, 5
      %v1257 = vsel %vm1195, %v1252, %v1256
      %v1258 = vshrl.u32 %v1134, 16
      %v1260 = vrot.slane %v1258, 4
      %v1261 = vor.u32 %v1260, %v1256
      %v1262 = vrot.slane %v1261, 4
      %v1264 = vshll.u32 %v1179, 16
      %v1266 = vrot.slane %v1264, 5
      %v1267 = vsel %vm1195, %v1262, %v1266
      %v1269 = vshrl.u32 %v1135, 16
      %v1271 = vrot.slane %v1269, 4
      %v1272 = vshll.u32 %v1135, 16
      %v1274 = vrot.slane %v1272, 5
      %v1275 = vor.u32 %v1271, %v1274
      %v1276 = vrot.slane %v1275, 4
      %v1278 = vshll.u32 %v1136, 16
      %v1280 = vrot.slane %v1278, 5
      %v1281 = vsel %vm1195, %v1276, %v1280
      %v1282 = vshrl.u32 %v1136, 16
      %v1284 = vrot.slane %v1282, 4
      %v1285 = vor.u32 %v1284, %v1280
      %v1286 = vrot.slane %v1285, 4
      %v1288 = vshll.u32 %v1180, 16
      %v1290 = vrot.slane %v1288, 5
      %v1291 = vsel %vm1195, %v1286, %v1290
      %v1293 = vshrl.u32 %v1137, 16
      %v1295 = vrot.slane %v1293, 4
      %v1296 = vshll.u32 %v1137, 16
      %v1298 = vrot.slane %v1296, 5
      %v1299 = vor.u32 %v1295, %v1298
      %v1300 = vrot.slane %v1299, 4
      %v1302 = vshll.u32 %v1138, 16
      %v1304 = vrot.slane %v1302, 5
      %v1305 = vsel %vm1195, %v1300, %v1304
      %v1306 = vshrl.u32 %v1138, 16
      %v1308 = vrot.slane %v1306, 4
      %v1309 = vor.u32 %v1308, %v1304
      %v1310 = vrot.slane %v1309, 4
      %v1312 = vshll.u32 %v1181, 16
      %v1314 = vrot.slane %v1312, 5
      %v1315 = vsel %vm1195, %v1310, %v1314
      %v1317 = vshrl.u32 %v1139, 16
      %v1319 = vrot.slane %v1317, 4
      %v1320 = vshll.u32 %v1139, 16
      %v1322 = vrot.slane %v1320, 5
      %v1323 = vor.u32 %v1319, %v1322
      %v1324 = vrot.slane %v1323, 4
      %v1326 = vshll.u32 %v1140, 16
      %v1328 = vrot.slane %v1326, 5
      %v1329 = vsel %vm1195, %v1324, %v1328
      %v1330 = vshrl.u32 %v1140, 16
      %v1332 = vrot.slane %v1330, 4
      %v1333 = vor.u32 %v1332, %v1328
      %v1334 = vrot.slane %v1333, 4
      %v1336 = vshll.u32 %v1182, 16
      %v1338 = vrot.slane %v1336, 5
      %v1339 = vsel %vm1195, %v1334, %v1338
      %v1341 = vshrl.u32 %v1141, 16
      %v1343 = vrot.slane %v1341, 4
      %v1344 = vshll.u32 %v1141, 16
      %v1346 = vrot.slane %v1344, 5
      %v1347 = vor.u32 %v1343, %v1346
      %v1348 = vrot.slane %v1347, 4
      %v1350 = vshll.u32 %v1142, 16
      %v1352 = vrot.slane %v1350, 5
      %v1353 = vsel %vm1195, %v1348, %v1352
      %v1354 = vshrl.u32 %v1142, 16
      %v1356 = vrot.slane %v1354, 4
      %v1357 = vor.u32 %v1356, %v1352
      %v1358 = vrot.slane %v1357, 4
      %v1360 = vshll.u32 %v1183, 16
      %v1362 = vrot.slane %v1360, 5
      %v1363 = vsel %vm1195, %v1358, %v1362
      %v1365 = vshrl.u32 %v1143, 16
      %v1367 = vrot.slane %v1365, 4
      %v1368 = vshll.u32 %v1143, 16
      %v1370 = vrot.slane %v1368, 5
      %v1371 = vor.u32 %v1367, %v1370
      %v1372 = vrot.slane %v1371, 4
      %v1374 = vshll.u32 %v1144, 16
      %v1376 = vrot.slane %v1374, 5
      %v1377 = vsel %vm1195, %v1372, %v1376
      %v1378 = vshrl.u32 %v1144, 16
      %v1380 = vrot.slane %v1378, 4
      %v1381 = vor.u32 %v1380, %v1376
      %v1382 = vrot.slane %v1381, 4
      %v1384 = vshll.u32 %v1184, 16
      %v1386 = vrot.slane %v1384, 5
      %v1387 = vsel %vm1195, %v1382, %v1386
      %v1389 = vshrl.u32 %v1145, 16
      %v1391 = vrot.slane %v1389, 4
      %v1392 = vshll.u32 %v1145, 16
      %v1394 = vrot.slane %v1392, 5
      %v1395 = vor.u32 %v1391, %v1394
      %v1396 = vrot.slane %v1395, 4
      %v1398 = vshll.u32 %v1146, 16
      %v1400 = vrot.slane %v1398, 5
      %v1401 = vsel %vm1195, %v1396, %v1400
      %v1402 = vshrl.u32 %v1146, 16
      %v1404 = vrot.slane %v1402, 4
      %v1405 = vor.u32 %v1404, %v1400
      %v1406 = vrot.slane %v1405, 4
      %v1408 = vshll.u32 %v1185, 16
      %v1410 = vrot.slane %v1408, 5
      %v1411 = vsel %vm1195, %v1406, %v1410
      %v1413 = vshrl.u32 %v1147, 16
      %v1415 = vrot.slane %v1413, 4
      %v1416 = vshll.u32 %v1147, 16
      %v1418 = vrot.slane %v1416, 5
      %v1419 = vor.u32 %v1415, %v1418
      %v1420 = vrot.slane %v1419, 4
      %v1422 = vshll.u32 %v1148, 16
      %v1424 = vrot.slane %v1422, 5
      %v1425 = vsel %vm1195, %v1420, %v1424
      %v1426 = vshrl.u32 %v1148, 16
      %v1428 = vrot.slane %v1426, 4
      %v1429 = vor.u32 %v1428, %v1424
      %v1430 = vrot.slane %v1429, 4
      %v1432 = vshll.u32 %v1186, 16
      %v1434 = vrot.slane %v1432, 5
      %v1435 = vsel %vm1195, %v1430, %v1434
      %v1437 = vshrl.u32 %v1149, 16
      %v1439 = vrot.slane %v1437, 4
      %v1440 = vshll.u32 %v1149, 16
      %v1442 = vrot.slane %v1440, 5
      %v1443 = vor.u32 %v1439, %v1442
      %v1444 = vrot.slane %v1443, 4
      %v1446 = vshll.u32 %v1150, 16
      %v1448 = vrot.slane %v1446, 5
      %v1449 = vsel %vm1195, %v1444, %v1448
      %v1450 = vshrl.u32 %v1150, 16
      %v1452 = vrot.slane %v1450, 4
      %v1453 = vor.u32 %v1452, %v1448
      %v1454 = vrot.slane %v1453, 4
      %v1456 = vshll.u32 %v1187, 16
      %v1458 = vrot.slane %v1456, 5
      %v1459 = vsel %vm1195, %v1454, %v1458
      %v1461 = vshrl.u32 %v1151, 16
      %v1463 = vrot.slane %v1461, 4
      %v1464 = vshll.u32 %v1151, 16
      %v1466 = vrot.slane %v1464, 5
      %v1467 = vor.u32 %v1463, %v1466
      %v1468 = vrot.slane %v1467, 4
      %v1470 = vshll.u32 %v1152, 16
      %v1472 = vrot.slane %v1470, 5
      %v1473 = vsel %vm1195, %v1468, %v1472
      %v1474 = vshrl.u32 %v1152, 16
      %v1476 = vrot.slane %v1474, 4
      %v1477 = vor.u32 %v1476, %v1472
      %v1478 = vrot.slane %v1477, 4
      %v1480 = vshll.u32 %v1188, 16
      %v1482 = vrot.slane %v1480, 5
      %v1483 = vsel %vm1195, %v1478, %v1482
      %v1485 = vshrl.u32 %v1153, 16
      %v1487 = vrot.slane %v1485, 4
      %v1488 = vshll.u32 %v1153, 16
      %v1490 = vrot.slane %v1488, 5
      %v1491 = vor.u32 %v1487, %v1490
      %v1492 = vrot.slane %v1491, 4
      %v1494 = vshll.u32 %v1154, 16
      %v1496 = vrot.slane %v1494, 5
      %v1497 = vsel %vm1195, %v1492, %v1496
      %v1498 = vshrl.u32 %v1154, 16
      %v1500 = vrot.slane %v1498, 4
      %v1501 = vor.u32 %v1500, %v1496
      %v1502 = vrot.slane %v1501, 4
      %v1504 = vshll.u32 %v1189, 16
      %v1506 = vrot.slane %v1504, 5
      %v1507 = vsel %vm1195, %v1502, %v1506
      %v1509 = vshrl.u32 %v1155, 16
      %v1511 = vrot.slane %v1509, 4
      %v1512 = vshll.u32 %v1155, 16
      %v1514 = vrot.slane %v1512, 5
      %v1515 = vor.u32 %v1511, %v1514
      %v1516 = vrot.slane %v1515, 4
      %v1518 = vshll.u32 %v1156, 16
      %v1520 = vrot.slane %v1518, 5
      %v1521 = vsel %vm1195, %v1516, %v1520
      %v1522 = vshrl.u32 %v1156, 16
      %v1524 = vrot.slane %v1522, 4
      %v1525 = vor.u32 %v1524, %v1520
      %v1526 = vrot.slane %v1525, 4
      %v1528 = vshll.u32 %v1190, 16
      %v1530 = vrot.slane %v1528, 5
      %v1531 = vsel %vm1195, %v1526, %v1530
      %v1533 = vshrl.u32 %v1157, 16
      %v1535 = vrot.slane %v1533, 4
      %v1536 = vshll.u32 %v1157, 16
      %v1538 = vrot.slane %v1536, 5
      %v1539 = vor.u32 %v1535, %v1538
      %v1540 = vrot.slane %v1539, 4
      %v1542 = vshll.u32 %v1158, 16
      %v1544 = vrot.slane %v1542, 5
      %v1545 = vsel %vm1195, %v1540, %v1544
      %v1546 = vshrl.u32 %v1158, 16
      %v1548 = vrot.slane %v1546, 4
      %v1549 = vor.u32 %v1548, %v1544
      %v1550 = vrot.slane %v1549, 4
      %v1552 = vshll.u32 %v1191, 16
      %v1554 = vrot.slane %v1552, 5
      %v1555 = vsel %vm1195, %v1550, %v1554
      %v1557 = vshrl.u32 %v1159, 16
      %v1559 = vrot.slane %v1557, 4
      %v1560 = vshll.u32 %v1159, 16
      %v1562 = vrot.slane %v1560, 5
      %v1563 = vor.u32 %v1559, %v1562
      %v1564 = vrot.slane %v1563, 4
      %v1566 = vshll.u32 %v1160, 16
      %v1568 = vrot.slane %v1566, 5
      %v1569 = vsel %vm1195, %v1564, %v1568
      %v1570 = vshrl.u32 %v1160, 16
      %v1572 = vrot.slane %v1570, 4
      %v1573 = vor.u32 %v1572, %v1568
      %v1574 = vrot.slane %v1573, 4
      %v1576 = vshll.u32 %v1192, 16
      %v1578 = vrot.slane %v1576, 5
      %v1579 = vsel %vm1195, %v1574, %v1578
      %s1580 = scalar_lea.vmem %s3, 64
      %v1581 = vld [vmem:[%s1580] sm:$0xf]
      %v1582 = vld [vmem:[%s1580 + $0x4] sm:$0xf]
      %v1583 = vld [vmem:[%s1580 + $0x8] sm:$0xf]
      %v1584 = vld [vmem:[%s1580 + $0xc] sm:$0xf]
      %v1585 = vld [vmem:[%s1580 + $0x10] sm:$0xf]
      %v1586 = vld [vmem:[%s1580 + $0x14] sm:$0xf]
      %v1587 = vld [vmem:[%s1580 + $0x18] sm:$0xf]
      %v1588 = vld [vmem:[%s1580 + $0x1c] sm:$0xf]
      %v1589 = vld [vmem:[%s1580 + $0x20] sm:$0xf]
      %v1590 = vld [vmem:[%s1580 + $0x24] sm:$0xf]
      %v1591 = vld [vmem:[%s1580 + $0x28] sm:$0xf]
      %v1592 = vld [vmem:[%s1580 + $0x2c] sm:$0xf]
      %v1593 = vld [vmem:[%s1580 + $0x30] sm:$0xf]
      %v1594 = vld [vmem:[%s1580 + $0x34] sm:$0xf]
      %v1595 = vld [vmem:[%s1580 + $0x38] sm:$0xf]
      %v1596 = vld [vmem:[%s1580 + $0x3c] sm:$0xf]
      %v1597 = vunpack.c.l.b16 %v1209
      %v1598 = vunpack.c.l.b16 %v1219
      %v1599 = vunpack.c.l.b16 %v1233
      %v1600 = vunpack.c.l.b16 %v1243
      %v1601 = vunpack.c.l.b16 %v1257
      %v1602 = vunpack.c.l.b16 %v1267
      %v1603 = vunpack.c.l.b16 %v1281
      %v1604 = vunpack.c.l.b16 %v1291
      %v1605 = vunpack.c.l.b16 %v1305
      %v1606 = vunpack.c.l.b16 %v1315
      %v1607 = vunpack.c.l.b16 %v1329
      %v1608 = vunpack.c.l.b16 %v1339
      %v1609 = vunpack.c.l.b16 %v1353
      %v1610 = vunpack.c.l.b16 %v1363
      %v1611 = vunpack.c.l.b16 %v1377
      %v1612 = vunpack.c.l.b16 %v1387
      %v1613 = vunpack.c.l.b16 %v1401
      %v1614 = vunpack.c.l.b16 %v1411
      %v1615 = vunpack.c.l.b16 %v1425
      %v1616 = vunpack.c.l.b16 %v1435
      %v1617 = vunpack.c.l.b16 %v1449
      %v1618 = vunpack.c.l.b16 %v1459
      %v1619 = vunpack.c.l.b16 %v1473
      %v1620 = vunpack.c.l.b16 %v1483
      %v1621 = vunpack.c.l.b16 %v1497
      %v1622 = vunpack.c.l.b16 %v1507
      %v1623 = vunpack.c.l.b16 %v1521
      %v1624 = vunpack.c.l.b16 %v1531
      %v1625 = vunpack.c.l.b16 %v1545
      %v1626 = vunpack.c.l.b16 %v1555
      %v1627 = vunpack.c.l.b16 %v1569
      %v1628 = vunpack.c.l.b16 %v1579
      %v1629 = vpack.c.b16 %v1598, %v1597
      %v1630 = vpack.c.b16 %v1600, %v1599
      %v1631 = vpack.c.b16 %v1602, %v1601
      %v1632 = vpack.c.b16 %v1604, %v1603
      %v1633 = vpack.c.b16 %v1606, %v1605
      %v1634 = vpack.c.b16 %v1608, %v1607
      %v1635 = vpack.c.b16 %v1610, %v1609
      %v1636 = vpack.c.b16 %v1612, %v1611
      %v1637 = vpack.c.b16 %v1614, %v1613
      %v1638 = vpack.c.b16 %v1616, %v1615
      %v1639 = vpack.c.b16 %v1618, %v1617
      %v1640 = vpack.c.b16 %v1620, %v1619
      %v1641 = vpack.c.b16 %v1622, %v1621
      %v1642 = vpack.c.b16 %v1624, %v1623
      %v1643 = vpack.c.b16 %v1626, %v1625
      %v1644 = vpack.c.b16 %v1628, %v1627
      %v1677 = vunpack.c.l.b16 %v1581
      %v1678 = vunpack.c.l.b16 %v1582
      %v1679 = vunpack.c.l.b16 %v1583
      %v1680 = vunpack.c.l.b16 %v1584
      %v1681 = vunpack.c.l.b16 %v1585
      %v1682 = vunpack.c.l.b16 %v1586
      %v1683 = vunpack.c.l.b16 %v1587
      %v1684 = vunpack.c.l.b16 %v1588
      %v1685 = vunpack.c.l.b16 %v1589
      %v1686 = vunpack.c.l.b16 %v1590
      %v1687 = vunpack.c.l.b16 %v1591
      %v1688 = vunpack.c.l.b16 %v1592
      %v1689 = vunpack.c.l.b16 %v1593
      %v1690 = vunpack.c.l.b16 %v1594
      %v1691 = vunpack.c.l.b16 %v1595
      %v1692 = vunpack.c.l.b16 %v1596
      %v1693 = vpack.c.b16 %v1678, %v1677
      %v1694 = vpack.c.b16 %v1680, %v1679
      %v1695 = vpack.c.b16 %v1682, %v1681
      %v1696 = vpack.c.b16 %v1684, %v1683
      %v1697 = vpack.c.b16 %v1686, %v1685
      %v1698 = vpack.c.b16 %v1688, %v1687
      %v1699 = vpack.c.b16 %v1690, %v1689
      %v1700 = vpack.c.b16 %v1692, %v1691
      %1709 = vmatprep.subr.bf16.mxu0 0
      %1710 = vmatpush1.bf16.msra.mxu0 %v1693
      %1711 = vmatprep.subr.bf16.mxu0 0
      %1712 = vmatpush1.bf16.msra.mxu0 %v1694
      %1713 = vmatprep.subr.bf16.mxu0 0
      %1714 = vmatpush1.bf16.msra.mxu0 %v1695
      %1715 = vmatprep.subr.bf16.mxu0 0
      %1716 = vmatpush1.bf16.msra.mxu0 %v1696
      %1717 = vmatprep.subr.bf16.mxu0 0
      %1718 = vmatpush1.bf16.msra.mxu0 %v1697
      %1719 = vmatprep.subr.bf16.mxu0 0
      %1720 = vmatpush1.bf16.msra.mxu0 %v1698
      %1721 = vmatprep.subr.bf16.mxu0 0
      %1722 = vmatpush1.bf16.msra.mxu0 %v1699
      %1723 = vmatprep.subr.bf16.mxu0 0
      %1724 = vmatpush1.bf16.msra.mxu0 %v1700
      %1725 = vmatprep.subr.bf16.mxu0 0
      %1726 = vmatpush1.bf16.msra.mxu0 0
      %1727 = vmatprep.subr.bf16.mxu0 0
      %1728 = vmatpush1.bf16.msra.mxu0 0
      %1729 = vmatprep.subr.bf16.mxu0 0
      %1730 = vmatpush1.bf16.msra.mxu0 0
      %1731 = vmatprep.subr.bf16.mxu0 0
      %1732 = vmatpush1.bf16.msra.mxu0 0
      %1733 = vmatprep.subr.bf16.mxu0 0
      %1734 = vmatpush1.bf16.msra.mxu0 0
      %1735 = vmatprep.subr.bf16.mxu0 0
      %1736 = vmatpush1.bf16.msra.mxu0 0
      %1737 = vmatprep.subr.bf16.mxu0 0
      %1738 = vmatpush1.bf16.msra.mxu0 0
      %1739 = vmatprep.subr.bf16.mxu0 0
      %1740 = vmatpush1.bf16.msra.mxu0 0
      %1741 = vmatprep.mubr.bf16.mxu0 0
      %1742 = vmatmul.mubr.bf16.gmra.mrb[0].mxu0 %v1629
      %v1743 = vpop.f32.mrb[0].mxu0
      %v1744 = vadd.f32 0.0, %v1743
      %v1745 = vpop.f32.mrb[0].mxu0
      %v1746 = vpop.f32.mrb[0].mxu0
      %v1747 = vadd.f32 0.0, %v1746
      %v1748 = vpop.f32.mrb[0].mxu0
      %1749 = vmatprep.mubr.bf16.mxu0 0
      %1750 = vmatmul.mubr.bf16.gmra.mrb[0].mxu0 %v1630
      %v1751 = vpop.f32.mrb[0].mxu0
      %v1752 = vadd.f32 0.0, %v1751
      %v1753 = vpop.f32.mrb[0].mxu0
      %v1754 = vpop.f32.mrb[0].mxu0
      %v1755 = vadd.f32 0.0, %v1754
      %v1756 = vpop.f32.mrb[0].mxu0
      %1757 = vmatprep.mubr.bf16.mxu0 0
      %1758 = vmatmul.mubr.bf16.gmra.mrb[0].mxu0 %v1631
      %v1759 = vpop.f32.mrb[0].mxu0
      %v1760 = vadd.f32 0.0, %v1759
      %v1761 = vpop.f32.mrb[0].mxu0
      %v1762 = vpop.f32.mrb[0].mxu0
      %v1763 = vadd.f32 0.0, %v1762
      %v1764 = vpop.f32.mrb[0].mxu0
      %1765 = vmatprep.mubr.bf16.mxu0 0
      %1766 = vmatmul.mubr.bf16.gmra.mrb[0].mxu0 %v1632
      %v1767 = vpop.f32.mrb[0].mxu0
      %v1768 = vadd.f32 0.0, %v1767
      %v1769 = vpop.f32.mrb[0].mxu0
      %v1770 = vpop.f32.mrb[0].mxu0
      %v1771 = vadd.f32 0.0, %v1770
      %v1772 = vpop.f32.mrb[0].mxu0
      %1773 = vmatprep.mubr.bf16.mxu0 0
      %1774 = vmatmul.mubr.bf16.gmra.mrb[0].mxu0 %v1633
      %v1775 = vpop.f32.mrb[0].mxu0
      %v1776 = vadd.f32 0.0, %v1775
      %v1777 = vpop.f32.mrb[0].mxu0
      %v1778 = vpop.f32.mrb[0].mxu0
      %v1779 = vadd.f32 0.0, %v1778
      %v1780 = vpop.f32.mrb[0].mxu0
      %1781 = vmatprep.mubr.bf16.mxu0 0
      %1782 = vmatmul.mubr.bf16.gmra.mrb[0].mxu0 %v1634
      %v1783 = vpop.f32.mrb[0].mxu0
      %v1784 = vadd.f32 0.0, %v1783
      %v1785 = vpop.f32.mrb[0].mxu0
      %v1786 = vpop.f32.mrb[0].mxu0
      %v1787 = vadd.f32 0.0, %v1786
      %v1788 = vpop.f32.mrb[0].mxu0
      %1789 = vmatprep.mubr.bf16.mxu0 0
      %1790 = vmatmul.mubr.bf16.gmra.mrb[0].mxu0 %v1635
      %v1791 = vpop.f32.mrb[0].mxu0
      %v1792 = vadd.f32 0.0, %v1791
      %v1793 = vpop.f32.mrb[0].mxu0
      %v1794 = vpop.f32.mrb[0].mxu0
      %v1795 = vadd.f32 0.0, %v1794
      %v1796 = vpop.f32.mrb[0].mxu0
      %1797 = vmatprep.mubr.bf16.mxu0 0
      %1798 = vmatmul.mubr.bf16.gmra.mrb[0].mxu0 %v1636
      %v1799 = vpop.f32.mrb[0].mxu0
      %v1800 = vadd.f32 0.0, %v1799
      %v1801 = vpop.f32.mrb[0].mxu0
      %v1802 = vpop.f32.mrb[0].mxu0
      %v1803 = vadd.f32 0.0, %v1802
      %v1804 = vpop.f32.mrb[0].mxu0
      %1805 = vmatprep.mubr.bf16.mxu0 0
      %1806 = vmatmul.mubr.bf16.gmra.mrb[0].mxu0 %v1637
      %v1807 = vpop.f32.mrb[0].mxu0
      %v1808 = vadd.f32 0.0, %v1807
      %v1809 = vpop.f32.mrb[0].mxu0
      %v1810 = vpop.f32.mrb[0].mxu0
      %v1811 = vadd.f32 0.0, %v1810
      %v1812 = vpop.f32.mrb[0].mxu0
      %1813 = vmatprep.mubr.bf16.mxu0 0
      %1814 = vmatmul.mubr.bf16.gmra.mrb[0].mxu0 %v1638
      %v1815 = vpop.f32.mrb[0].mxu0
      %v1816 = vadd.f32 0.0, %v1815
      %v1817 = vpop.f32.mrb[0].mxu0
      %v1818 = vpop.f32.mrb[0].mxu0
      %v1819 = vadd.f32 0.0, %v1818
      %v1820 = vpop.f32.mrb[0].mxu0
      %1821 = vmatprep.mubr.bf16.mxu0 0
      %1822 = vmatmul.mubr.bf16.gmra.mrb[0].mxu0 %v1639
      %v1823 = vpop.f32.mrb[0].mxu0
      %v1824 = vadd.f32 0.0, %v1823
      %v1825 = vpop.f32.mrb[0].mxu0
      %v1826 = vpop.f32.mrb[0].mxu0
      %v1827 = vadd.f32 0.0, %v1826
      %v1828 = vpop.f32.mrb[0].mxu0
      %1829 = vmatprep.mubr.bf16.mxu0 0
      %1830 = vmatmul.mubr.bf16.gmra.mrb[0].mxu0 %v1640
      %v1831 = vpop.f32.mrb[0].mxu0
      %v1832 = vadd.f32 0.0, %v1831
      %v1833 = vpop.f32.mrb[0].mxu0
      %v1834 = vpop.f32.mrb[0].mxu0
      %v1835 = vadd.f32 0.0, %v1834
      %v1836 = vpop.f32.mrb[0].mxu0
      %1837 = vmatprep.mubr.bf16.mxu0 0
      %1838 = vmatmul.mubr.bf16.gmra.mrb[0].mxu0 %v1641
      %v1839 = vpop.f32.mrb[0].mxu0
      %v1840 = vadd.f32 0.0, %v1839
      %v1841 = vpop.f32.mrb[0].mxu0
      %v1842 = vpop.f32.mrb[0].mxu0
      %v1843 = vadd.f32 0.0, %v1842
      %v1844 = vpop.f32.mrb[0].mxu0
      %1845 = vmatprep.mubr.bf16.mxu0 0
      %1846 = vmatmul.mubr.bf16.gmra.mrb[0].mxu0 %v1642
      %v1847 = vpop.f32.mrb[0].mxu0
      %v1848 = vadd.f32 0.0, %v1847
      %v1849 = vpop.f32.mrb[0].mxu0
      %v1850 = vpop.f32.mrb[0].mxu0
      %v1851 = vadd.f32 0.0, %v1850
      %v1852 = vpop.f32.mrb[0].mxu0
      %1853 = vmatprep.mubr.bf16.mxu0 0
      %1854 = vmatmul.mubr.bf16.gmra.mrb[0].mxu0 %v1643
      %v1855 = vpop.f32.mrb[0].mxu0
      %v1856 = vadd.f32 0.0, %v1855
      %v1857 = vpop.f32.mrb[0].mxu0
      %v1858 = vpop.f32.mrb[0].mxu0
      %v1859 = vadd.f32 0.0, %v1858
      %v1860 = vpop.f32.mrb[0].mxu0
      %1861 = vmatprep.mubr.bf16.mxu0 0
      %1862 = vmatmul.mubr.bf16.gmra.mrb[0].mxu0 %v1644
      %v1863 = vpop.f32.mrb[0].mxu0
      %v1864 = vadd.f32 0.0, %v1863
      %v1865 = vpop.f32.mrb[0].mxu0
      %v1866 = vpop.f32.mrb[0].mxu0
      %v1867 = vadd.f32 0.0, %v1866
      %v1868 = vpop.f32.mrb[0].mxu0
      %1869 = vdwg.mxu0
      %v1902 = vunpack.c.l.b16 %v1129
      %v1903 = vunpack.c.l.b16 %v1130
      %v1904 = vunpack.c.l.b16 %v1131
      %v1905 = vunpack.c.l.b16 %v1132
      %v1906 = vunpack.c.l.b16 %v1133
      %v1907 = vunpack.c.l.b16 %v1134
      %v1908 = vunpack.c.l.b16 %v1135
      %v1909 = vunpack.c.l.b16 %v1136
      %v1910 = vunpack.c.l.b16 %v1137
      %v1911 = vunpack.c.l.b16 %v1138
      %v1912 = vunpack.c.l.b16 %v1139
      %v1913 = vunpack.c.l.b16 %v1140
      %v1914 = vunpack.c.l.b16 %v1141
      %v1915 = vunpack.c.l.b16 %v1142
      %v1916 = vunpack.c.l.b16 %v1143
      %v1917 = vunpack.c.l.b16 %v1144
      %v1918 = vunpack.c.l.b16 %v1145
      %v1919 = vunpack.c.l.b16 %v1146
      %v1920 = vunpack.c.l.b16 %v1147
      %v1921 = vunpack.c.l.b16 %v1148
      %v1922 = vunpack.c.l.b16 %v1149
      %v1923 = vunpack.c.l.b16 %v1150
      %v1924 = vunpack.c.l.b16 %v1151
      %v1925 = vunpack.c.l.b16 %v1152
      %v1926 = vunpack.c.l.b16 %v1153
      %v1927 = vunpack.c.l.b16 %v1154
      %v1928 = vunpack.c.l.b16 %v1155
      %v1929 = vunpack.c.l.b16 %v1156
      %v1930 = vunpack.c.l.b16 %v1157
      %v1931 = vunpack.c.l.b16 %v1158
      %v1932 = vunpack.c.l.b16 %v1159
      %v1933 = vunpack.c.l.b16 %v1160
      %v1934 = vpack.c.b16 %v1903, %v1902
      %v1935 = vpack.c.b16 %v1905, %v1904
      %v1936 = vpack.c.b16 %v1907, %v1906
      %v1937 = vpack.c.b16 %v1909, %v1908
      %v1938 = vpack.c.b16 %v1911, %v1910
      %v1939 = vpack.c.b16 %v1913, %v1912
      %v1940 = vpack.c.b16 %v1915, %v1914
      %v1941 = vpack.c.b16 %v1917, %v1916
      %v1942 = vpack.c.b16 %v1919, %v1918
      %v1943 = vpack.c.b16 %v1921, %v1920
      %v1944 = vpack.c.b16 %v1923, %v1922
      %v1945 = vpack.c.b16 %v1925, %v1924
      %v1946 = vpack.c.b16 %v1927, %v1926
      %v1947 = vpack.c.b16 %v1929, %v1928
      %v1948 = vpack.c.b16 %v1931, %v1930
      %v1949 = vpack.c.b16 %v1933, %v1932
      %v1982 = vunpack.c.l.b16 %v1161
      %v1983 = vunpack.c.l.b16 %v1162
      %v1984 = vunpack.c.l.b16 %v1163
      %v1985 = vunpack.c.l.b16 %v1164
      %v1986 = vunpack.c.l.b16 %v1165
      %v1987 = vunpack.c.l.b16 %v1166
      %v1988 = vunpack.c.l.b16 %v1167
      %v1989 = vunpack.c.l.b16 %v1168
      %v1990 = vunpack.c.l.b16 %v1169
      %v1991 = vunpack.c.l.b16 %v1170
      %v1992 = vunpack.c.l.b16 %v1171
      %v1993 = vunpack.c.l.b16 %v1172
      %v1994 = vunpack.c.l.b16 %v1173
      %v1995 = vunpack.c.l.b16 %v1174
      %v1996 = vunpack.c.l.b16 %v1175
      %v1997 = vunpack.c.l.b16 %v1176
      %v1998 = vpack.c.b16 %v1983, %v1982
      %v1999 = vpack.c.b16 %v1985, %v1984
      %v2000 = vpack.c.b16 %v1987, %v1986
      %v2001 = vpack.c.b16 %v1989, %v1988
      %v2002 = vpack.c.b16 %v1991, %v1990
      %v2003 = vpack.c.b16 %v1993, %v1992
      %v2004 = vpack.c.b16 %v1995, %v1994
      %v2005 = vpack.c.b16 %v1997, %v1996
      %2014 = vmatprep.subr.bf16.mxu0 0
      %2015 = vmatpush1.bf16.msra.mxu0 %v1998
      %2016 = vmatprep.subr.bf16.mxu0 0
      %2017 = vmatpush1.bf16.msra.mxu0 %v1999
      %2018 = vmatprep.subr.bf16.mxu0 0
      %2019 = vmatpush1.bf16.msra.mxu0 %v2000
      %2020 = vmatprep.subr.bf16.mxu0 0
      %2021 = vmatpush1.bf16.msra.mxu0 %v2001
      %2022 = vmatprep.subr.bf16.mxu0 0
      %2023 = vmatpush1.bf16.msra.mxu0 %v2002
      %2024 = vmatprep.subr.bf16.mxu0 0
      %2025 = vmatpush1.bf16.msra.mxu0 %v2003
      %2026 = vmatprep.subr.bf16.mxu0 0
      %2027 = vmatpush1.bf16.msra.mxu0 %v2004
      %2028 = vmatprep.subr.bf16.mxu0 0
      %2029 = vmatpush1.bf16.msra.mxu0 %v2005
      %2030 = vmatprep.subr.bf16.mxu0 0
      %2031 = vmatpush1.bf16.msra.mxu0 0
      %2032 = vmatprep.subr.bf16.mxu0 0
      %2033 = vmatpush1.bf16.msra.mxu0 0
      %2034 = vmatprep.subr.bf16.mxu0 0
      %2035 = vmatpush1.bf16.msra.mxu0 0
      %2036 = vmatprep.subr.bf16.mxu0 0
      %2037 = vmatpush1.bf16.msra.mxu0 0
      %2038 = vmatprep.subr.bf16.mxu0 0
      %2039 = vmatpush1.bf16.msra.mxu0 0
      %2040 = vmatprep.subr.bf16.mxu0 0
      %2041 = vmatpush1.bf16.msra.mxu0 0
      %2042 = vmatprep.subr.bf16.mxu0 0
      %2043 = vmatpush1.bf16.msra.mxu0 0
      %2044 = vmatprep.subr.bf16.mxu0 0
      %2045 = vmatpush1.bf16.msra.mxu0 0
      %2046 = vmatprep.mubr.bf16.mxu0 0
      %2047 = vmatmul.mubr.bf16.gmra.mrb[0].mxu0 %v1934
      %v2048 = vpop.f32.mrb[0].mxu0
      %v2049 = vadd.f32 %v1744, %v2048
      %v2050 = vpop.f32.mrb[0].mxu0
      %v2051 = vpop.f32.mrb[0].mxu0
      %v2052 = vadd.f32 %v1747, %v2051
      %v2053 = vpop.f32.mrb[0].mxu0
      %2054 = vmatprep.mubr.bf16.mxu0 0
      %2055 = vmatmul.mubr.bf16.gmra.mrb[0].mxu0 %v1935
      %v2056 = vpop.f32.mrb[0].mxu0
      %v2057 = vadd.f32 %v1752, %v2056
      %v2058 = vpop.f32.mrb[0].mxu0
      %v2059 = vpop.f32.mrb[0].mxu0
      %v2060 = vadd.f32 %v1755, %v2059
      %v2061 = vpop.f32.mrb[0].mxu0
      %2062 = vmatprep.mubr.bf16.mxu0 0
      %2063 = vmatmul.mubr.bf16.gmra.mrb[0].mxu0 %v1936
      %v2064 = vpop.f32.mrb[0].mxu0
      %v2065 = vadd.f32 %v1760, %v2064
      %v2066 = vpop.f32.mrb[0].mxu0
      %v2067 = vpop.f32.mrb[0].mxu0
      %v2068 = vadd.f32 %v1763, %v2067
      %v2069 = vpop.f32.mrb[0].mxu0
      %2070 = vmatprep.mubr.bf16.mxu0 0
      %2071 = vmatmul.mubr.bf16.gmra.mrb[0].mxu0 %v1937
      %v2072 = vpop.f32.mrb[0].mxu0
      %v2073 = vadd.f32 %v1768, %v2072
      %v2074 = vpop.f32.mrb[0].mxu0
      %v2075 = vpop.f32.mrb[0].mxu0
      %v2076 = vadd.f32 %v1771, %v2075
      %v2077 = vpop.f32.mrb[0].mxu0
      %2078 = vmatprep.mubr.bf16.mxu0 0
      %2079 = vmatmul.mubr.bf16.gmra.mrb[0].mxu0 %v1938
      %v2080 = vpop.f32.mrb[0].mxu0
      %v2081 = vadd.f32 %v1776, %v2080
      %v2082 = vpop.f32.mrb[0].mxu0
      %v2083 = vpop.f32.mrb[0].mxu0
      %v2084 = vadd.f32 %v1779, %v2083
      %v2085 = vpop.f32.mrb[0].mxu0
      %2086 = vmatprep.mubr.bf16.mxu0 0
      %2087 = vmatmul.mubr.bf16.gmra.mrb[0].mxu0 %v1939
      %v2088 = vpop.f32.mrb[0].mxu0
      %v2089 = vadd.f32 %v1784, %v2088
      %v2090 = vpop.f32.mrb[0].mxu0
      %v2091 = vpop.f32.mrb[0].mxu0
      %v2092 = vadd.f32 %v1787, %v2091
      %v2093 = vpop.f32.mrb[0].mxu0
      %2094 = vmatprep.mubr.bf16.mxu0 0
      %2095 = vmatmul.mubr.bf16.gmra.mrb[0].mxu0 %v1940
      %v2096 = vpop.f32.mrb[0].mxu0
      %v2097 = vadd.f32 %v1792, %v2096
      %v2098 = vpop.f32.mrb[0].mxu0
      %v2099 = vpop.f32.mrb[0].mxu0
      %v2100 = vadd.f32 %v1795, %v2099
      %v2101 = vpop.f32.mrb[0].mxu0
      %2102 = vmatprep.mubr.bf16.mxu0 0
      %2103 = vmatmul.mubr.bf16.gmra.mrb[0].mxu0 %v1941
      %v2104 = vpop.f32.mrb[0].mxu0
      %v2105 = vadd.f32 %v1800, %v2104
      %v2106 = vpop.f32.mrb[0].mxu0
      %v2107 = vpop.f32.mrb[0].mxu0
      %v2108 = vadd.f32 %v1803, %v2107
      %v2109 = vpop.f32.mrb[0].mxu0
      %2110 = vmatprep.mubr.bf16.mxu0 0
      %2111 = vmatmul.mubr.bf16.gmra.mrb[0].mxu0 %v1942
      %v2112 = vpop.f32.mrb[0].mxu0
      %v2113 = vadd.f32 %v1808, %v2112
      %v2114 = vpop.f32.mrb[0].mxu0
      %v2115 = vpop.f32.mrb[0].mxu0
      %v2116 = vadd.f32 %v1811, %v2115
      %v2117 = vpop.f32.mrb[0].mxu0
      %2118 = vmatprep.mubr.bf16.mxu0 0
      %2119 = vmatmul.mubr.bf16.gmra.mrb[0].mxu0 %v1943
      %v2120 = vpop.f32.mrb[0].mxu0
      %v2121 = vadd.f32 %v1816, %v2120
      %v2122 = vpop.f32.mrb[0].mxu0
      %v2123 = vpop.f32.mrb[0].mxu0
      %v2124 = vadd.f32 %v1819, %v2123
      %v2125 = vpop.f32.mrb[0].mxu0
      %2126 = vmatprep.mubr.bf16.mxu0 0
      %2127 = vmatmul.mubr.bf16.gmra.mrb[0].mxu0 %v1944
      %v2128 = vpop.f32.mrb[0].mxu0
      %v2129 = vadd.f32 %v1824, %v2128
      %v2130 = vpop.f32.mrb[0].mxu0
      %v2131 = vpop.f32.mrb[0].mxu0
      %v2132 = vadd.f32 %v1827, %v2131
      %v2133 = vpop.f32.mrb[0].mxu0
      %2134 = vmatprep.mubr.bf16.mxu0 0
      %2135 = vmatmul.mubr.bf16.gmra.mrb[0].mxu0 %v1945
      %v2136 = vpop.f32.mrb[0].mxu0
      %v2137 = vadd.f32 %v1832, %v2136
      %v2138 = vpop.f32.mrb[0].mxu0
      %v2139 = vpop.f32.mrb[0].mxu0
      %v2140 = vadd.f32 %v1835, %v2139
      %v2141 = vpop.f32.mrb[0].mxu0
      %2142 = vmatprep.mubr.bf16.mxu0 0
      %2143 = vmatmul.mubr.bf16.gmra.mrb[0].mxu0 %v1946
      %v2144 = vpop.f32.mrb[0].mxu0
      %v2145 = vadd.f32 %v1840, %v2144
      %v2146 = vpop.f32.mrb[0].mxu0
      %v2147 = vpop.f32.mrb[0].mxu0
      %v2148 = vadd.f32 %v1843, %v2147
      %v2149 = vpop.f32.mrb[0].mxu0
      %2150 = vmatprep.mubr.bf16.mxu0 0
      %2151 = vmatmul.mubr.bf16.gmra.mrb[0].mxu0 %v1947
      %v2152 = vpop.f32.mrb[0].mxu0
      %v2153 = vadd.f32 %v1848, %v2152
      %v2154 = vpop.f32.mrb[0].mxu0
      %v2155 = vpop.f32.mrb[0].mxu0
      %v2156 = vadd.f32 %v1851, %v2155
      %v2157 = vpop.f32.mrb[0].mxu0
      %2158 = vmatprep.mubr.bf16.mxu0 0
      %2159 = vmatmul.mubr.bf16.gmra.mrb[0].mxu0 %v1948
      %v2160 = vpop.f32.mrb[0].mxu0
      %v2161 = vadd.f32 %v1856, %v2160
      %v2162 = vpop.f32.mrb[0].mxu0
      %v2163 = vpop.f32.mrb[0].mxu0
      %v2164 = vadd.f32 %v1859, %v2163
      %v2165 = vpop.f32.mrb[0].mxu0
      %2166 = vmatprep.mubr.bf16.mxu0 0
      %2167 = vmatmul.mubr.bf16.gmra.mrb[0].mxu0 %v1949
      %v2168 = vpop.f32.mrb[0].mxu0
      %v2169 = vadd.f32 %v1864, %v2168
      %v2170 = vpop.f32.mrb[0].mxu0
      %v2171 = vpop.f32.mrb[0].mxu0
      %v2172 = vadd.f32 %v1867, %v2171
      %v2173 = vpop.f32.mrb[0].mxu0
      %2174 = vdwg.mxu0
      %v2175 = vld [vmem:[#allocation2] sm:$0xe]
      %v2176 = vld [vmem:[#allocation2 + $0xc] sm:$0xe]
      %v2177 = vld [vmem:[#allocation2 + $0x18] sm:$0xe]
      %v2178 = vld [vmem:[#allocation2 + $0x24] sm:$0xe]
      %v2179 = vld [vmem:[#allocation2 + $0x30] sm:$0xe]
      %v2180 = vld [vmem:[#allocation2 + $0x3c] sm:$0xe]
      %v2181 = vld [vmem:[#allocation2 + $0x48] sm:$0xe]
      %v2182 = vld [vmem:[#allocation2 + $0x54] sm:$0xe]
      %v2183 = vld [vmem:[#allocation2 + $0x60] sm:$0xe]
      %v2184 = vld [vmem:[#allocation2 + $0x6c] sm:$0xe]
      %v2185 = vld [vmem:[#allocation2 + $0x78] sm:$0xe]
      %v2186 = vld [vmem:[#allocation2 + $0x84] sm:$0xe]
      %v2187 = vld [vmem:[#allocation2 + $0x90] sm:$0xe]
      %v2188 = vld [vmem:[#allocation2 + $0x9c] sm:$0xe]
      %v2189 = vld [vmem:[#allocation2 + $0xa8] sm:$0xe]
      %v2190 = vld [vmem:[#allocation2 + $0xb4] sm:$0xe]
      %vm2223 = vcmask 1042432
      %vm2224 = vcmask 1046532
      %vm2225 = vmor %vm2223, %vm2224
      %v2226 = vrot.slane %v2175, 5
      %v2227 = vrot.slane %v2226, 4
      %v2228 = vrot.slane %v1130, 5
      %v2229 = vsel %vm2225, %v2227, %v2228
      %v2230 = vrot.slane %v2228, 4
      %v2231 = vrot.slane %v1177, 5
      %v2232 = vsel %vm2225, %v2230, %v2231
      %v2233 = vrot.slane %v2176, 5
      %v2234 = vrot.slane %v2233, 4
      %v2235 = vrot.slane %v1132, 5
      %v2236 = vsel %vm2225, %v2234, %v2235
      %v2237 = vrot.slane %v2235, 4
      %v2238 = vrot.slane %v1178, 5
      %v2239 = vsel %vm2225, %v2237, %v2238
      %v2240 = vrot.slane %v2177, 5
      %v2241 = vrot.slane %v2240, 4
      %v2242 = vrot.slane %v1134, 5
      %v2243 = vsel %vm2225, %v2241, %v2242
      %v2244 = vrot.slane %v2242, 4
      %v2245 = vrot.slane %v1179, 5
      %v2246 = vsel %vm2225, %v2244, %v2245
      %v2247 = vrot.slane %v2178, 5
      %v2248 = vrot.slane %v2247, 4
      %v2249 = vrot.slane %v1136, 5
      %v2250 = vsel %vm2225, %v2248, %v2249
      %v2251 = vrot.slane %v2249, 4
      %v2252 = vrot.slane %v1180, 5
      %v2253 = vsel %vm2225, %v2251, %v2252
      %v2254 = vrot.slane %v2179, 5
      %v2255 = vrot.slane %v2254, 4
      %v2256 = vrot.slane %v1138, 5
      %v2257 = vsel %vm2225, %v2255, %v2256
      %v2258 = vrot.slane %v2256, 4
      %v2259 = vrot.slane %v1181, 5
      %v2260 = vsel %vm2225, %v2258, %v2259
      %v2261 = vrot.slane %v2180, 5
      %v2262 = vrot.slane %v2261, 4
      %v2263 = vrot.slane %v1140, 5
      %v2264 = vsel %vm2225, %v2262, %v2263
      %v2265 = vrot.slane %v2263, 4
      %v2266 = vrot.slane %v1182, 5
      %v2267 = vsel %vm2225, %v2265, %v2266
      %v2268 = vrot.slane %v2181, 5
      %v2269 = vrot.slane %v2268, 4
      %v2270 = vrot.slane %v1142, 5
      %v2271 = vsel %vm2225, %v2269, %v2270
      %v2272 = vrot.slane %v2270, 4
      %v2273 = vrot.slane %v1183, 5
      %v2274 = vsel %vm2225, %v2272, %v2273
      %v2275 = vrot.slane %v2182, 5
      %v2276 = vrot.slane %v2275, 4
      %v2277 = vrot.slane %v1144, 5
      %v2278 = vsel %vm2225, %v2276, %v2277
      %v2279 = vrot.slane %v2277, 4
      %v2280 = vrot.slane %v1184, 5
      %v2281 = vsel %vm2225, %v2279, %v2280
      %v2282 = vrot.slane %v2183, 5
      %v2283 = vrot.slane %v2282, 4
      %v2284 = vrot.slane %v1146, 5
      %v2285 = vsel %vm2225, %v2283, %v2284
      %v2286 = vrot.slane %v2284, 4
      %v2287 = vrot.slane %v1185, 5
      %v2288 = vsel %vm2225, %v2286, %v2287
      %v2289 = vrot.slane %v2184, 5
      %v2290 = vrot.slane %v2289, 4
      %v2291 = vrot.slane %v1148, 5
      %v2292 = vsel %vm2225, %v2290, %v2291
      %v2293 = vrot.slane %v2291, 4
      %v2294 = vrot.slane %v1186, 5
      %v2295 = vsel %vm2225, %v2293, %v2294
      %v2296 = vrot.slane %v2185, 5
      %v2297 = vrot.slane %v2296, 4
      %v2298 = vrot.slane %v1150, 5
      %v2299 = vsel %vm2225, %v2297, %v2298
      %v2300 = vrot.slane %v2298, 4
      %v2301 = vrot.slane %v1187, 5
      %v2302 = vsel %vm2225, %v2300, %v2301
      %v2303 = vrot.slane %v2186, 5
      %v2304 = vrot.slane %v2303, 4
      %v2305 = vrot.slane %v1152, 5
      %v2306 = vsel %vm2225, %v2304, %v2305
      %v2307 = vrot.slane %v2305, 4
      %v2308 = vrot.slane %v1188, 5
      %v2309 = vsel %vm2225, %v2307, %v2308
      %v2310 = vrot.slane %v2187, 5
      %v2311 = vrot.slane %v2310, 4
      %v2312 = vrot.slane %v1154, 5
      %v2313 = vsel %vm2225, %v2311, %v2312
      %v2314 = vrot.slane %v2312, 4
      %v2315 = vrot.slane %v1189, 5
      %v2316 = vsel %vm2225, %v2314, %v2315
      %v2317 = vrot.slane %v2188, 5
      %v2318 = vrot.slane %v2317, 4
      %v2319 = vrot.slane %v1156, 5
      %v2320 = vsel %vm2225, %v2318, %v2319
      %v2321 = vrot.slane %v2319, 4
      %v2322 = vrot.slane %v1190, 5
      %v2323 = vsel %vm2225, %v2321, %v2322
      %v2324 = vrot.slane %v2189, 5
      %v2325 = vrot.slane %v2324, 4
      %v2326 = vrot.slane %v1158, 5
      %v2327 = vsel %vm2225, %v2325, %v2326
      %v2328 = vrot.slane %v2326, 4
      %v2329 = vrot.slane %v1191, 5
      %v2330 = vsel %vm2225, %v2328, %v2329
      %v2331 = vrot.slane %v2190, 5
      %v2332 = vrot.slane %v2331, 4
      %v2333 = vrot.slane %v1160, 5
      %v2334 = vsel %vm2225, %v2332, %v2333
      %v2335 = vrot.slane %v2333, 4
      %v2336 = vrot.slane %v1192, 5
      %v2337 = vsel %vm2225, %v2335, %v2336
      %s2338 = scalar_lea.vmem %s3, 128
      %v2339 = vld [vmem:[%s2338] sm:$0xf]
      %v2340 = vld [vmem:[%s2338 + $0x4] sm:$0xf]
      %v2341 = vld [vmem:[%s2338 + $0x8] sm:$0xf]
      %v2342 = vld [vmem:[%s2338 + $0xc] sm:$0xf]
      %v2343 = vld [vmem:[%s2338 + $0x10] sm:$0xf]
      %v2344 = vld [vmem:[%s2338 + $0x14] sm:$0xf]
      %v2345 = vld [vmem:[%s2338 + $0x18] sm:$0xf]
      %v2346 = vld [vmem:[%s2338 + $0x1c] sm:$0xf]
      %v2347 = vld [vmem:[%s2338 + $0x20] sm:$0xf]
      %v2348 = vld [vmem:[%s2338 + $0x24] sm:$0xf]
      %v2349 = vld [vmem:[%s2338 + $0x28] sm:$0xf]
      %v2350 = vld [vmem:[%s2338 + $0x2c] sm:$0xf]
      %v2351 = vld [vmem:[%s2338 + $0x30] sm:$0xf]
      %v2352 = vld [vmem:[%s2338 + $0x34] sm:$0xf]
      %v2353 = vld [vmem:[%s2338 + $0x38] sm:$0xf]
      %v2354 = vld [vmem:[%s2338 + $0x3c] sm:$0xf]
      %v2355 = vunpack.c.l.b16 %v2229
      %v2356 = vunpack.c.l.b16 %v2232
      %v2357 = vunpack.c.l.b16 %v2236
      %v2358 = vunpack.c.l.b16 %v2239
      %v2359 = vunpack.c.l.b16 %v2243
      %v2360 = vunpack.c.l.b16 %v2246
      %v2361 = vunpack.c.l.b16 %v2250
      %v2362 = vunpack.c.l.b16 %v2253
      %v2363 = vunpack.c.l.b16 %v2257
      %v2364 = vunpack.c.l.b16 %v2260
      %v2365 = vunpack.c.l.b16 %v2264
      %v2366 = vunpack.c.l.b16 %v2267
      %v2367 = vunpack.c.l.b16 %v2271
      %v2368 = vunpack.c.l.b16 %v2274
      %v2369 = vunpack.c.l.b16 %v2278
      %v2370 = vunpack.c.l.b16 %v2281
      %v2371 = vunpack.c.l.b16 %v2285
      %v2372 = vunpack.c.l.b16 %v2288
      %v2373 = vunpack.c.l.b16 %v2292
      %v2374 = vunpack.c.l.b16 %v2295
      %v2375 = vunpack.c.l.b16 %v2299
      %v2376 = vunpack.c.l.b16 %v2302
      %v2377 = vunpack.c.l.b16 %v2306
      %v2378 = vunpack.c.l.b16 %v2309
      %v2379 = vunpack.c.l.b16 %v2313
      %v2380 = vunpack.c.l.b16 %v2316
      %v2381 = vunpack.c.l.b16 %v2320
      %v2382 = vunpack.c.l.b16 %v2323
      %v2383 = vunpack.c.l.b16 %v2327
      %v2384 = vunpack.c.l.b16 %v2330
      %v2385 = vunpack.c.l.b16 %v2334
      %v2386 = vunpack.c.l.b16 %v2337
      %v2387 = vpack.c.b16 %v2356, %v2355
      %v2388 = vpack.c.b16 %v2358, %v2357
      %v2389 = vpack.c.b16 %v2360, %v2359
      %v2390 = vpack.c.b16 %v2362, %v2361
      %v2391 = vpack.c.b16 %v2364, %v2363
      %v2392 = vpack.c.b16 %v2366, %v2365
      %v2393 = vpack.c.b16 %v2368, %v2367
      %v2394 = vpack.c.b16 %v2370, %v2369
      %v2395 = vpack.c.b16 %v2372, %v2371
      %v2396 = vpack.c.b16 %v2374, %v2373
      %v2397 = vpack.c.b16 %v2376, %v2375
      %v2398 = vpack.c.b16 %v2378, %v2377
      %v2399 = vpack.c.b16 %v2380, %v2379
      %v2400 = vpack.c.b16 %v2382, %v2381
      %v2401 = vpack.c.b16 %v2384, %v2383
      %v2402 = vpack.c.b16 %v2386, %v2385
      %v2435 = vunpack.c.l.b16 %v2339
      %v2436 = vunpack.c.l.b16 %v2340
      %v2437 = vunpack.c.l.b16 %v2341
      %v2438 = vunpack.c.l.b16 %v2342
      %v2439 = vunpack.c.l.b16 %v2343
      %v2440 = vunpack.c.l.b16 %v2344
      %v2441 = vunpack.c.l.b16 %v2345
      %v2442 = vunpack.c.l.b16 %v2346
      %v2443 = vunpack.c.l.b16 %v2347
      %v2444 = vunpack.c.l.b16 %v2348
      %v2445 = vunpack.c.l.b16 %v2349
      %v2446 = vunpack.c.l.b16 %v2350
      %v2447 = vunpack.c.l.b16 %v2351
      %v2448 = vunpack.c.l.b16 %v2352
      %v2449 = vunpack.c.l.b16 %v2353
      %v2450 = vunpack.c.l.b16 %v2354
      %v2451 = vpack.c.b16 %v2436, %v2435
      %v2452 = vpack.c.b16 %v2438, %v2437
      %v2453 = vpack.c.b16 %v2440, %v2439
      %v2454 = vpack.c.b16 %v2442, %v2441
      %v2455 = vpack.c.b16 %v2444, %v2443
      %v2456 = vpack.c.b16 %v2446, %v2445
      %v2457 = vpack.c.b16 %v2448, %v2447
      %v2458 = vpack.c.b16 %v2450, %v2449
      %2467 = vmatprep.subr.bf16.mxu0 0
      %2468 = vmatpush1.bf16.msra.mxu0 %v2451
      %2469 = vmatprep.subr.bf16.mxu0 0
      %2470 = vmatpush1.bf16.msra.mxu0 %v2452
      %2471 = vmatprep.subr.bf16.mxu0 0
      %2472 = vmatpush1.bf16.msra.mxu0 %v2453
      %2473 = vmatprep.subr.bf16.mxu0 0
      %2474 = vmatpush1.bf16.msra.mxu0 %v2454
      %2475 = vmatprep.subr.bf16.mxu0 0
      %2476 = vmatpush1.bf16.msra.mxu0 %v2455
      %2477 = vmatprep.subr.bf16.mxu0 0
      %2478 = vmatpush1.bf16.msra.mxu0 %v2456
      %2479 = vmatprep.subr.bf16.mxu0 0
      %2480 = vmatpush1.bf16.msra.mxu0 %v2457
      %2481 = vmatprep.subr.bf16.mxu0 0
      %2482 = vmatpush1.bf16.msra.mxu0 %v2458
      %2483 = vmatprep.subr.bf16.mxu0 0
      %2484 = vmatpush1.bf16.msra.mxu0 0
      %2485 = vmatprep.subr.bf16.mxu0 0
      %2486 = vmatpush1.bf16.msra.mxu0 0
      %2487 = vmatprep.subr.bf16.mxu0 0
      %2488 = vmatpush1.bf16.msra.mxu0 0
      %2489 = vmatprep.subr.bf16.mxu0 0
      %2490 = vmatpush1.bf16.msra.mxu0 0
      %2491 = vmatprep.subr.bf16.mxu0 0
      %2492 = vmatpush1.bf16.msra.mxu0 0
      %2493 = vmatprep.subr.bf16.mxu0 0
      %2494 = vmatpush1.bf16.msra.mxu0 0
      %2495 = vmatprep.subr.bf16.mxu0 0
      %2496 = vmatpush1.bf16.msra.mxu0 0
      %2497 = vmatprep.subr.bf16.mxu0 0
      %2498 = vmatpush1.bf16.msra.mxu0 0
      %2499 = vmatprep.mubr.bf16.mxu0 0
      %2500 = vmatmul.mubr.bf16.gmra.mrb[0].mxu0 %v2387
      %v2501 = vpop.f32.mrb[0].mxu0
      %v2502 = vadd.f32 0.0, %v2501
      %v2503 = vpop.f32.mrb[0].mxu0
      %v2504 = vpop.f32.mrb[0].mxu0
      %v2505 = vadd.f32 0.0, %v2504
      %v2506 = vpop.f32.mrb[0].mxu0
      %2507 = vmatprep.mubr.bf16.mxu0 0
      %2508 = vmatmul.mubr.bf16.gmra.mrb[0].mxu0 %v2388
      %v2509 = vpop.f32.mrb[0].mxu0
      %v2510 = vadd.f32 0.0, %v2509
      %v2511 = vpop.f32.mrb[0].mxu0
      %v2512 = vpop.f32.mrb[0].mxu0
      %v2513 = vadd.f32 0.0, %v2512
      %v2514 = vpop.f32.mrb[0].mxu0
      %2515 = vmatprep.mubr.bf16.mxu0 0
      %2516 = vmatmul.mubr.bf16.gmra.mrb[0].mxu0 %v2389
      %v2517 = vpop.f32.mrb[0].mxu0
      %v2518 = vadd.f32 0.0, %v2517
      %v2519 = vpop.f32.mrb[0].mxu0
      %v2520 = vpop.f32.mrb[0].mxu0
      %v2521 = vadd.f32 0.0, %v2520
      %v2522 = vpop.f32.mrb[0].mxu0
      %2523 = vmatprep.mubr.bf16.mxu0 0
      %2524 = vmatmul.mubr.bf16.gmra.mrb[0].mxu0 %v2390
      %v2525 = vpop.f32.mrb[0].mxu0
      %v2526 = vadd.f32 0.0, %v2525
      %v2527 = vpop.f32.mrb[0].mxu0
      %v2528 = vpop.f32.mrb[0].mxu0
      %v2529 = vadd.f32 0.0, %v2528
      %v2530 = vpop.f32.mrb[0].mxu0
      %2531 = vmatprep.mubr.bf16.mxu0 0
      %2532 = vmatmul.mubr.bf16.gmra.mrb[0].mxu0 %v2391
      %v2533 = vpop.f32.mrb[0].mxu0
      %v2534 = vadd.f32 0.0, %v2533
      %v2535 = vpop.f32.mrb[0].mxu0
      %v2536 = vpop.f32.mrb[0].mxu0
      %v2537 = vadd.f32 0.0, %v2536
      %v2538 = vpop.f32.mrb[0].mxu0
      %2539 = vmatprep.mubr.bf16.mxu0 0
      %2540 = vmatmul.mubr.bf16.gmra.mrb[0].mxu0 %v2392
      %v2541 = vpop.f32.mrb[0].mxu0
      %v2542 = vadd.f32 0.0, %v2541
      %v2543 = vpop.f32.mrb[0].mxu0
      %v2544 = vpop.f32.mrb[0].mxu0
      %v2545 = vadd.f32 0.0, %v2544
      %v2546 = vpop.f32.mrb[0].mxu0
      %2547 = vmatprep.mubr.bf16.mxu0 0
      %2548 = vmatmul.mubr.bf16.gmra.mrb[0].mxu0 %v2393
      %v2549 = vpop.f32.mrb[0].mxu0
      %v2550 = vadd.f32 0.0, %v2549
      %v2551 = vpop.f32.mrb[0].mxu0
      %v2552 = vpop.f32.mrb[0].mxu0
      %v2553 = vadd.f32 0.0, %v2552
      %v2554 = vpop.f32.mrb[0].mxu0
      %2555 = vmatprep.mubr.bf16.mxu0 0
      %2556 = vmatmul.mubr.bf16.gmra.mrb[0].mxu0 %v2394
      %v2557 = vpop.f32.mrb[0].mxu0
      %v2558 = vadd.f32 0.0, %v2557
      %v2559 = vpop.f32.mrb[0].mxu0
      %v2560 = vpop.f32.mrb[0].mxu0
      %v2561 = vadd.f32 0.0, %v2560
      %v2562 = vpop.f32.mrb[0].mxu0
      %2563 = vmatprep.mubr.bf16.mxu0 0
      %2564 = vmatmul.mubr.bf16.gmra.mrb[0].mxu0 %v2395
      %v2565 = vpop.f32.mrb[0].mxu0
      %v2566 = vadd.f32 0.0, %v2565
      %v2567 = vpop.f32.mrb[0].mxu0
      %v2568 = vpop.f32.mrb[0].mxu0
      %v2569 = vadd.f32 0.0, %v2568
      %v2570 = vpop.f32.mrb[0].mxu0
      %2571 = vmatprep.mubr.bf16.mxu0 0
      %2572 = vmatmul.mubr.bf16.gmra.mrb[0].mxu0 %v2396
      %v2573 = vpop.f32.mrb[0].mxu0
      %v2574 = vadd.f32 0.0, %v2573
      %v2575 = vpop.f32.mrb[0].mxu0
      %v2576 = vpop.f32.mrb[0].mxu0
      %v2577 = vadd.f32 0.0, %v2576
      %v2578 = vpop.f32.mrb[0].mxu0
      %2579 = vmatprep.mubr.bf16.mxu0 0
      %2580 = vmatmul.mubr.bf16.gmra.mrb[0].mxu0 %v2397
      %v2581 = vpop.f32.mrb[0].mxu0
      %v2582 = vadd.f32 0.0, %v2581
      %v2583 = vpop.f32.mrb[0].mxu0
      %v2584 = vpop.f32.mrb[0].mxu0
      %v2585 = vadd.f32 0.0, %v2584
      %v2586 = vpop.f32.mrb[0].mxu0
      %2587 = vmatprep.mubr.bf16.mxu0 0
      %2588 = vmatmul.mubr.bf16.gmra.mrb[0].mxu0 %v2398
      %v2589 = vpop.f32.mrb[0].mxu0
      %v2590 = vadd.f32 0.0, %v2589
      %v2591 = vpop.f32.mrb[0].mxu0
      %v2592 = vpop.f32.mrb[0].mxu0
      %v2593 = vadd.f32 0.0, %v2592
      %v2594 = vpop.f32.mrb[0].mxu0
      %2595 = vmatprep.mubr.bf16.mxu0 0
      %2596 = vmatmul.mubr.bf16.gmra.mrb[0].mxu0 %v2399
      %v2597 = vpop.f32.mrb[0].mxu0
      %v2598 = vadd.f32 0.0, %v2597
      %v2599 = vpop.f32.mrb[0].mxu0
      %v2600 = vpop.f32.mrb[0].mxu0
      %v2601 = vadd.f32 0.0, %v2600
      %v2602 = vpop.f32.mrb[0].mxu0
      %2603 = vmatprep.mubr.bf16.mxu0 0
      %2604 = vmatmul.mubr.bf16.gmra.mrb[0].mxu0 %v2400
      %v2605 = vpop.f32.mrb[0].mxu0
      %v2606 = vadd.f32 0.0, %v2605
      %v2607 = vpop.f32.mrb[0].mxu0
      %v2608 = vpop.f32.mrb[0].mxu0
      %v2609 = vadd.f32 0.0, %v2608
      %v2610 = vpop.f32.mrb[0].mxu0
      %2611 = vmatprep.mubr.bf16.mxu0 0
      %2612 = vmatmul.mubr.bf16.gmra.mrb[0].mxu0 %v2401
      %v2613 = vpop.f32.mrb[0].mxu0
      %v2614 = vadd.f32 0.0, %v2613
      %v2615 = vpop.f32.mrb[0].mxu0
      %v2616 = vpop.f32.mrb[0].mxu0
      %v2617 = vadd.f32 0.0, %v2616
      %v2618 = vpop.f32.mrb[0].mxu0
      %2619 = vmatprep.mubr.bf16.mxu0 0
      %2620 = vmatmul.mubr.bf16.gmra.mrb[0].mxu0 %v2402
      %v2621 = vpop.f32.mrb[0].mxu0
      %v2622 = vadd.f32 0.0, %v2621
      %v2623 = vpop.f32.mrb[0].mxu0
      %v2624 = vpop.f32.mrb[0].mxu0
      %v2625 = vadd.f32 0.0, %v2624
      %v2626 = vpop.f32.mrb[0].mxu0
      %2627 = vdwg.mxu0
      %v2628 = vadd.f32 %v2049, %v2502
      %v2629 = vadd.f32 %v2052, %v2505
      %v2630 = vadd.f32 %v2057, %v2510
      %v2631 = vadd.f32 %v2060, %v2513
      %v2632 = vadd.f32 %v2065, %v2518
      %v2633 = vadd.f32 %v2068, %v2521
      %v2634 = vadd.f32 %v2073, %v2526
      %v2635 = vadd.f32 %v2076, %v2529
      %v2636 = vadd.f32 %v2081, %v2534
      %v2637 = vadd.f32 %v2084, %v2537
      %v2638 = vadd.f32 %v2089, %v2542
      %v2639 = vadd.f32 %v2092, %v2545
      %v2640 = vadd.f32 %v2097, %v2550
      %v2641 = vadd.f32 %v2100, %v2553
      %v2642 = vadd.f32 %v2105, %v2558
      %v2643 = vadd.f32 %v2108, %v2561
      %v2644 = vadd.f32 %v2113, %v2566
      %v2645 = vadd.f32 %v2116, %v2569
      %v2646 = vadd.f32 %v2121, %v2574
      %v2647 = vadd.f32 %v2124, %v2577
      %v2648 = vadd.f32 %v2129, %v2582
      %v2649 = vadd.f32 %v2132, %v2585
      %v2650 = vadd.f32 %v2137, %v2590
      %v2651 = vadd.f32 %v2140, %v2593
      %v2652 = vadd.f32 %v2145, %v2598
      %v2653 = vadd.f32 %v2148, %v2601
      %v2654 = vadd.f32 %v2153, %v2606
      %v2655 = vadd.f32 %v2156, %v2609
      %v2656 = vadd.f32 %v2161, %v2614
      %v2657 = vadd.f32 %v2164, %v2617
      %v2658 = vadd.f32 %v2169, %v2622
      %v2659 = vadd.f32 %v2172, %v2625
      %v2660 = vld [vmem:[%s1011] sm:$0xf]
      %v2661 = vld [vmem:[%s1011 + $0x4] sm:$0xf]
      %v2662 = vld [vmem:[%s1011 + $0xc] sm:$0xf]
      %v2663 = vld [vmem:[%s1011 + $0x10] sm:$0xf]
      %v2664 = vld [vmem:[%s1011 + $0x18] sm:$0xf]
      %v2665 = vld [vmem:[%s1011 + $0x1c] sm:$0xf]
      %v2666 = vld [vmem:[%s1011 + $0x24] sm:$0xf]
      %v2667 = vld [vmem:[%s1011 + $0x28] sm:$0xf]
      %v2668 = vld [vmem:[%s1011 + $0x30] sm:$0xf]
      %v2669 = vld [vmem:[%s1011 + $0x34] sm:$0xf]
      %v2670 = vld [vmem:[%s1011 + $0x3c] sm:$0xf]
      %v2671 = vld [vmem:[%s1011 + $0x40] sm:$0xf]
      %v2672 = vld [vmem:[%s1011 + $0x48] sm:$0xf]
      %v2673 = vld [vmem:[%s1011 + $0x4c] sm:$0xf]
      %v2674 = vld [vmem:[%s1011 + $0x54] sm:$0xf]
      %v2675 = vld [vmem:[%s1011 + $0x58] sm:$0xf]
      %v2676 = vld [vmem:[%s1011 + $0x60] sm:$0xf]
      %v2677 = vld [vmem:[%s1011 + $0x64] sm:$0xf]
      %v2678 = vld [vmem:[%s1011 + $0x6c] sm:$0xf]
      %v2679 = vld [vmem:[%s1011 + $0x70] sm:$0xf]
      %v2680 = vld [vmem:[%s1011 + $0x78] sm:$0xf]
      %v2681 = vld [vmem:[%s1011 + $0x7c] sm:$0xf]
      %v2682 = vld [vmem:[%s1011 + $0x84] sm:$0xf]
      %v2683 = vld [vmem:[%s1011 + $0x88] sm:$0xf]
      %v2684 = vld [vmem:[%s1011 + $0x90] sm:$0xf]
      %v2685 = vld [vmem:[%s1011 + $0x94] sm:$0xf]
      %v2686 = vld [vmem:[%s1011 + $0x9c] sm:$0xf]
      %v2687 = vld [vmem:[%s1011 + $0xa0] sm:$0xf]
      %v2688 = vld [vmem:[%s1011 + $0xa8] sm:$0xf]
      %v2689 = vld [vmem:[%s1011 + $0xac] sm:$0xf]
      %v2690 = vld [vmem:[%s1011 + $0xb4] sm:$0xf]
      %v2691 = vld [vmem:[%s1011 + $0xb8] sm:$0xf]
      %s2692 = scalar_lea.vmem %s3, 192
      %v2693 = vld [vmem:[%s2692] sm:$0xf]
      %v2694 = vld [vmem:[%s2692 + $0x4] sm:$0xf]
      %v2695 = vld [vmem:[%s2692 + $0x8] sm:$0xf]
      %v2696 = vld [vmem:[%s2692 + $0xc] sm:$0xf]
      %v2697 = vld [vmem:[%s2692 + $0x10] sm:$0xf]
      %v2698 = vld [vmem:[%s2692 + $0x14] sm:$0xf]
      %v2699 = vld [vmem:[%s2692 + $0x18] sm:$0xf]
      %v2700 = vld [vmem:[%s2692 + $0x1c] sm:$0xf]
      %v2701 = vld [vmem:[%s2692 + $0x20] sm:$0xf]
      %v2702 = vld [vmem:[%s2692 + $0x24] sm:$0xf]
      %v2703 = vld [vmem:[%s2692 + $0x28] sm:$0xf]
      %v2704 = vld [vmem:[%s2692 + $0x2c] sm:$0xf]
      %v2705 = vld [vmem:[%s2692 + $0x30] sm:$0xf]
      %v2706 = vld [vmem:[%s2692 + $0x34] sm:$0xf]
      %v2707 = vld [vmem:[%s2692 + $0x38] sm:$0xf]
      %v2708 = vld [vmem:[%s2692 + $0x3c] sm:$0xf]
      %v2741 = vunpack.c.l.b16 %v2660
      %v2742 = vunpack.c.l.b16 %v2661
      %v2743 = vunpack.c.l.b16 %v2662
      %v2744 = vunpack.c.l.b16 %v2663
      %v2745 = vunpack.c.l.b16 %v2664
      %v2746 = vunpack.c.l.b16 %v2665
      %v2747 = vunpack.c.l.b16 %v2666
      %v2748 = vunpack.c.l.b16 %v2667
      %v2749 = vunpack.c.l.b16 %v2668
      %v2750 = vunpack.c.l.b16 %v2669
      %v2751 = vunpack.c.l.b16 %v2670
      %v2752 = vunpack.c.l.b16 %v2671
      %v2753 = vunpack.c.l.b16 %v2672
      %v2754 = vunpack.c.l.b16 %v2673
      %v2755 = vunpack.c.l.b16 %v2674
      %v2756 = vunpack.c.l.b16 %v2675
      %v2757 = vunpack.c.l.b16 %v2676
      %v2758 = vunpack.c.l.b16 %v2677
      %v2759 = vunpack.c.l.b16 %v2678
      %v2760 = vunpack.c.l.b16 %v2679
      %v2761 = vunpack.c.l.b16 %v2680
      %v2762 = vunpack.c.l.b16 %v2681
      %v2763 = vunpack.c.l.b16 %v2682
      %v2764 = vunpack.c.l.b16 %v2683
      %v2765 = vunpack.c.l.b16 %v2684
      %v2766 = vunpack.c.l.b16 %v2685
      %v2767 = vunpack.c.l.b16 %v2686
      %v2768 = vunpack.c.l.b16 %v2687
      %v2769 = vunpack.c.l.b16 %v2688
      %v2770 = vunpack.c.l.b16 %v2689
      %v2771 = vunpack.c.l.b16 %v2690
      %v2772 = vunpack.c.l.b16 %v2691
      %v2773 = vpack.c.b16 %v2742, %v2741
      %v2774 = vpack.c.b16 %v2744, %v2743
      %v2775 = vpack.c.b16 %v2746, %v2745
      %v2776 = vpack.c.b16 %v2748, %v2747
      %v2777 = vpack.c.b16 %v2750, %v2749
      %v2778 = vpack.c.b16 %v2752, %v2751
      %v2779 = vpack.c.b16 %v2754, %v2753
      %v2780 = vpack.c.b16 %v2756, %v2755
      %v2781 = vpack.c.b16 %v2758, %v2757
      %v2782 = vpack.c.b16 %v2760, %v2759
      %v2783 = vpack.c.b16 %v2762, %v2761
      %v2784 = vpack.c.b16 %v2764, %v2763
      %v2785 = vpack.c.b16 %v2766, %v2765
      %v2786 = vpack.c.b16 %v2768, %v2767
      %v2787 = vpack.c.b16 %v2770, %v2769
      %v2788 = vpack.c.b16 %v2772, %v2771
      %v2821 = vunpack.c.l.b16 %v2693
      %v2822 = vunpack.c.l.b16 %v2694
      %v2823 = vunpack.c.l.b16 %v2695
      %v2824 = vunpack.c.l.b16 %v2696
      %v2825 = vunpack.c.l.b16 %v2697
      %v2826 = vunpack.c.l.b16 %v2698
      %v2827 = vunpack.c.l.b16 %v2699
      %v2828 = vunpack.c.l.b16 %v2700
      %v2829 = vunpack.c.l.b16 %v2701
      %v2830 = vunpack.c.l.b16 %v2702
      %v2831 = vunpack.c.l.b16 %v2703
      %v2832 = vunpack.c.l.b16 %v2704
      %v2833 = vunpack.c.l.b16 %v2705
      %v2834 = vunpack.c.l.b16 %v2706
      %v2835 = vunpack.c.l.b16 %v2707
      %v2836 = vunpack.c.l.b16 %v2708
      %v2837 = vpack.c.b16 %v2822, %v2821
      %v2838 = vpack.c.b16 %v2824, %v2823
      %v2839 = vpack.c.b16 %v2826, %v2825
      %v2840 = vpack.c.b16 %v2828, %v2827
      %v2841 = vpack.c.b16 %v2830, %v2829
      %v2842 = vpack.c.b16 %v2832, %v2831
      %v2843 = vpack.c.b16 %v2834, %v2833
      %v2844 = vpack.c.b16 %v2836, %v2835
      %2853 = vmatprep.subr.bf16.mxu0 0
      %2854 = vmatpush1.bf16.msra.mxu0 %v2837
      %2855 = vmatprep.subr.bf16.mxu0 0
      %2856 = vmatpush1.bf16.msra.mxu0 %v2838
      %2857 = vmatprep.subr.bf16.mxu0 0
      %2858 = vmatpush1.bf16.msra.mxu0 %v2839
      %2859 = vmatprep.subr.bf16.mxu0 0
      %2860 = vmatpush1.bf16.msra.mxu0 %v2840
      %2861 = vmatprep.subr.bf16.mxu0 0
      %2862 = vmatpush1.bf16.msra.mxu0 %v2841
      %2863 = vmatprep.subr.bf16.mxu0 0
      %2864 = vmatpush1.bf16.msra.mxu0 %v2842
      %2865 = vmatprep.subr.bf16.mxu0 0
      %2866 = vmatpush1.bf16.msra.mxu0 %v2843
      %2867 = vmatprep.subr.bf16.mxu0 0
      %2868 = vmatpush1.bf16.msra.mxu0 %v2844
      %2869 = vmatprep.subr.bf16.mxu0 0
      %2870 = vmatpush1.bf16.msra.mxu0 0
      %2871 = vmatprep.subr.bf16.mxu0 0
      %2872 = vmatpush1.bf16.msra.mxu0 0
      %2873 = vmatprep.subr.bf16.mxu0 0
      %2874 = vmatpush1.bf16.msra.mxu0 0
      %2875 = vmatprep.subr.bf16.mxu0 0
      %2876 = vmatpush1.bf16.msra.mxu0 0
      %2877 = vmatprep.subr.bf16.mxu0 0
      %2878 = vmatpush1.bf16.msra.mxu0 0
      %2879 = vmatprep.subr.bf16.mxu0 0
      %2880 = vmatpush1.bf16.msra.mxu0 0
      %2881 = vmatprep.subr.bf16.mxu0 0
      %2882 = vmatpush1.bf16.msra.mxu0 0
      %2883 = vmatprep.subr.bf16.mxu0 0
      %2884 = vmatpush1.bf16.msra.mxu0 0
      %2885 = vmatprep.mubr.bf16.mxu0 0
      %2886 = vmatmul.mubr.bf16.gmra.mrb[0].mxu0 %v2773
      %v2887 = vpop.f32.mrb[0].mxu0
      %v2888 = vadd.f32 0.0, %v2887
      %v2889 = vpop.f32.mrb[0].mxu0
      %v2890 = vpop.f32.mrb[0].mxu0
      %v2891 = vadd.f32 0.0, %v2890
      %v2892 = vpop.f32.mrb[0].mxu0
      %2893 = vmatprep.mubr.bf16.mxu0 0
      %2894 = vmatmul.mubr.bf16.gmra.mrb[0].mxu0 %v2774
      %v2895 = vpop.f32.mrb[0].mxu0
      %v2896 = vadd.f32 0.0, %v2895
      %v2897 = vpop.f32.mrb[0].mxu0
      %v2898 = vpop.f32.mrb[0].mxu0
      %v2899 = vadd.f32 0.0, %v2898
      %v2900 = vpop.f32.mrb[0].mxu0
      %2901 = vmatprep.mubr.bf16.mxu0 0
      %2902 = vmatmul.mubr.bf16.gmra.mrb[0].mxu0 %v2775
      %v2903 = vpop.f32.mrb[0].mxu0
      %v2904 = vadd.f32 0.0, %v2903
      %v2905 = vpop.f32.mrb[0].mxu0
      %v2906 = vpop.f32.mrb[0].mxu0
      %v2907 = vadd.f32 0.0, %v2906
      %v2908 = vpop.f32.mrb[0].mxu0
      %2909 = vmatprep.mubr.bf16.mxu0 0
      %2910 = vmatmul.mubr.bf16.gmra.mrb[0].mxu0 %v2776
      %v2911 = vpop.f32.mrb[0].mxu0
      %v2912 = vadd.f32 0.0, %v2911
      %v2913 = vpop.f32.mrb[0].mxu0
      %v2914 = vpop.f32.mrb[0].mxu0
      %v2915 = vadd.f32 0.0, %v2914
      %v2916 = vpop.f32.mrb[0].mxu0
      %2917 = vmatprep.mubr.bf16.mxu0 0
      %2918 = vmatmul.mubr.bf16.gmra.mrb[0].mxu0 %v2777
      %v2919 = vpop.f32.mrb[0].mxu0
      %v2920 = vadd.f32 0.0, %v2919
      %v2921 = vpop.f32.mrb[0].mxu0
      %v2922 = vpop.f32.mrb[0].mxu0
      %v2923 = vadd.f32 0.0, %v2922
      %v2924 = vpop.f32.mrb[0].mxu0
      %2925 = vmatprep.mubr.bf16.mxu0 0
      %2926 = vmatmul.mubr.bf16.gmra.mrb[0].mxu0 %v2778
      %v2927 = vpop.f32.mrb[0].mxu0
      %v2928 = vadd.f32 0.0, %v2927
      %v2929 = vpop.f32.mrb[0].mxu0
      %v2930 = vpop.f32.mrb[0].mxu0
      %v2931 = vadd.f32 0.0, %v2930
      %v2932 = vpop.f32.mrb[0].mxu0
      %2933 = vmatprep.mubr.bf16.mxu0 0
      %2934 = vmatmul.mubr.bf16.gmra.mrb[0].mxu0 %v2779
      %v2935 = vpop.f32.mrb[0].mxu0
      %v2936 = vadd.f32 0.0, %v2935
      %v2937 = vpop.f32.mrb[0].mxu0
      %v2938 = vpop.f32.mrb[0].mxu0
      %v2939 = vadd.f32 0.0, %v2938
      %v2940 = vpop.f32.mrb[0].mxu0
      %2941 = vmatprep.mubr.bf16.mxu0 0
      %2942 = vmatmul.mubr.bf16.gmra.mrb[0].mxu0 %v2780
      %v2943 = vpop.f32.mrb[0].mxu0
      %v2944 = vadd.f32 0.0, %v2943
      %v2945 = vpop.f32.mrb[0].mxu0
      %v2946 = vpop.f32.mrb[0].mxu0
      %v2947 = vadd.f32 0.0, %v2946
      %v2948 = vpop.f32.mrb[0].mxu0
      %2949 = vmatprep.mubr.bf16.mxu0 0
      %2950 = vmatmul.mubr.bf16.gmra.mrb[0].mxu0 %v2781
      %v2951 = vpop.f32.mrb[0].mxu0
      %v2952 = vadd.f32 0.0, %v2951
      %v2953 = vpop.f32.mrb[0].mxu0
      %v2954 = vpop.f32.mrb[0].mxu0
      %v2955 = vadd.f32 0.0, %v2954
      %v2956 = vpop.f32.mrb[0].mxu0
      %2957 = vmatprep.mubr.bf16.mxu0 0
      %2958 = vmatmul.mubr.bf16.gmra.mrb[0].mxu0 %v2782
      %v2959 = vpop.f32.mrb[0].mxu0
      %v2960 = vadd.f32 0.0, %v2959
      %v2961 = vpop.f32.mrb[0].mxu0
      %v2962 = vpop.f32.mrb[0].mxu0
      %v2963 = vadd.f32 0.0, %v2962
      %v2964 = vpop.f32.mrb[0].mxu0
      %2965 = vmatprep.mubr.bf16.mxu0 0
      %2966 = vmatmul.mubr.bf16.gmra.mrb[0].mxu0 %v2783
      %v2967 = vpop.f32.mrb[0].mxu0
      %v2968 = vadd.f32 0.0, %v2967
      %v2969 = vpop.f32.mrb[0].mxu0
      %v2970 = vpop.f32.mrb[0].mxu0
      %v2971 = vadd.f32 0.0, %v2970
      %v2972 = vpop.f32.mrb[0].mxu0
      %2973 = vmatprep.mubr.bf16.mxu0 0
      %2974 = vmatmul.mubr.bf16.gmra.mrb[0].mxu0 %v2784
      %v2975 = vpop.f32.mrb[0].mxu0
      %v2976 = vadd.f32 0.0, %v2975
      %v2977 = vpop.f32.mrb[0].mxu0
      %v2978 = vpop.f32.mrb[0].mxu0
      %v2979 = vadd.f32 0.0, %v2978
      %v2980 = vpop.f32.mrb[0].mxu0
      %2981 = vmatprep.mubr.bf16.mxu0 0
      %2982 = vmatmul.mubr.bf16.gmra.mrb[0].mxu0 %v2785
      %v2983 = vpop.f32.mrb[0].mxu0
      %v2984 = vadd.f32 0.0, %v2983
      %v2985 = vpop.f32.mrb[0].mxu0
      %v2986 = vpop.f32.mrb[0].mxu0
      %v2987 = vadd.f32 0.0, %v2986
      %v2988 = vpop.f32.mrb[0].mxu0
      %2989 = vmatprep.mubr.bf16.mxu0 0
      %2990 = vmatmul.mubr.bf16.gmra.mrb[0].mxu0 %v2786
      %v2991 = vpop.f32.mrb[0].mxu0
      %v2992 = vadd.f32 0.0, %v2991
      %v2993 = vpop.f32.mrb[0].mxu0
      %v2994 = vpop.f32.mrb[0].mxu0
      %v2995 = vadd.f32 0.0, %v2994
      %v2996 = vpop.f32.mrb[0].mxu0
      %2997 = vmatprep.mubr.bf16.mxu0 0
      %2998 = vmatmul.mubr.bf16.gmra.mrb[0].mxu0 %v2787
      %v2999 = vpop.f32.mrb[0].mxu0
      %v3000 = vadd.f32 0.0, %v2999
      %v3001 = vpop.f32.mrb[0].mxu0
      %v3002 = vpop.f32.mrb[0].mxu0
      %v3003 = vadd.f32 0.0, %v3002
      %v3004 = vpop.f32.mrb[0].mxu0
      %3005 = vmatprep.mubr.bf16.mxu0 0
      %3006 = vmatmul.mubr.bf16.gmra.mrb[0].mxu0 %v2788
      %v3007 = vpop.f32.mrb[0].mxu0
      %v3008 = vadd.f32 0.0, %v3007
      %v3009 = vpop.f32.mrb[0].mxu0
      %v3010 = vpop.f32.mrb[0].mxu0
      %v3011 = vadd.f32 0.0, %v3010
      %v3012 = vpop.f32.mrb[0].mxu0
      %3013 = vdwg.mxu0
      %v3014 = vadd.f32 %v2628, %v2888
      %v3015 = vadd.f32 %v2629, %v2891
      %v3016 = vadd.f32 %v2630, %v2896
      %v3017 = vadd.f32 %v2631, %v2899
      %v3018 = vadd.f32 %v2632, %v2904
      %v3019 = vadd.f32 %v2633, %v2907
      %v3020 = vadd.f32 %v2634, %v2912
      %v3021 = vadd.f32 %v2635, %v2915
      %v3022 = vadd.f32 %v2636, %v2920
      %v3023 = vadd.f32 %v2637, %v2923
      %v3024 = vadd.f32 %v2638, %v2928
      %v3025 = vadd.f32 %v2639, %v2931
      %v3026 = vadd.f32 %v2640, %v2936
      %v3027 = vadd.f32 %v2641, %v2939
      %v3028 = vadd.f32 %v2642, %v2944
      %v3029 = vadd.f32 %v2643, %v2947
      %v3030 = vadd.f32 %v2644, %v2952
      %v3031 = vadd.f32 %v2645, %v2955
      %v3032 = vadd.f32 %v2646, %v2960
      %v3033 = vadd.f32 %v2647, %v2963
      %v3034 = vadd.f32 %v2648, %v2968
      %v3035 = vadd.f32 %v2649, %v2971
      %v3036 = vadd.f32 %v2650, %v2976
      %v3037 = vadd.f32 %v2651, %v2979
      %v3038 = vadd.f32 %v2652, %v2984
      %v3039 = vadd.f32 %v2653, %v2987
      %v3040 = vadd.f32 %v2654, %v2992
      %v3041 = vadd.f32 %v2655, %v2995
      %v3042 = vadd.f32 %v2656, %v3000
      %v3043 = vadd.f32 %v2657, %v3003
      %v3044 = vadd.f32 %v2658, %v3008
      %v3045 = vadd.f32 %v2659, %v3011
      %v3046 = vld [vmem:[%s1011] sm:$0xf]
      %v3047 = vld [vmem:[%s1011 + $0x4] sm:$0xf]
      %v3048 = vld [vmem:[%s1011 + $0x8] sm:$0x1]
      %v3049 = vld [vmem:[%s1011 + $0xc] sm:$0xf]
      %v3050 = vld [vmem:[%s1011 + $0x10] sm:$0xf]
      %v3051 = vld [vmem:[%s1011 + $0x14] sm:$0x1]
      %v3052 = vld [vmem:[%s1011 + $0x18] sm:$0xf]
      %v3053 = vld [vmem:[%s1011 + $0x1c] sm:$0xf]
      %v3054 = vld [vmem:[%s1011 + $0x20] sm:$0x1]
      %v3055 = vld [vmem:[%s1011 + $0x24] sm:$0xf]
      %v3056 = vld [vmem:[%s1011 + $0x28] sm:$0xf]
      %v3057 = vld [vmem:[%s1011 + $0x2c] sm:$0x1]
      %v3058 = vld [vmem:[%s1011 + $0x30] sm:$0xf]
      %v3059 = vld [vmem:[%s1011 + $0x34] sm:$0xf]
      %v3060 = vld [vmem:[%s1011 + $0x38] sm:$0x1]
      %v3061 = vld [vmem:[%s1011 + $0x3c] sm:$0xf]
      %v3062 = vld [vmem:[%s1011 + $0x40] sm:$0xf]
      %v3063 = vld [vmem:[%s1011 + $0x44] sm:$0x1]
      %v3064 = vld [vmem:[%s1011 + $0x48] sm:$0xf]
      %v3065 = vld [vmem:[%s1011 + $0x4c] sm:$0xf]
      %v3066 = vld [vmem:[%s1011 + $0x50] sm:$0x1]
      %v3067 = vld [vmem:[%s1011 + $0x54] sm:$0xf]
      %v3068 = vld [vmem:[%s1011 + $0x58] sm:$0xf]
      %v3069 = vld [vmem:[%s1011 + $0x5c] sm:$0x1]
      %v3070 = vld [vmem:[%s1011 + $0x60] sm:$0xf]
      %v3071 = vld [vmem:[%s1011 + $0x64] sm:$0xf]
      %v3072 = vld [vmem:[%s1011 + $0x68] sm:$0x1]
      %v3073 = vld [vmem:[%s1011 + $0x6c] sm:$0xf]
      %v3074 = vld [vmem:[%s1011 + $0x70] sm:$0xf]
      %v3075 = vld [vmem:[%s1011 + $0x74] sm:$0x1]
      %v3076 = vld [vmem:[%s1011 + $0x78] sm:$0xf]
      %v3077 = vld [vmem:[%s1011 + $0x7c] sm:$0xf]
      %v3078 = vld [vmem:[%s1011 + $0x80] sm:$0x1]
      %v3079 = vld [vmem:[%s1011 + $0x84] sm:$0xf]
      %v3080 = vld [vmem:[%s1011 + $0x88] sm:$0xf]
      %v3081 = vld [vmem:[%s1011 + $0x8c] sm:$0x1]
      %v3082 = vld [vmem:[%s1011 + $0x90] sm:$0xf]
      %v3083 = vld [vmem:[%s1011 + $0x94] sm:$0xf]
      %v3084 = vld [vmem:[%s1011 + $0x98] sm:$0x1]
      %v3085 = vld [vmem:[%s1011 + $0x9c] sm:$0xf]
      %v3086 = vld [vmem:[%s1011 + $0xa0] sm:$0xf]
      %v3087 = vld [vmem:[%s1011 + $0xa4] sm:$0x1]
      %v3088 = vld [vmem:[%s1011 + $0xa8] sm:$0xf]
      %v3089 = vld [vmem:[%s1011 + $0xac] sm:$0xf]
      %v3090 = vld [vmem:[%s1011 + $0xb0] sm:$0x1]
      %v3091 = vld [vmem:[%s1011 + $0xb4] sm:$0xf]
      %v3092 = vld [vmem:[%s1011 + $0xb8] sm:$0xf]
      %v3093 = vld [vmem:[%s1011 + $0xbc] sm:$0x1]
      %v3095 = vshrl.u32 %v3046, 16
      %v3097 = vrot.slane %v3095, 4
      %v3098 = vshll.u32 %v3046, 16
      %v3100 = vrot.slane %v3098, 5
      %v3101 = vor.u32 %v3097, %v3100
      %v3102 = vrot.slane %v3101, 4
      %v3104 = vshll.u32 %v3047, 16
      %v3106 = vrot.slane %v3104, 5
      %v3107 = vsel %vm1195, %v3102, %v3106
      %v3108 = vshrl.u32 %v3047, 16
      %v3110 = vrot.slane %v3108, 4
      %v3111 = vor.u32 %v3110, %v3106
      %v3112 = vrot.slane %v3111, 4
      %v3114 = vshll.u32 %v3048, 16
      %v3116 = vrot.slane %v3114, 5
      %v3117 = vsel %vm1195, %v3112, %v3116
      %v3119 = vshrl.u32 %v3049, 16
      %v3121 = vrot.slane %v3119, 4
      %v3122 = vshll.u32 %v3049, 16
      %v3124 = vrot.slane %v3122, 5
      %v3125 = vor.u32 %v3121, %v3124
      %v3126 = vrot.slane %v3125, 4
      %v3128 = vshll.u32 %v3050, 16
      %v3130 = vrot.slane %v3128, 5
      %v3131 = vsel %vm1195, %v3126, %v3130
      %v3132 = vshrl.u32 %v3050, 16
      %v3134 = vrot.slane %v3132, 4
      %v3135 = vor.u32 %v3134, %v3130
      %v3136 = vrot.slane %v3135, 4
      %v3138 = vshll.u32 %v3051, 16
      %v3140 = vrot.slane %v3138, 5
      %v3141 = vsel %vm1195, %v3136, %v3140
      %v3143 = vshrl.u32 %v3052, 16
      %v3145 = vrot.slane %v3143, 4
      %v3146 = vshll.u32 %v3052, 16
      %v3148 = vrot.slane %v3146, 5
      %v3149 = vor.u32 %v3145, %v3148
      %v3150 = vrot.slane %v3149, 4
      %v3152 = vshll.u32 %v3053, 16
      %v3154 = vrot.slane %v3152, 5
      %v3155 = vsel %vm1195, %v3150, %v3154
      %v3156 = vshrl.u32 %v3053, 16
      %v3158 = vrot.slane %v3156, 4
      %v3159 = vor.u32 %v3158, %v3154
      %v3160 = vrot.slane %v3159, 4
      %v3162 = vshll.u32 %v3054, 16
      %v3164 = vrot.slane %v3162, 5
      %v3165 = vsel %vm1195, %v3160, %v3164
      %v3167 = vshrl.u32 %v3055, 16
      %v3169 = vrot.slane %v3167, 4
      %v3170 = vshll.u32 %v3055, 16
      %v3172 = vrot.slane %v3170, 5
      %v3173 = vor.u32 %v3169, %v3172
      %v3174 = vrot.slane %v3173, 4
      %v3176 = vshll.u32 %v3056, 16
      %v3178 = vrot.slane %v3176, 5
      %v3179 = vsel %vm1195, %v3174, %v3178
      %v3180 = vshrl.u32 %v3056, 16
      %v3182 = vrot.slane %v3180, 4
      %v3183 = vor.u32 %v3182, %v3178
      %v3184 = vrot.slane %v3183, 4
      %v3186 = vshll.u32 %v3057, 16
      %v3188 = vrot.slane %v3186, 5
      %v3189 = vsel %vm1195, %v3184, %v3188
      %v3191 = vshrl.u32 %v3058, 16
      %v3193 = vrot.slane %v3191, 4
      %v3194 = vshll.u32 %v3058, 16
      %v3196 = vrot.slane %v3194, 5
      %v3197 = vor.u32 %v3193, %v3196
      %v3198 = vrot.slane %v3197, 4
      %v3200 = vshll.u32 %v3059, 16
      %v3202 = vrot.slane %v3200, 5
      %v3203 = vsel %vm1195, %v3198, %v3202
      %v3204 = vshrl.u32 %v3059, 16
      %v3206 = vrot.slane %v3204, 4
      %v3207 = vor.u32 %v3206, %v3202
      %v3208 = vrot.slane %v3207, 4
      %v3210 = vshll.u32 %v3060, 16
      %v3212 = vrot.slane %v3210, 5
      %v3213 = vsel %vm1195, %v3208, %v3212
      %v3215 = vshrl.u32 %v3061, 16
      %v3217 = vrot.slane %v3215, 4
      %v3218 = vshll.u32 %v3061, 16
      %v3220 = vrot.slane %v3218, 5
      %v3221 = vor.u32 %v3217, %v3220
      %v3222 = vrot.slane %v3221, 4
      %v3224 = vshll.u32 %v3062, 16
      %v3226 = vrot.slane %v3224, 5
      %v3227 = vsel %vm1195, %v3222, %v3226
      %v3228 = vshrl.u32 %v3062, 16
      %v3230 = vrot.slane %v3228, 4
      %v3231 = vor.u32 %v3230, %v3226
      %v3232 = vrot.slane %v3231, 4
      %v3234 = vshll.u32 %v3063, 16
      %v3236 = vrot.slane %v3234, 5
      %v3237 = vsel %vm1195, %v3232, %v3236
      %v3239 = vshrl.u32 %v3064, 16
      %v3241 = vrot.slane %v3239, 4
      %v3242 = vshll.u32 %v3064, 16
      %v3244 = vrot.slane %v3242, 5
      %v3245 = vor.u32 %v3241, %v3244
      %v3246 = vrot.slane %v3245, 4
      %v3248 = vshll.u32 %v3065, 16
      %v3250 = vrot.slane %v3248, 5
      %v3251 = vsel %vm1195, %v3246, %v3250
      %v3252 = vshrl.u32 %v3065, 16
      %v3254 = vrot.slane %v3252, 4
      %v3255 = vor.u32 %v3254, %v3250
      %v3256 = vrot.slane %v3255, 4
      %v3258 = vshll.u32 %v3066, 16
      %v3260 = vrot.slane %v3258, 5
      %v3261 = vsel %vm1195, %v3256, %v3260
      %v3263 = vshrl.u32 %v3067, 16
      %v3265 = vrot.slane %v3263, 4
      %v3266 = vshll.u32 %v3067, 16
      %v3268 = vrot.slane %v3266, 5
      %v3269 = vor.u32 %v3265, %v3268
      %v3270 = vrot.slane %v3269, 4
      %v3272 = vshll.u32 %v3068, 16
      %v3274 = vrot.slane %v3272, 5
      %v3275 = vsel %vm1195, %v3270, %v3274
      %v3276 = vshrl.u32 %v3068, 16
      %v3278 = vrot.slane %v3276, 4
      %v3279 = vor.u32 %v3278, %v3274
      %v3280 = vrot.slane %v3279, 4
      %v3282 = vshll.u32 %v3069, 16
      %v3284 = vrot.slane %v3282, 5
      %v3285 = vsel %vm1195, %v3280, %v3284
      %v3287 = vshrl.u32 %v3070, 16
      %v3289 = vrot.slane %v3287, 4
      %v3290 = vshll.u32 %v3070, 16
      %v3292 = vrot.slane %v3290, 5
      %v3293 = vor.u32 %v3289, %v3292
      %v3294 = vrot.slane %v3293, 4
      %v3296 = vshll.u32 %v3071, 16
      %v3298 = vrot.slane %v3296, 5
      %v3299 = vsel %vm1195, %v3294, %v3298
      %v3300 = vshrl.u32 %v3071, 16
      %v3302 = vrot.slane %v3300, 4
      %v3303 = vor.u32 %v3302, %v3298
      %v3304 = vrot.slane %v3303, 4
      %v3306 = vshll.u32 %v3072, 16
      %v3308 = vrot.slane %v3306, 5
      %v3309 = vsel %vm1195, %v3304, %v3308
      %v3311 = vshrl.u32 %v3073, 16
      %v3313 = vrot.slane %v3311, 4
      %v3314 = vshll.u32 %v3073, 16
      %v3316 = vrot.slane %v3314, 5
      %v3317 = vor.u32 %v3313, %v3316
      %v3318 = vrot.slane %v3317, 4
      %v3320 = vshll.u32 %v3074, 16
      %v3322 = vrot.slane %v3320, 5
      %v3323 = vsel %vm1195, %v3318, %v3322
      %v3324 = vshrl.u32 %v3074, 16
      %v3326 = vrot.slane %v3324, 4
      %v3327 = vor.u32 %v3326, %v3322
      %v3328 = vrot.slane %v3327, 4
      %v3330 = vshll.u32 %v3075, 16
      %v3332 = vrot.slane %v3330, 5
      %v3333 = vsel %vm1195, %v3328, %v3332
      %v3335 = vshrl.u32 %v3076, 16
      %v3337 = vrot.slane %v3335, 4
      %v3338 = vshll.u32 %v3076, 16
      %v3340 = vrot.slane %v3338, 5
      %v3341 = vor.u32 %v3337, %v3340
      %v3342 = vrot.slane %v3341, 4
      %v3344 = vshll.u32 %v3077, 16
      %v3346 = vrot.slane %v3344, 5
      %v3347 = vsel %vm1195, %v3342, %v3346
      %v3348 = vshrl.u32 %v3077, 16
      %v3350 = vrot.slane %v3348, 4
      %v3351 = vor.u32 %v3350, %v3346
      %v3352 = vrot.slane %v3351, 4
      %v3354 = vshll.u32 %v3078, 16
      %v3356 = vrot.slane %v3354, 5
      %v3357 = vsel %vm1195, %v3352, %v3356
      %v3359 = vshrl.u32 %v3079, 16
      %v3361 = vrot.slane %v3359, 4
      %v3362 = vshll.u32 %v3079, 16
      %v3364 = vrot.slane %v3362, 5
      %v3365 = vor.u32 %v3361, %v3364
      %v3366 = vrot.slane %v3365, 4
      %v3368 = vshll.u32 %v3080, 16
      %v3370 = vrot.slane %v3368, 5
      %v3371 = vsel %vm1195, %v3366, %v3370
      %v3372 = vshrl.u32 %v3080, 16
      %v3374 = vrot.slane %v3372, 4
      %v3375 = vor.u32 %v3374, %v3370
      %v3376 = vrot.slane %v3375, 4
      %v3378 = vshll.u32 %v3081, 16
      %v3380 = vrot.slane %v3378, 5
      %v3381 = vsel %vm1195, %v3376, %v3380
      %v3383 = vshrl.u32 %v3082, 16
      %v3385 = vrot.slane %v3383, 4
      %v3386 = vshll.u32 %v3082, 16
      %v3388 = vrot.slane %v3386, 5
      %v3389 = vor.u32 %v3385, %v3388
      %v3390 = vrot.slane %v3389, 4
      %v3392 = vshll.u32 %v3083, 16
      %v3394 = vrot.slane %v3392, 5
      %v3395 = vsel %vm1195, %v3390, %v3394
      %v3396 = vshrl.u32 %v3083, 16
      %v3398 = vrot.slane %v3396, 4
      %v3399 = vor.u32 %v3398, %v3394
      %v3400 = vrot.slane %v3399, 4
      %v3402 = vshll.u32 %v3084, 16
      %v3404 = vrot.slane %v3402, 5
      %v3405 = vsel %vm1195, %v3400, %v3404
      %v3407 = vshrl.u32 %v3085, 16
      %v3409 = vrot.slane %v3407, 4
      %v3410 = vshll.u32 %v3085, 16
      %v3412 = vrot.slane %v3410, 5
      %v3413 = vor.u32 %v3409, %v3412
      %v3414 = vrot.slane %v3413, 4
      %v3416 = vshll.u32 %v3086, 16
      %v3418 = vrot.slane %v3416, 5
      %v3419 = vsel %vm1195, %v3414, %v3418
      %v3420 = vshrl.u32 %v3086, 16
      %v3422 = vrot.slane %v3420, 4
      %v3423 = vor.u32 %v3422, %v3418
      %v3424 = vrot.slane %v3423, 4
      %v3426 = vshll.u32 %v3087, 16
      %v3428 = vrot.slane %v3426, 5
      %v3429 = vsel %vm1195, %v3424, %v3428
      %v3431 = vshrl.u32 %v3088, 16
      %v3433 = vrot.slane %v3431, 4
      %v3434 = vshll.u32 %v3088, 16
      %v3436 = vrot.slane %v3434, 5
      %v3437 = vor.u32 %v3433, %v3436
      %v3438 = vrot.slane %v3437, 4
      %v3440 = vshll.u32 %v3089, 16
      %v3442 = vrot.slane %v3440, 5
      %v3443 = vsel %vm1195, %v3438, %v3442
      %v3444 = vshrl.u32 %v3089, 16
      %v3446 = vrot.slane %v3444, 4
      %v3447 = vor.u32 %v3446, %v3442
      %v3448 = vrot.slane %v3447, 4
      %v3450 = vshll.u32 %v3090, 16
      %v3452 = vrot.slane %v3450, 5
      %v3453 = vsel %vm1195, %v3448, %v3452
      %v3455 = vshrl.u32 %v3091, 16
      %v3457 = vrot.slane %v3455, 4
      %v3458 = vshll.u32 %v3091, 16
      %v3460 = vrot.slane %v3458, 5
      %v3461 = vor.u32 %v3457, %v3460
      %v3462 = vrot.slane %v3461, 4
      %v3464 = vshll.u32 %v3092, 16
      %v3466 = vrot.slane %v3464, 5
      %v3467 = vsel %vm1195, %v3462, %v3466
      %v3468 = vshrl.u32 %v3092, 16
      %v3470 = vrot.slane %v3468, 4
      %v3471 = vor.u32 %v3470, %v3466
      %v3472 = vrot.slane %v3471, 4
      %v3474 = vshll.u32 %v3093, 16
      %v3476 = vrot.slane %v3474, 5
      %v3477 = vsel %vm1195, %v3472, %v3476
      %s3478 = scalar_lea.vmem %s3, 256
      %v3479 = vld [vmem:[%s3478] sm:$0xf]
      %v3480 = vld [vmem:[%s3478 + $0x4] sm:$0xf]
      %v3481 = vld [vmem:[%s3478 + $0x8] sm:$0xf]
      %v3482 = vld [vmem:[%s3478 + $0xc] sm:$0xf]
      %v3483 = vld [vmem:[%s3478 + $0x10] sm:$0xf]
      %v3484 = vld [vmem:[%s3478 + $0x14] sm:$0xf]
      %v3485 = vld [vmem:[%s3478 + $0x18] sm:$0xf]
      %v3486 = vld [vmem:[%s3478 + $0x1c] sm:$0xf]
      %v3487 = vld [vmem:[%s3478 + $0x20] sm:$0xf]
      %v3488 = vld [vmem:[%s3478 + $0x24] sm:$0xf]
      %v3489 = vld [vmem:[%s3478 + $0x28] sm:$0xf]
      %v3490 = vld [vmem:[%s3478 + $0x2c] sm:$0xf]
      %v3491 = vld [vmem:[%s3478 + $0x30] sm:$0xf]
      %v3492 = vld [vmem:[%s3478 + $0x34] sm:$0xf]
      %v3493 = vld [vmem:[%s3478 + $0x38] sm:$0xf]
      %v3494 = vld [vmem:[%s3478 + $0x3c] sm:$0xf]
      %v3495 = vunpack.c.l.b16 %v3107
      %v3496 = vunpack.c.l.b16 %v3117
      %v3497 = vunpack.c.l.b16 %v3131
      %v3498 = vunpack.c.l.b16 %v3141
      %v3499 = vunpack.c.l.b16 %v3155
      %v3500 = vunpack.c.l.b16 %v3165
      %v3501 = vunpack.c.l.b16 %v3179
      %v3502 = vunpack.c.l.b16 %v3189
      %v3503 = vunpack.c.l.b16 %v3203
      %v3504 = vunpack.c.l.b16 %v3213
      %v3505 = vunpack.c.l.b16 %v3227
      %v3506 = vunpack.c.l.b16 %v3237
      %v3507 = vunpack.c.l.b16 %v3251
      %v3508 = vunpack.c.l.b16 %v3261
      %v3509 = vunpack.c.l.b16 %v3275
      %v3510 = vunpack.c.l.b16 %v3285
      %v3511 = vunpack.c.l.b16 %v3299
      %v3512 = vunpack.c.l.b16 %v3309
      %v3513 = vunpack.c.l.b16 %v3323
      %v3514 = vunpack.c.l.b16 %v3333
      %v3515 = vunpack.c.l.b16 %v3347
      %v3516 = vunpack.c.l.b16 %v3357
      %v3517 = vunpack.c.l.b16 %v3371
      %v3518 = vunpack.c.l.b16 %v3381
      %v3519 = vunpack.c.l.b16 %v3395
      %v3520 = vunpack.c.l.b16 %v3405
      %v3521 = vunpack.c.l.b16 %v3419
      %v3522 = vunpack.c.l.b16 %v3429
      %v3523 = vunpack.c.l.b16 %v3443
      %v3524 = vunpack.c.l.b16 %v3453
      %v3525 = vunpack.c.l.b16 %v3467
      %v3526 = vunpack.c.l.b16 %v3477
      %v3527 = vpack.c.b16 %v3496, %v3495
      %v3528 = vpack.c.b16 %v3498, %v3497
      %v3529 = vpack.c.b16 %v3500, %v3499
      %v3530 = vpack.c.b16 %v3502, %v3501
      %v3531 = vpack.c.b16 %v3504, %v3503
      %v3532 = vpack.c.b16 %v3506, %v3505
      %v3533 = vpack.c.b16 %v3508, %v3507
      %v3534 = vpack.c.b16 %v3510, %v3509
      %v3535 = vpack.c.b16 %v3512, %v3511
      %v3536 = vpack.c.b16 %v3514, %v3513
      %v3537 = vpack.c.b16 %v3516, %v3515
      %v3538 = vpack.c.b16 %v3518, %v3517
      %v3539 = vpack.c.b16 %v3520, %v3519
      %v3540 = vpack.c.b16 %v3522, %v3521
      %v3541 = vpack.c.b16 %v3524, %v3523
      %v3542 = vpack.c.b16 %v3526, %v3525
      %v3575 = vunpack.c.l.b16 %v3479
      %v3576 = vunpack.c.l.b16 %v3480
      %v3577 = vunpack.c.l.b16 %v3481
      %v3578 = vunpack.c.l.b16 %v3482
      %v3579 = vunpack.c.l.b16 %v3483
      %v3580 = vunpack.c.l.b16 %v3484
      %v3581 = vunpack.c.l.b16 %v3485
      %v3582 = vunpack.c.l.b16 %v3486
      %v3583 = vunpack.c.l.b16 %v3487
      %v3584 = vunpack.c.l.b16 %v3488
      %v3585 = vunpack.c.l.b16 %v3489
      %v3586 = vunpack.c.l.b16 %v3490
      %v3587 = vunpack.c.l.b16 %v3491
      %v3588 = vunpack.c.l.b16 %v3492
      %v3589 = vunpack.c.l.b16 %v3493
      %v3590 = vunpack.c.l.b16 %v3494
      %v3591 = vpack.c.b16 %v3576, %v3575
      %v3592 = vpack.c.b16 %v3578, %v3577
      %v3593 = vpack.c.b16 %v3580, %v3579
      %v3594 = vpack.c.b16 %v3582, %v3581
      %v3595 = vpack.c.b16 %v3584, %v3583
      %v3596 = vpack.c.b16 %v3586, %v3585
      %v3597 = vpack.c.b16 %v3588, %v3587
      %v3598 = vpack.c.b16 %v3590, %v3589
      %3607 = vmatprep.subr.bf16.mxu0 0
      %3608 = vmatpush1.bf16.msra.mxu0 %v3591
      %3609 = vmatprep.subr.bf16.mxu0 0
      %3610 = vmatpush1.bf16.msra.mxu0 %v3592
      %3611 = vmatprep.subr.bf16.mxu0 0
      %3612 = vmatpush1.bf16.msra.mxu0 %v3593
      %3613 = vmatprep.subr.bf16.mxu0 0
      %3614 = vmatpush1.bf16.msra.mxu0 %v3594
      %3615 = vmatprep.subr.bf16.mxu0 0
      %3616 = vmatpush1.bf16.msra.mxu0 %v3595
      %3617 = vmatprep.subr.bf16.mxu0 0
      %3618 = vmatpush1.bf16.msra.mxu0 %v3596
      %3619 = vmatprep.subr.bf16.mxu0 0
      %3620 = vmatpush1.bf16.msra.mxu0 %v3597
      %3621 = vmatprep.subr.bf16.mxu0 0
      %3622 = vmatpush1.bf16.msra.mxu0 %v3598
      %3623 = vmatprep.subr.bf16.mxu0 0
      %3624 = vmatpush1.bf16.msra.mxu0 0
      %3625 = vmatprep.subr.bf16.mxu0 0
      %3626 = vmatpush1.bf16.msra.mxu0 0
      %3627 = vmatprep.subr.bf16.mxu0 0
      %3628 = vmatpush1.bf16.msra.mxu0 0
      %3629 = vmatprep.subr.bf16.mxu0 0
      %3630 = vmatpush1.bf16.msra.mxu0 0
      %3631 = vmatprep.subr.bf16.mxu0 0
      %3632 = vmatpush1.bf16.msra.mxu0 0
      %3633 = vmatprep.subr.bf16.mxu0 0
      %3634 = vmatpush1.bf16.msra.mxu0 0
      %3635 = vmatprep.subr.bf16.mxu0 0
      %3636 = vmatpush1.bf16.msra.mxu0 0
      %3637 = vmatprep.subr.bf16.mxu0 0
      %3638 = vmatpush1.bf16.msra.mxu0 0
      %3639 = vmatprep.mubr.bf16.mxu0 0
      %3640 = vmatmul.mubr.bf16.gmra.mrb[0].mxu0 %v3527
      %v3641 = vpop.f32.mrb[0].mxu0
      %v3642 = vadd.f32 0.0, %v3641
      %v3643 = vpop.f32.mrb[0].mxu0
      %v3644 = vpop.f32.mrb[0].mxu0
      %v3645 = vadd.f32 0.0, %v3644
      %v3646 = vpop.f32.mrb[0].mxu0
      %3647 = vmatprep.mubr.bf16.mxu0 0
      %3648 = vmatmul.mubr.bf16.gmra.mrb[0].mxu0 %v3528
      %v3649 = vpop.f32.mrb[0].mxu0
      %v3650 = vadd.f32 0.0, %v3649
      %v3651 = vpop.f32.mrb[0].mxu0
      %v3652 = vpop.f32.mrb[0].mxu0
      %v3653 = vadd.f32 0.0, %v3652
      %v3654 = vpop.f32.mrb[0].mxu0
      %3655 = vmatprep.mubr.bf16.mxu0 0
      %3656 = vmatmul.mubr.bf16.gmra.mrb[0].mxu0 %v3529
      %v3657 = vpop.f32.mrb[0].mxu0
      %v3658 = vadd.f32 0.0, %v3657
      %v3659 = vpop.f32.mrb[0].mxu0
      %v3660 = vpop.f32.mrb[0].mxu0
      %v3661 = vadd.f32 0.0, %v3660
      %v3662 = vpop.f32.mrb[0].mxu0
      %3663 = vmatprep.mubr.bf16.mxu0 0
      %3664 = vmatmul.mubr.bf16.gmra.mrb[0].mxu0 %v3530
      %v3665 = vpop.f32.mrb[0].mxu0
      %v3666 = vadd.f32 0.0, %v3665
      %v3667 = vpop.f32.mrb[0].mxu0
      %v3668 = vpop.f32.mrb[0].mxu0
      %v3669 = vadd.f32 0.0, %v3668
      %v3670 = vpop.f32.mrb[0].mxu0
      %3671 = vmatprep.mubr.bf16.mxu0 0
      %3672 = vmatmul.mubr.bf16.gmra.mrb[0].mxu0 %v3531
      %v3673 = vpop.f32.mrb[0].mxu0
      %v3674 = vadd.f32 0.0, %v3673
      %v3675 = vpop.f32.mrb[0].mxu0
      %v3676 = vpop.f32.mrb[0].mxu0
      %v3677 = vadd.f32 0.0, %v3676
      %v3678 = vpop.f32.mrb[0].mxu0
      %3679 = vmatprep.mubr.bf16.mxu0 0
      %3680 = vmatmul.mubr.bf16.gmra.mrb[0].mxu0 %v3532
      %v3681 = vpop.f32.mrb[0].mxu0
      %v3682 = vadd.f32 0.0, %v3681
      %v3683 = vpop.f32.mrb[0].mxu0
      %v3684 = vpop.f32.mrb[0].mxu0
      %v3685 = vadd.f32 0.0, %v3684
      %v3686 = vpop.f32.mrb[0].mxu0
      %3687 = vmatprep.mubr.bf16.mxu0 0
      %3688 = vmatmul.mubr.bf16.gmra.mrb[0].mxu0 %v3533
      %v3689 = vpop.f32.mrb[0].mxu0
      %v3690 = vadd.f32 0.0, %v3689
      %v3691 = vpop.f32.mrb[0].mxu0
      %v3692 = vpop.f32.mrb[0].mxu0
      %v3693 = vadd.f32 0.0, %v3692
      %v3694 = vpop.f32.mrb[0].mxu0
      %3695 = vmatprep.mubr.bf16.mxu0 0
      %3696 = vmatmul.mubr.bf16.gmra.mrb[0].mxu0 %v3534
      %v3697 = vpop.f32.mrb[0].mxu0
      %v3698 = vadd.f32 0.0, %v3697
      %v3699 = vpop.f32.mrb[0].mxu0
      %v3700 = vpop.f32.mrb[0].mxu0
      %v3701 = vadd.f32 0.0, %v3700
      %v3702 = vpop.f32.mrb[0].mxu0
      %3703 = vmatprep.mubr.bf16.mxu0 0
      %3704 = vmatmul.mubr.bf16.gmra.mrb[0].mxu0 %v3535
      %v3705 = vpop.f32.mrb[0].mxu0
      %v3706 = vadd.f32 0.0, %v3705
      %v3707 = vpop.f32.mrb[0].mxu0
      %v3708 = vpop.f32.mrb[0].mxu0
      %v3709 = vadd.f32 0.0, %v3708
      %v3710 = vpop.f32.mrb[0].mxu0
      %3711 = vmatprep.mubr.bf16.mxu0 0
      %3712 = vmatmul.mubr.bf16.gmra.mrb[0].mxu0 %v3536
      %v3713 = vpop.f32.mrb[0].mxu0
      %v3714 = vadd.f32 0.0, %v3713
      %v3715 = vpop.f32.mrb[0].mxu0
      %v3716 = vpop.f32.mrb[0].mxu0
      %v3717 = vadd.f32 0.0, %v3716
      %v3718 = vpop.f32.mrb[0].mxu0
      %3719 = vmatprep.mubr.bf16.mxu0 0
      %3720 = vmatmul.mubr.bf16.gmra.mrb[0].mxu0 %v3537
      %v3721 = vpop.f32.mrb[0].mxu0
      %v3722 = vadd.f32 0.0, %v3721
      %v3723 = vpop.f32.mrb[0].mxu0
      %v3724 = vpop.f32.mrb[0].mxu0
      %v3725 = vadd.f32 0.0, %v3724
      %v3726 = vpop.f32.mrb[0].mxu0
      %3727 = vmatprep.mubr.bf16.mxu0 0
      %3728 = vmatmul.mubr.bf16.gmra.mrb[0].mxu0 %v3538
      %v3729 = vpop.f32.mrb[0].mxu0
      %v3730 = vadd.f32 0.0, %v3729
      %v3731 = vpop.f32.mrb[0].mxu0
      %v3732 = vpop.f32.mrb[0].mxu0
      %v3733 = vadd.f32 0.0, %v3732
      %v3734 = vpop.f32.mrb[0].mxu0
      %3735 = vmatprep.mubr.bf16.mxu0 0
      %3736 = vmatmul.mubr.bf16.gmra.mrb[0].mxu0 %v3539
      %v3737 = vpop.f32.mrb[0].mxu0
      %v3738 = vadd.f32 0.0, %v3737
      %v3739 = vpop.f32.mrb[0].mxu0
      %v3740 = vpop.f32.mrb[0].mxu0
      %v3741 = vadd.f32 0.0, %v3740
      %v3742 = vpop.f32.mrb[0].mxu0
      %3743 = vmatprep.mubr.bf16.mxu0 0
      %3744 = vmatmul.mubr.bf16.gmra.mrb[0].mxu0 %v3540
      %v3745 = vpop.f32.mrb[0].mxu0
      %v3746 = vadd.f32 0.0, %v3745
      %v3747 = vpop.f32.mrb[0].mxu0
      %v3748 = vpop.f32.mrb[0].mxu0
      %v3749 = vadd.f32 0.0, %v3748
      %v3750 = vpop.f32.mrb[0].mxu0
      %3751 = vmatprep.mubr.bf16.mxu0 0
      %3752 = vmatmul.mubr.bf16.gmra.mrb[0].mxu0 %v3541
      %v3753 = vpop.f32.mrb[0].mxu0
      %v3754 = vadd.f32 0.0, %v3753
      %v3755 = vpop.f32.mrb[0].mxu0
      %v3756 = vpop.f32.mrb[0].mxu0
      %v3757 = vadd.f32 0.0, %v3756
      %v3758 = vpop.f32.mrb[0].mxu0
      %3759 = vmatprep.mubr.bf16.mxu0 0
      %3760 = vmatmul.mubr.bf16.gmra.mrb[0].mxu0 %v3542
      %v3761 = vpop.f32.mrb[0].mxu0
      %v3762 = vadd.f32 0.0, %v3761
      %v3763 = vpop.f32.mrb[0].mxu0
      %v3764 = vpop.f32.mrb[0].mxu0
      %v3765 = vadd.f32 0.0, %v3764
      %v3766 = vpop.f32.mrb[0].mxu0
      %3767 = vdwg.mxu0
      %v3768 = vadd.f32 %v3014, %v3642
      %v3769 = vadd.f32 %v3015, %v3645
      %v3770 = vadd.f32 %v3016, %v3650
      %v3771 = vadd.f32 %v3017, %v3653
      %v3772 = vadd.f32 %v3018, %v3658
      %v3773 = vadd.f32 %v3019, %v3661
      %v3774 = vadd.f32 %v3020, %v3666
      %v3775 = vadd.f32 %v3021, %v3669
      %v3776 = vadd.f32 %v3022, %v3674
      %v3777 = vadd.f32 %v3023, %v3677
      %v3778 = vadd.f32 %v3024, %v3682
      %v3779 = vadd.f32 %v3025, %v3685
      %v3780 = vadd.f32 %v3026, %v3690
      %v3781 = vadd.f32 %v3027, %v3693
      %v3782 = vadd.f32 %v3028, %v3698
      %v3783 = vadd.f32 %v3029, %v3701
      %v3784 = vadd.f32 %v3030, %v3706
      %v3785 = vadd.f32 %v3031, %v3709
      %v3786 = vadd.f32 %v3032, %v3714
      %v3787 = vadd.f32 %v3033, %v3717
      %v3788 = vadd.f32 %v3034, %v3722
      %v3789 = vadd.f32 %v3035, %v3725
      %v3790 = vadd.f32 %v3036, %v3730
      %v3791 = vadd.f32 %v3037, %v3733
      %v3792 = vadd.f32 %v3038, %v3738
      %v3793 = vadd.f32 %v3039, %v3741
      %v3794 = vadd.f32 %v3040, %v3746
      %v3795 = vadd.f32 %v3041, %v3749
      %v3796 = vadd.f32 %v3042, %v3754
      %v3797 = vadd.f32 %v3043, %v3757
      %v3798 = vadd.f32 %v3044, %v3762
      %v3799 = vadd.f32 %v3045, %v3765
      %v3800 = vld [vmem:[%s1011] sm:$0xe]
      %v3801 = vld [vmem:[%s1011 + $0xc] sm:$0xe]
      %v3802 = vld [vmem:[%s1011 + $0x18] sm:$0xe]
      %v3803 = vld [vmem:[%s1011 + $0x24] sm:$0xe]
      %v3804 = vld [vmem:[%s1011 + $0x30] sm:$0xe]
      %v3805 = vld [vmem:[%s1011 + $0x3c] sm:$0xe]
      %v3806 = vld [vmem:[%s1011 + $0x48] sm:$0xe]
      %v3807 = vld [vmem:[%s1011 + $0x54] sm:$0xe]
      %v3808 = vld [vmem:[%s1011 + $0x60] sm:$0xe]
      %v3809 = vld [vmem:[%s1011 + $0x6c] sm:$0xe]
      %v3810 = vld [vmem:[%s1011 + $0x78] sm:$0xe]
      %v3811 = vld [vmem:[%s1011 + $0x84] sm:$0xe]
      %v3812 = vld [vmem:[%s1011 + $0x90] sm:$0xe]
      %v3813 = vld [vmem:[%s1011 + $0x9c] sm:$0xe]
      %v3814 = vld [vmem:[%s1011 + $0xa8] sm:$0xe]
      %v3815 = vld [vmem:[%s1011 + $0xb4] sm:$0xe]
      %v3864 = vrot.slane %v3800, 5
      %v3865 = vrot.slane %v3864, 4
      %v3866 = vrot.slane %v3047, 5
      %v3867 = vsel %vm2225, %v3865, %v3866
      %v3868 = vrot.slane %v3866, 4
      %v3869 = vrot.slane %v3048, 5
      %v3870 = vsel %vm2225, %v3868, %v3869
      %v3871 = vrot.slane %v3801, 5
      %v3872 = vrot.slane %v3871, 4
      %v3873 = vrot.slane %v3050, 5
      %v3874 = vsel %vm2225, %v3872, %v3873
      %v3875 = vrot.slane %v3873, 4
      %v3876 = vrot.slane %v3051, 5
      %v3877 = vsel %vm2225, %v3875, %v3876
      %v3878 = vrot.slane %v3802, 5
      %v3879 = vrot.slane %v3878, 4
      %v3880 = vrot.slane %v3053, 5
      %v3881 = vsel %vm2225, %v3879, %v3880
      %v3882 = vrot.slane %v3880, 4
      %v3883 = vrot.slane %v3054, 5
      %v3884 = vsel %vm2225, %v3882, %v3883
      %v3885 = vrot.slane %v3803, 5
      %v3886 = vrot.slane %v3885, 4
      %v3887 = vrot.slane %v3056, 5
      %v3888 = vsel %vm2225, %v3886, %v3887
      %v3889 = vrot.slane %v3887, 4
      %v3890 = vrot.slane %v3057, 5
      %v3891 = vsel %vm2225, %v3889, %v3890
      %v3892 = vrot.slane %v3804, 5
      %v3893 = vrot.slane %v3892, 4
      %v3894 = vrot.slane %v3059, 5
      %v3895 = vsel %vm2225, %v3893, %v3894
      %v3896 = vrot.slane %v3894, 4
      %v3897 = vrot.slane %v3060, 5
      %v3898 = vsel %vm2225, %v3896, %v3897
      %v3899 = vrot.slane %v3805, 5
      %v3900 = vrot.slane %v3899, 4
      %v3901 = vrot.slane %v3062, 5
      %v3902 = vsel %vm2225, %v3900, %v3901
      %v3903 = vrot.slane %v3901, 4
      %v3904 = vrot.slane %v3063, 5
      %v3905 = vsel %vm2225, %v3903, %v3904
      %v3906 = vrot.slane %v3806, 5
      %v3907 = vrot.slane %v3906, 4
      %v3908 = vrot.slane %v3065, 5
      %v3909 = vsel %vm2225, %v3907, %v3908
      %v3910 = vrot.slane %v3908, 4
      %v3911 = vrot.slane %v3066, 5
      %v3912 = vsel %vm2225, %v3910, %v3911
      %v3913 = vrot.slane %v3807, 5
      %v3914 = vrot.slane %v3913, 4
      %v3915 = vrot.slane %v3068, 5
      %v3916 = vsel %vm2225, %v3914, %v3915
      %v3917 = vrot.slane %v3915, 4
      %v3918 = vrot.slane %v3069, 5
      %v3919 = vsel %vm2225, %v3917, %v3918
      %v3920 = vrot.slane %v3808, 5
      %v3921 = vrot.slane %v3920, 4
      %v3922 = vrot.slane %v3071, 5
      %v3923 = vsel %vm2225, %v3921, %v3922
      %v3924 = vrot.slane %v3922, 4
      %v3925 = vrot.slane %v3072, 5
      %v3926 = vsel %vm2225, %v3924, %v3925
      %v3927 = vrot.slane %v3809, 5
      %v3928 = vrot.slane %v3927, 4
      %v3929 = vrot.slane %v3074, 5
      %v3930 = vsel %vm2225, %v3928, %v3929
      %v3931 = vrot.slane %v3929, 4
      %v3932 = vrot.slane %v3075, 5
      %v3933 = vsel %vm2225, %v3931, %v3932
      %v3934 = vrot.slane %v3810, 5
      %v3935 = vrot.slane %v3934, 4
      %v3936 = vrot.slane %v3077, 5
      %v3937 = vsel %vm2225, %v3935, %v3936
      %v3938 = vrot.slane %v3936, 4
      %v3939 = vrot.slane %v3078, 5
      %v3940 = vsel %vm2225, %v3938, %v3939
      %v3941 = vrot.slane %v3811, 5
      %v3942 = vrot.slane %v3941, 4
      %v3943 = vrot.slane %v3080, 5
      %v3944 = vsel %vm2225, %v3942, %v3943
      %v3945 = vrot.slane %v3943, 4
      %v3946 = vrot.slane %v3081, 5
      %v3947 = vsel %vm2225, %v3945, %v3946
      %v3948 = vrot.slane %v3812, 5
      %v3949 = vrot.slane %v3948, 4
      %v3950 = vrot.slane %v3083, 5
      %v3951 = vsel %vm2225, %v3949, %v3950
      %v3952 = vrot.slane %v3950, 4
      %v3953 = vrot.slane %v3084, 5
      %v3954 = vsel %vm2225, %v3952, %v3953
      %v3955 = vrot.slane %v3813, 5
      %v3956 = vrot.slane %v3955, 4
      %v3957 = vrot.slane %v3086, 5
      %v3958 = vsel %vm2225, %v3956, %v3957
      %v3959 = vrot.slane %v3957, 4
      %v3960 = vrot.slane %v3087, 5
      %v3961 = vsel %vm2225, %v3959, %v3960
      %v3962 = vrot.slane %v3814, 5
      %v3963 = vrot.slane %v3962, 4
      %v3964 = vrot.slane %v3089, 5
      %v3965 = vsel %vm2225, %v3963, %v3964
      %v3966 = vrot.slane %v3964, 4
      %v3967 = vrot.slane %v3090, 5
      %v3968 = vsel %vm2225, %v3966, %v3967
      %v3969 = vrot.slane %v3815, 5
      %v3970 = vrot.slane %v3969, 4
      %v3971 = vrot.slane %v3092, 5
      %v3972 = vsel %vm2225, %v3970, %v3971
      %v3973 = vrot.slane %v3971, 4
      %v3974 = vrot.slane %v3093, 5
      %v3975 = vsel %vm2225, %v3973, %v3974
      %s3976 = scalar_lea.vmem %s3, 320
      %v3977 = vld [vmem:[%s3976] sm:$0xf]
      %v3978 = vld [vmem:[%s3976 + $0x4] sm:$0xf]
      %v3979 = vld [vmem:[%s3976 + $0x8] sm:$0xf]
      %v3980 = vld [vmem:[%s3976 + $0xc] sm:$0xf]
      %v3981 = vld [vmem:[%s3976 + $0x10] sm:$0xf]
      %v3982 = vld [vmem:[%s3976 + $0x14] sm:$0xf]
      %v3983 = vld [vmem:[%s3976 + $0x18] sm:$0xf]
      %v3984 = vld [vmem:[%s3976 + $0x1c] sm:$0xf]
      %v3985 = vld [vmem:[%s3976 + $0x20] sm:$0xf]
      %v3986 = vld [vmem:[%s3976 + $0x24] sm:$0xf]
      %v3987 = vld [vmem:[%s3976 + $0x28] sm:$0xf]
      %v3988 = vld [vmem:[%s3976 + $0x2c] sm:$0xf]
      %v3989 = vld [vmem:[%s3976 + $0x30] sm:$0xf]
      %v3990 = vld [vmem:[%s3976 + $0x34] sm:$0xf]
      %v3991 = vld [vmem:[%s3976 + $0x38] sm:$0xf]
      %v3992 = vld [vmem:[%s3976 + $0x3c] sm:$0xf]
      %v3993 = vunpack.c.l.b16 %v3867
      %v3994 = vunpack.c.l.b16 %v3870
      %v3995 = vunpack.c.l.b16 %v3874
      %v3996 = vunpack.c.l.b16 %v3877
      %v3997 = vunpack.c.l.b16 %v3881
      %v3998 = vunpack.c.l.b16 %v3884
      %v3999 = vunpack.c.l.b16 %v3888
      %v4000 = vunpack.c.l.b16 %v3891
      %v4001 = vunpack.c.l.b16 %v3895
      %v4002 = vunpack.c.l.b16 %v3898
      %v4003 = vunpack.c.l.b16 %v3902
      %v4004 = vunpack.c.l.b16 %v3905
      %v4005 = vunpack.c.l.b16 %v3909
      %v4006 = vunpack.c.l.b16 %v3912
      %v4007 = vunpack.c.l.b16 %v3916
      %v4008 = vunpack.c.l.b16 %v3919
      %v4009 = vunpack.c.l.b16 %v3923
      %v4010 = vunpack.c.l.b16 %v3926
      %v4011 = vunpack.c.l.b16 %v3930
      %v4012 = vunpack.c.l.b16 %v3933
      %v4013 = vunpack.c.l.b16 %v3937
      %v4014 = vunpack.c.l.b16 %v3940
      %v4015 = vunpack.c.l.b16 %v3944
      %v4016 = vunpack.c.l.b16 %v3947
      %v4017 = vunpack.c.l.b16 %v3951
      %v4018 = vunpack.c.l.b16 %v3954
      %v4019 = vunpack.c.l.b16 %v3958
      %v4020 = vunpack.c.l.b16 %v3961
      %v4021 = vunpack.c.l.b16 %v3965
      %v4022 = vunpack.c.l.b16 %v3968
      %v4023 = vunpack.c.l.b16 %v3972
      %v4024 = vunpack.c.l.b16 %v3975
      %v4025 = vpack.c.b16 %v3994, %v3993
      %v4026 = vpack.c.b16 %v3996, %v3995
      %v4027 = vpack.c.b16 %v3998, %v3997
      %v4028 = vpack.c.b16 %v4000, %v3999
      %v4029 = vpack.c.b16 %v4002, %v4001
      %v4030 = vpack.c.b16 %v4004, %v4003
      %v4031 = vpack.c.b16 %v4006, %v4005
      %v4032 = vpack.c.b16 %v4008, %v4007
      %v4033 = vpack.c.b16 %v4010, %v4009
      %v4034 = vpack.c.b16 %v4012, %v4011
      %v4035 = vpack.c.b16 %v4014, %v4013
      %v4036 = vpack.c.b16 %v4016, %v4015
      %v4037 = vpack.c.b16 %v4018, %v4017
      %v4038 = vpack.c.b16 %v4020, %v4019
      %v4039 = vpack.c.b16 %v4022, %v4021
      %v4040 = vpack.c.b16 %v4024, %v4023
      %v4073 = vunpack.c.l.b16 %v3977
      %v4074 = vunpack.c.l.b16 %v3978
      %v4075 = vunpack.c.l.b16 %v3979
      %v4076 = vunpack.c.l.b16 %v3980
      %v4077 = vunpack.c.l.b16 %v3981
      %v4078 = vunpack.c.l.b16 %v3982
      %v4079 = vunpack.c.l.b16 %v3983
      %v4080 = vunpack.c.l.b16 %v3984
      %v4081 = vunpack.c.l.b16 %v3985
      %v4082 = vunpack.c.l.b16 %v3986
      %v4083 = vunpack.c.l.b16 %v3987
      %v4084 = vunpack.c.l.b16 %v3988
      %v4085 = vunpack.c.l.b16 %v3989
      %v4086 = vunpack.c.l.b16 %v3990
      %v4087 = vunpack.c.l.b16 %v3991
      %v4088 = vunpack.c.l.b16 %v3992
      %v4089 = vpack.c.b16 %v4074, %v4073
      %v4090 = vpack.c.b16 %v4076, %v4075
      %v4091 = vpack.c.b16 %v4078, %v4077
      %v4092 = vpack.c.b16 %v4080, %v4079
      %v4093 = vpack.c.b16 %v4082, %v4081
      %v4094 = vpack.c.b16 %v4084, %v4083
      %v4095 = vpack.c.b16 %v4086, %v4085
      %v4096 = vpack.c.b16 %v4088, %v4087
      %4105 = vmatprep.subr.bf16.mxu0 0
      %4106 = vmatpush1.bf16.msra.mxu0 %v4089
      %4107 = vmatprep.subr.bf16.mxu0 0
      %4108 = vmatpush1.bf16.msra.mxu0 %v4090
      %4109 = vmatprep.subr.bf16.mxu0 0
      %4110 = vmatpush1.bf16.msra.mxu0 %v4091
      %4111 = vmatprep.subr.bf16.mxu0 0
      %4112 = vmatpush1.bf16.msra.mxu0 %v4092
      %4113 = vmatprep.subr.bf16.mxu0 0
      %4114 = vmatpush1.bf16.msra.mxu0 %v4093
      %4115 = vmatprep.subr.bf16.mxu0 0
      %4116 = vmatpush1.bf16.msra.mxu0 %v4094
      %4117 = vmatprep.subr.bf16.mxu0 0
      %4118 = vmatpush1.bf16.msra.mxu0 %v4095
      %4119 = vmatprep.subr.bf16.mxu0 0
      %4120 = vmatpush1.bf16.msra.mxu0 %v4096
      %4121 = vmatprep.subr.bf16.mxu0 0
      %4122 = vmatpush1.bf16.msra.mxu0 0
      %4123 = vmatprep.subr.bf16.mxu0 0
      %4124 = vmatpush1.bf16.msra.mxu0 0
      %4125 = vmatprep.subr.bf16.mxu0 0
      %4126 = vmatpush1.bf16.msra.mxu0 0
      %4127 = vmatprep.subr.bf16.mxu0 0
      %4128 = vmatpush1.bf16.msra.mxu0 0
      %4129 = vmatprep.subr.bf16.mxu0 0
      %4130 = vmatpush1.bf16.msra.mxu0 0
      %4131 = vmatprep.subr.bf16.mxu0 0
      %4132 = vmatpush1.bf16.msra.mxu0 0
      %4133 = vmatprep.subr.bf16.mxu0 0
      %4134 = vmatpush1.bf16.msra.mxu0 0
      %4135 = vmatprep.subr.bf16.mxu0 0
      %4136 = vmatpush1.bf16.msra.mxu0 0
      %4137 = vmatprep.mubr.bf16.mxu0 0
      %4138 = vmatmul.mubr.bf16.gmra.mrb[0].mxu0 %v4025
      %v4139 = vpop.f32.mrb[0].mxu0
      %v4140 = vadd.f32 0.0, %v4139
      %v4141 = vpop.f32.mrb[0].mxu0
      %v4142 = vpop.f32.mrb[0].mxu0
      %v4143 = vadd.f32 0.0, %v4142
      %v4144 = vpop.f32.mrb[0].mxu0
      %4145 = vmatprep.mubr.bf16.mxu0 0
      %4146 = vmatmul.mubr.bf16.gmra.mrb[0].mxu0 %v4026
      %v4147 = vpop.f32.mrb[0].mxu0
      %v4148 = vadd.f32 0.0, %v4147
      %v4149 = vpop.f32.mrb[0].mxu0
      %v4150 = vpop.f32.mrb[0].mxu0
      %v4151 = vadd.f32 0.0, %v4150
      %v4152 = vpop.f32.mrb[0].mxu0
      %4153 = vmatprep.mubr.bf16.mxu0 0
      %4154 = vmatmul.mubr.bf16.gmra.mrb[0].mxu0 %v4027
      %v4155 = vpop.f32.mrb[0].mxu0
      %v4156 = vadd.f32 0.0, %v4155
      %v4157 = vpop.f32.mrb[0].mxu0
      %v4158 = vpop.f32.mrb[0].mxu0
      %v4159 = vadd.f32 0.0, %v4158
      %v4160 = vpop.f32.mrb[0].mxu0
      %4161 = vmatprep.mubr.bf16.mxu0 0
      %4162 = vmatmul.mubr.bf16.gmra.mrb[0].mxu0 %v4028
      %v4163 = vpop.f32.mrb[0].mxu0
      %v4164 = vadd.f32 0.0, %v4163
      %v4165 = vpop.f32.mrb[0].mxu0
      %v4166 = vpop.f32.mrb[0].mxu0
      %v4167 = vadd.f32 0.0, %v4166
      %v4168 = vpop.f32.mrb[0].mxu0
      %4169 = vmatprep.mubr.bf16.mxu0 0
      %4170 = vmatmul.mubr.bf16.gmra.mrb[0].mxu0 %v4029
      %v4171 = vpop.f32.mrb[0].mxu0
      %v4172 = vadd.f32 0.0, %v4171
      %v4173 = vpop.f32.mrb[0].mxu0
      %v4174 = vpop.f32.mrb[0].mxu0
      %v4175 = vadd.f32 0.0, %v4174
      %v4176 = vpop.f32.mrb[0].mxu0
      %4177 = vmatprep.mubr.bf16.mxu0 0
      %4178 = vmatmul.mubr.bf16.gmra.mrb[0].mxu0 %v4030
      %v4179 = vpop.f32.mrb[0].mxu0
      %v4180 = vadd.f32 0.0, %v4179
      %v4181 = vpop.f32.mrb[0].mxu0
      %v4182 = vpop.f32.mrb[0].mxu0
      %v4183 = vadd.f32 0.0, %v4182
      %v4184 = vpop.f32.mrb[0].mxu0
      %4185 = vmatprep.mubr.bf16.mxu0 0
      %4186 = vmatmul.mubr.bf16.gmra.mrb[0].mxu0 %v4031
      %v4187 = vpop.f32.mrb[0].mxu0
      %v4188 = vadd.f32 0.0, %v4187
      %v4189 = vpop.f32.mrb[0].mxu0
      %v4190 = vpop.f32.mrb[0].mxu0
      %v4191 = vadd.f32 0.0, %v4190
      %v4192 = vpop.f32.mrb[0].mxu0
      %4193 = vmatprep.mubr.bf16.mxu0 0
      %4194 = vmatmul.mubr.bf16.gmra.mrb[0].mxu0 %v4032
      %v4195 = vpop.f32.mrb[0].mxu0
      %v4196 = vadd.f32 0.0, %v4195
      %v4197 = vpop.f32.mrb[0].mxu0
      %v4198 = vpop.f32.mrb[0].mxu0
      %v4199 = vadd.f32 0.0, %v4198
      %v4200 = vpop.f32.mrb[0].mxu0
      %4201 = vmatprep.mubr.bf16.mxu0 0
      %4202 = vmatmul.mubr.bf16.gmra.mrb[0].mxu0 %v4033
      %v4203 = vpop.f32.mrb[0].mxu0
      %v4204 = vadd.f32 0.0, %v4203
      %v4205 = vpop.f32.mrb[0].mxu0
      %v4206 = vpop.f32.mrb[0].mxu0
      %v4207 = vadd.f32 0.0, %v4206
      %v4208 = vpop.f32.mrb[0].mxu0
      %4209 = vmatprep.mubr.bf16.mxu0 0
      %4210 = vmatmul.mubr.bf16.gmra.mrb[0].mxu0 %v4034
      %v4211 = vpop.f32.mrb[0].mxu0
      %v4212 = vadd.f32 0.0, %v4211
      %v4213 = vpop.f32.mrb[0].mxu0
      %v4214 = vpop.f32.mrb[0].mxu0
      %v4215 = vadd.f32 0.0, %v4214
      %v4216 = vpop.f32.mrb[0].mxu0
      %4217 = vmatprep.mubr.bf16.mxu0 0
      %4218 = vmatmul.mubr.bf16.gmra.mrb[0].mxu0 %v4035
      %v4219 = vpop.f32.mrb[0].mxu0
      %v4220 = vadd.f32 0.0, %v4219
      %v4221 = vpop.f32.mrb[0].mxu0
      %v4222 = vpop.f32.mrb[0].mxu0
      %v4223 = vadd.f32 0.0, %v4222
      %v4224 = vpop.f32.mrb[0].mxu0
      %4225 = vmatprep.mubr.bf16.mxu0 0
      %4226 = vmatmul.mubr.bf16.gmra.mrb[0].mxu0 %v4036
      %v4227 = vpop.f32.mrb[0].mxu0
      %v4228 = vadd.f32 0.0, %v4227
      %v4229 = vpop.f32.mrb[0].mxu0
      %v4230 = vpop.f32.mrb[0].mxu0
      %v4231 = vadd.f32 0.0, %v4230
      %v4232 = vpop.f32.mrb[0].mxu0
      %4233 = vmatprep.mubr.bf16.mxu0 0
      %4234 = vmatmul.mubr.bf16.gmra.mrb[0].mxu0 %v4037
      %v4235 = vpop.f32.mrb[0].mxu0
      %v4236 = vadd.f32 0.0, %v4235
      %v4237 = vpop.f32.mrb[0].mxu0
      %v4238 = vpop.f32.mrb[0].mxu0
      %v4239 = vadd.f32 0.0, %v4238
      %v4240 = vpop.f32.mrb[0].mxu0
      %4241 = vmatprep.mubr.bf16.mxu0 0
      %4242 = vmatmul.mubr.bf16.gmra.mrb[0].mxu0 %v4038
      %v4243 = vpop.f32.mrb[0].mxu0
      %v4244 = vadd.f32 0.0, %v4243
      %v4245 = vpop.f32.mrb[0].mxu0
      %v4246 = vpop.f32.mrb[0].mxu0
      %v4247 = vadd.f32 0.0, %v4246
      %v4248 = vpop.f32.mrb[0].mxu0
      %4249 = vmatprep.mubr.bf16.mxu0 0
      %4250 = vmatmul.mubr.bf16.gmra.mrb[0].mxu0 %v4039
      %v4251 = vpop.f32.mrb[0].mxu0
      %v4252 = vadd.f32 0.0, %v4251
      %v4253 = vpop.f32.mrb[0].mxu0
      %v4254 = vpop.f32.mrb[0].mxu0
      %v4255 = vadd.f32 0.0, %v4254
      %v4256 = vpop.f32.mrb[0].mxu0
      %4257 = vmatprep.mubr.bf16.mxu0 0
      %4258 = vmatmul.mubr.bf16.gmra.mrb[0].mxu0 %v4040
      %v4259 = vpop.f32.mrb[0].mxu0
      %v4260 = vadd.f32 0.0, %v4259
      %v4261 = vpop.f32.mrb[0].mxu0
      %v4262 = vpop.f32.mrb[0].mxu0
      %v4263 = vadd.f32 0.0, %v4262
      %v4264 = vpop.f32.mrb[0].mxu0
      %4265 = vdwg.mxu0
      %v4266 = vadd.f32 %v3768, %v4140
      %v4267 = vadd.f32 %v3769, %v4143
      %v4268 = vadd.f32 %v3770, %v4148
      %v4269 = vadd.f32 %v3771, %v4151
      %v4270 = vadd.f32 %v3772, %v4156
      %v4271 = vadd.f32 %v3773, %v4159
      %v4272 = vadd.f32 %v3774, %v4164
      %v4273 = vadd.f32 %v3775, %v4167
      %v4274 = vadd.f32 %v3776, %v4172
      %v4275 = vadd.f32 %v3777, %v4175
      %v4276 = vadd.f32 %v3778, %v4180
      %v4277 = vadd.f32 %v3779, %v4183
      %v4278 = vadd.f32 %v3780, %v4188
      %v4279 = vadd.f32 %v3781, %v4191
      %v4280 = vadd.f32 %v3782, %v4196
      %v4281 = vadd.f32 %v3783, %v4199
      %v4282 = vadd.f32 %v3784, %v4204
      %v4283 = vadd.f32 %v3785, %v4207
      %v4284 = vadd.f32 %v3786, %v4212
      %v4285 = vadd.f32 %v3787, %v4215
      %v4286 = vadd.f32 %v3788, %v4220
      %v4287 = vadd.f32 %v3789, %v4223
      %v4288 = vadd.f32 %v3790, %v4228
      %v4289 = vadd.f32 %v3791, %v4231
      %v4290 = vadd.f32 %v3792, %v4236
      %v4291 = vadd.f32 %v3793, %v4239
      %v4292 = vadd.f32 %v3794, %v4244
      %v4293 = vadd.f32 %v3795, %v4247
      %v4294 = vadd.f32 %v3796, %v4252
      %v4295 = vadd.f32 %v3797, %v4255
      %v4296 = vadd.f32 %v3798, %v4260
      %v4297 = vadd.f32 %v3799, %v4263
      %s4298 = scalar_lea.vmem [#allocation2], 24
      %v4299 = vld [vmem:[%s4298] sm:$0xf]
      %v4300 = vld [vmem:[%s4298 + $0x4] sm:$0xf]
      %v4301 = vld [vmem:[%s4298 + $0xc] sm:$0xf]
      %v4302 = vld [vmem:[%s4298 + $0x10] sm:$0xf]
      %v4303 = vld [vmem:[%s4298 + $0x18] sm:$0xf]
      %v4304 = vld [vmem:[%s4298 + $0x1c] sm:$0xf]
      %v4305 = vld [vmem:[%s4298 + $0x24] sm:$0xf]
      %v4306 = vld [vmem:[%s4298 + $0x28] sm:$0xf]
      %v4307 = vld [vmem:[%s4298 + $0x30] sm:$0xf]
      %v4308 = vld [vmem:[%s4298 + $0x34] sm:$0xf]
      %v4309 = vld [vmem:[%s4298 + $0x3c] sm:$0xf]
      %v4310 = vld [vmem:[%s4298 + $0x40] sm:$0xf]
      %v4311 = vld [vmem:[%s4298 + $0x48] sm:$0xf]
      %v4312 = vld [vmem:[%s4298 + $0x4c] sm:$0xf]
      %v4313 = vld [vmem:[%s4298 + $0x54] sm:$0xf]
      %v4314 = vld [vmem:[%s4298 + $0x58] sm:$0xf]
      %v4315 = vld [vmem:[%s4298 + $0x60] sm:$0xf]
      %v4316 = vld [vmem:[%s4298 + $0x64] sm:$0xf]
      %v4317 = vld [vmem:[%s4298 + $0x6c] sm:$0xf]
      %v4318 = vld [vmem:[%s4298 + $0x70] sm:$0xf]
      %v4319 = vld [vmem:[%s4298 + $0x78] sm:$0xf]
      %v4320 = vld [vmem:[%s4298 + $0x7c] sm:$0xf]
      %v4321 = vld [vmem:[%s4298 + $0x84] sm:$0xf]
      %v4322 = vld [vmem:[%s4298 + $0x88] sm:$0xf]
      %v4323 = vld [vmem:[%s4298 + $0x90] sm:$0xf]
      %v4324 = vld [vmem:[%s4298 + $0x94] sm:$0xf]
      %v4325 = vld [vmem:[%s4298 + $0x9c] sm:$0xf]
      %v4326 = vld [vmem:[%s4298 + $0xa0] sm:$0xf]
      %v4327 = vld [vmem:[%s4298 + $0xa8] sm:$0xf]
      %v4328 = vld [vmem:[%s4298 + $0xac] sm:$0xf]
      %v4329 = vld [vmem:[%s4298 + $0xb4] sm:$0xf]
      %v4330 = vld [vmem:[%s4298 + $0xb8] sm:$0xf]
      %s4331 = scalar_lea.vmem %s3, 384
      %v4332 = vld [vmem:[%s4331] sm:$0xf]
      %v4333 = vld [vmem:[%s4331 + $0x4] sm:$0xf]
      %v4334 = vld [vmem:[%s4331 + $0x8] sm:$0xf]
      %v4335 = vld [vmem:[%s4331 + $0xc] sm:$0xf]
      %v4336 = vld [vmem:[%s4331 + $0x10] sm:$0xf]
      %v4337 = vld [vmem:[%s4331 + $0x14] sm:$0xf]
      %v4338 = vld [vmem:[%s4331 + $0x18] sm:$0xf]
      %v4339 = vld [vmem:[%s4331 + $0x1c] sm:$0xf]
      %v4340 = vld [vmem:[%s4331 + $0x20] sm:$0xf]
      %v4341 = vld [vmem:[%s4331 + $0x24] sm:$0xf]
      %v4342 = vld [vmem:[%s4331 + $0x28] sm:$0xf]
      %v4343 = vld [vmem:[%s4331 + $0x2c] sm:$0xf]
      %v4344 = vld [vmem:[%s4331 + $0x30] sm:$0xf]
      %v4345 = vld [vmem:[%s4331 + $0x34] sm:$0xf]
      %v4346 = vld [vmem:[%s4331 + $0x38] sm:$0xf]
      %v4347 = vld [vmem:[%s4331 + $0x3c] sm:$0xf]
      %v4380 = vunpack.c.l.b16 %v4299
      %v4381 = vunpack.c.l.b16 %v4300
      %v4382 = vunpack.c.l.b16 %v4301
      %v4383 = vunpack.c.l.b16 %v4302
      %v4384 = vunpack.c.l.b16 %v4303
      %v4385 = vunpack.c.l.b16 %v4304
      %v4386 = vunpack.c.l.b16 %v4305
      %v4387 = vunpack.c.l.b16 %v4306
      %v4388 = vunpack.c.l.b16 %v4307
      %v4389 = vunpack.c.l.b16 %v4308
      %v4390 = vunpack.c.l.b16 %v4309
      %v4391 = vunpack.c.l.b16 %v4310
      %v4392 = vunpack.c.l.b16 %v4311
      %v4393 = vunpack.c.l.b16 %v4312
      %v4394 = vunpack.c.l.b16 %v4313
      %v4395 = vunpack.c.l.b16 %v4314
      %v4396 = vunpack.c.l.b16 %v4315
      %v4397 = vunpack.c.l.b16 %v4316
      %v4398 = vunpack.c.l.b16 %v4317
      %v4399 = vunpack.c.l.b16 %v4318
      %v4400 = vunpack.c.l.b16 %v4319
      %v4401 = vunpack.c.l.b16 %v4320
      %v4402 = vunpack.c.l.b16 %v4321
      %v4403 = vunpack.c.l.b16 %v4322
      %v4404 = vunpack.c.l.b16 %v4323
      %v4405 = vunpack.c.l.b16 %v4324
      %v4406 = vunpack.c.l.b16 %v4325
      %v4407 = vunpack.c.l.b16 %v4326
      %v4408 = vunpack.c.l.b16 %v4327
      %v4409 = vunpack.c.l.b16 %v4328
      %v4410 = vunpack.c.l.b16 %v4329
      %v4411 = vunpack.c.l.b16 %v4330
      %v4412 = vpack.c.b16 %v4381, %v4380
      %v4413 = vpack.c.b16 %v4383, %v4382
      %v4414 = vpack.c.b16 %v4385, %v4384
      %v4415 = vpack.c.b16 %v4387, %v4386
      %v4416 = vpack.c.b16 %v4389, %v4388
      %v4417 = vpack.c.b16 %v4391, %v4390
      %v4418 = vpack.c.b16 %v4393, %v4392
      %v4419 = vpack.c.b16 %v4395, %v4394
      %v4420 = vpack.c.b16 %v4397, %v4396
      %v4421 = vpack.c.b16 %v4399, %v4398
      %v4422 = vpack.c.b16 %v4401, %v4400
      %v4423 = vpack.c.b16 %v4403, %v4402
      %v4424 = vpack.c.b16 %v4405, %v4404
      %v4425 = vpack.c.b16 %v4407, %v4406
      %v4426 = vpack.c.b16 %v4409, %v4408
      %v4427 = vpack.c.b16 %v4411, %v4410
      %v4460 = vunpack.c.l.b16 %v4332
      %v4461 = vunpack.c.l.b16 %v4333
      %v4462 = vunpack.c.l.b16 %v4334
      %v4463 = vunpack.c.l.b16 %v4335
      %v4464 = vunpack.c.l.b16 %v4336
      %v4465 = vunpack.c.l.b16 %v4337
      %v4466 = vunpack.c.l.b16 %v4338
      %v4467 = vunpack.c.l.b16 %v4339
      %v4468 = vunpack.c.l.b16 %v4340
      %v4469 = vunpack.c.l.b16 %v4341
      %v4470 = vunpack.c.l.b16 %v4342
      %v4471 = vunpack.c.l.b16 %v4343
      %v4472 = vunpack.c.l.b16 %v4344
      %v4473 = vunpack.c.l.b16 %v4345
      %v4474 = vunpack.c.l.b16 %v4346
      %v4475 = vunpack.c.l.b16 %v4347
      %v4476 = vpack.c.b16 %v4461, %v4460
      %v4477 = vpack.c.b16 %v4463, %v4462
      %v4478 = vpack.c.b16 %v4465, %v4464
      %v4479 = vpack.c.b16 %v4467, %v4466
      %v4480 = vpack.c.b16 %v4469, %v4468
      %v4481 = vpack.c.b16 %v4471, %v4470
      %v4482 = vpack.c.b16 %v4473, %v4472
      %v4483 = vpack.c.b16 %v4475, %v4474
      %4492 = vmatprep.subr.bf16.mxu0 0
      %4493 = vmatpush1.bf16.msra.mxu0 %v4476
      %4494 = vmatprep.subr.bf16.mxu0 0
      %4495 = vmatpush1.bf16.msra.mxu0 %v4477
      %4496 = vmatprep.subr.bf16.mxu0 0
      %4497 = vmatpush1.bf16.msra.mxu0 %v4478
      %4498 = vmatprep.subr.bf16.mxu0 0
      %4499 = vmatpush1.bf16.msra.mxu0 %v4479
      %4500 = vmatprep.subr.bf16.mxu0 0
      %4501 = vmatpush1.bf16.msra.mxu0 %v4480
      %4502 = vmatprep.subr.bf16.mxu0 0
      %4503 = vmatpush1.bf16.msra.mxu0 %v4481
      %4504 = vmatprep.subr.bf16.mxu0 0
      %4505 = vmatpush1.bf16.msra.mxu0 %v4482
      %4506 = vmatprep.subr.bf16.mxu0 0
      %4507 = vmatpush1.bf16.msra.mxu0 %v4483
      %4508 = vmatprep.subr.bf16.mxu0 0
      %4509 = vmatpush1.bf16.msra.mxu0 0
      %4510 = vmatprep.subr.bf16.mxu0 0
      %4511 = vmatpush1.bf16.msra.mxu0 0
      %4512 = vmatprep.subr.bf16.mxu0 0
      %4513 = vmatpush1.bf16.msra.mxu0 0
      %4514 = vmatprep.subr.bf16.mxu0 0
      %4515 = vmatpush1.bf16.msra.mxu0 0
      %4516 = vmatprep.subr.bf16.mxu0 0
      %4517 = vmatpush1.bf16.msra.mxu0 0
      %4518 = vmatprep.subr.bf16.mxu0 0
      %4519 = vmatpush1.bf16.msra.mxu0 0
      %4520 = vmatprep.subr.bf16.mxu0 0
      %4521 = vmatpush1.bf16.msra.mxu0 0
      %4522 = vmatprep.subr.bf16.mxu0 0
      %4523 = vmatpush1.bf16.msra.mxu0 0
      %4524 = vmatprep.mubr.bf16.mxu0 0
      %4525 = vmatmul.mubr.bf16.gmra.mrb[0].mxu0 %v4412
      %v4526 = vpop.f32.mrb[0].mxu0
      %v4527 = vadd.f32 0.0, %v4526
      %v4528 = vpop.f32.mrb[0].mxu0
      %v4529 = vpop.f32.mrb[0].mxu0
      %v4530 = vadd.f32 0.0, %v4529
      %v4531 = vpop.f32.mrb[0].mxu0
      %4532 = vmatprep.mubr.bf16.mxu0 0
      %4533 = vmatmul.mubr.bf16.gmra.mrb[0].mxu0 %v4413
      %v4534 = vpop.f32.mrb[0].mxu0
      %v4535 = vadd.f32 0.0, %v4534
      %v4536 = vpop.f32.mrb[0].mxu0
      %v4537 = vpop.f32.mrb[0].mxu0
      %v4538 = vadd.f32 0.0, %v4537
      %v4539 = vpop.f32.mrb[0].mxu0
      %4540 = vmatprep.mubr.bf16.mxu0 0
      %4541 = vmatmul.mubr.bf16.gmra.mrb[0].mxu0 %v4414
      %v4542 = vpop.f32.mrb[0].mxu0
      %v4543 = vadd.f32 0.0, %v4542
      %v4544 = vpop.f32.mrb[0].mxu0
      %v4545 = vpop.f32.mrb[0].mxu0
      %v4546 = vadd.f32 0.0, %v4545
      %v4547 = vpop.f32.mrb[0].mxu0
      %4548 = vmatprep.mubr.bf16.mxu0 0
      %4549 = vmatmul.mubr.bf16.gmra.mrb[0].mxu0 %v4415
      %v4550 = vpop.f32.mrb[0].mxu0
      %v4551 = vadd.f32 0.0, %v4550
      %v4552 = vpop.f32.mrb[0].mxu0
      %v4553 = vpop.f32.mrb[0].mxu0
      %v4554 = vadd.f32 0.0, %v4553
      %v4555 = vpop.f32.mrb[0].mxu0
      %4556 = vmatprep.mubr.bf16.mxu0 0
      %4557 = vmatmul.mubr.bf16.gmra.mrb[0].mxu0 %v4416
      %v4558 = vpop.f32.mrb[0].mxu0
      %v4559 = vadd.f32 0.0, %v4558
      %v4560 = vpop.f32.mrb[0].mxu0
      %v4561 = vpop.f32.mrb[0].mxu0
      %v4562 = vadd.f32 0.0, %v4561
      %v4563 = vpop.f32.mrb[0].mxu0
      %4564 = vmatprep.mubr.bf16.mxu0 0
      %4565 = vmatmul.mubr.bf16.gmra.mrb[0].mxu0 %v4417
      %v4566 = vpop.f32.mrb[0].mxu0
      %v4567 = vadd.f32 0.0, %v4566
      %v4568 = vpop.f32.mrb[0].mxu0
      %v4569 = vpop.f32.mrb[0].mxu0
      %v4570 = vadd.f32 0.0, %v4569
      %v4571 = vpop.f32.mrb[0].mxu0
      %4572 = vmatprep.mubr.bf16.mxu0 0
      %4573 = vmatmul.mubr.bf16.gmra.mrb[0].mxu0 %v4418
      %v4574 = vpop.f32.mrb[0].mxu0
      %v4575 = vadd.f32 0.0, %v4574
      %v4576 = vpop.f32.mrb[0].mxu0
      %v4577 = vpop.f32.mrb[0].mxu0
      %v4578 = vadd.f32 0.0, %v4577
      %v4579 = vpop.f32.mrb[0].mxu0
      %4580 = vmatprep.mubr.bf16.mxu0 0
      %4581 = vmatmul.mubr.bf16.gmra.mrb[0].mxu0 %v4419
      %v4582 = vpop.f32.mrb[0].mxu0
      %v4583 = vadd.f32 0.0, %v4582
      %v4584 = vpop.f32.mrb[0].mxu0
      %v4585 = vpop.f32.mrb[0].mxu0
      %v4586 = vadd.f32 0.0, %v4585
      %v4587 = vpop.f32.mrb[0].mxu0
      %4588 = vmatprep.mubr.bf16.mxu0 0
      %4589 = vmatmul.mubr.bf16.gmra.mrb[0].mxu0 %v4420
      %v4590 = vpop.f32.mrb[0].mxu0
      %v4591 = vadd.f32 0.0, %v4590
      %v4592 = vpop.f32.mrb[0].mxu0
      %v4593 = vpop.f32.mrb[0].mxu0
      %v4594 = vadd.f32 0.0, %v4593
      %v4595 = vpop.f32.mrb[0].mxu0
      %4596 = vmatprep.mubr.bf16.mxu0 0
      %4597 = vmatmul.mubr.bf16.gmra.mrb[0].mxu0 %v4421
      %v4598 = vpop.f32.mrb[0].mxu0
      %v4599 = vadd.f32 0.0, %v4598
      %v4600 = vpop.f32.mrb[0].mxu0
      %v4601 = vpop.f32.mrb[0].mxu0
      %v4602 = vadd.f32 0.0, %v4601
      %v4603 = vpop.f32.mrb[0].mxu0
      %4604 = vmatprep.mubr.bf16.mxu0 0
      %4605 = vmatmul.mubr.bf16.gmra.mrb[0].mxu0 %v4422
      %v4606 = vpop.f32.mrb[0].mxu0
      %v4607 = vadd.f32 0.0, %v4606
      %v4608 = vpop.f32.mrb[0].mxu0
      %v4609 = vpop.f32.mrb[0].mxu0
      %v4610 = vadd.f32 0.0, %v4609
      %v4611 = vpop.f32.mrb[0].mxu0
      %4612 = vmatprep.mubr.bf16.mxu0 0
      %4613 = vmatmul.mubr.bf16.gmra.mrb[0].mxu0 %v4423
      %v4614 = vpop.f32.mrb[0].mxu0
      %v4615 = vadd.f32 0.0, %v4614
      %v4616 = vpop.f32.mrb[0].mxu0
      %v4617 = vpop.f32.mrb[0].mxu0
      %v4618 = vadd.f32 0.0, %v4617
      %v4619 = vpop.f32.mrb[0].mxu0
      %4620 = vmatprep.mubr.bf16.mxu0 0
      %4621 = vmatmul.mubr.bf16.gmra.mrb[0].mxu0 %v4424
      %v4622 = vpop.f32.mrb[0].mxu0
      %v4623 = vadd.f32 0.0, %v4622
      %v4624 = vpop.f32.mrb[0].mxu0
      %v4625 = vpop.f32.mrb[0].mxu0
      %v4626 = vadd.f32 0.0, %v4625
      %v4627 = vpop.f32.mrb[0].mxu0
      %4628 = vmatprep.mubr.bf16.mxu0 0
      %4629 = vmatmul.mubr.bf16.gmra.mrb[0].mxu0 %v4425
      %v4630 = vpop.f32.mrb[0].mxu0
      %v4631 = vadd.f32 0.0, %v4630
      %v4632 = vpop.f32.mrb[0].mxu0
      %v4633 = vpop.f32.mrb[0].mxu0
      %v4634 = vadd.f32 0.0, %v4633
      %v4635 = vpop.f32.mrb[0].mxu0
      %4636 = vmatprep.mubr.bf16.mxu0 0
      %4637 = vmatmul.mubr.bf16.gmra.mrb[0].mxu0 %v4426
      %v4638 = vpop.f32.mrb[0].mxu0
      %v4639 = vadd.f32 0.0, %v4638
      %v4640 = vpop.f32.mrb[0].mxu0
      %v4641 = vpop.f32.mrb[0].mxu0
      %v4642 = vadd.f32 0.0, %v4641
      %v4643 = vpop.f32.mrb[0].mxu0
      %4644 = vmatprep.mubr.bf16.mxu0 0
      %4645 = vmatmul.mubr.bf16.gmra.mrb[0].mxu0 %v4427
      %v4646 = vpop.f32.mrb[0].mxu0
      %v4647 = vadd.f32 0.0, %v4646
      %v4648 = vpop.f32.mrb[0].mxu0
      %v4649 = vpop.f32.mrb[0].mxu0
      %v4650 = vadd.f32 0.0, %v4649
      %v4651 = vpop.f32.mrb[0].mxu0
      %4652 = vdwg.mxu0
      %v4653 = vadd.f32 %v4266, %v4527
      %v4654 = vadd.f32 %v4267, %v4530
      %v4655 = vadd.f32 %v4268, %v4535
      %v4656 = vadd.f32 %v4269, %v4538
      %v4657 = vadd.f32 %v4270, %v4543
      %v4658 = vadd.f32 %v4271, %v4546
      %v4659 = vadd.f32 %v4272, %v4551
      %v4660 = vadd.f32 %v4273, %v4554
      %v4661 = vadd.f32 %v4274, %v4559
      %v4662 = vadd.f32 %v4275, %v4562
      %v4663 = vadd.f32 %v4276, %v4567
      %v4664 = vadd.f32 %v4277, %v4570
      %v4665 = vadd.f32 %v4278, %v4575
      %v4666 = vadd.f32 %v4279, %v4578
      %v4667 = vadd.f32 %v4280, %v4583
      %v4668 = vadd.f32 %v4281, %v4586
      %v4669 = vadd.f32 %v4282, %v4591
      %v4670 = vadd.f32 %v4283, %v4594
      %v4671 = vadd.f32 %v4284, %v4599
      %v4672 = vadd.f32 %v4285, %v4602
      %v4673 = vadd.f32 %v4286, %v4607
      %v4674 = vadd.f32 %v4287, %v4610
      %v4675 = vadd.f32 %v4288, %v4615
      %v4676 = vadd.f32 %v4289, %v4618
      %v4677 = vadd.f32 %v4290, %v4623
      %v4678 = vadd.f32 %v4291, %v4626
      %v4679 = vadd.f32 %v4292, %v4631
      %v4680 = vadd.f32 %v4293, %v4634
      %v4681 = vadd.f32 %v4294, %v4639
      %v4682 = vadd.f32 %v4295, %v4642
      %v4683 = vadd.f32 %v4296, %v4647
      %v4684 = vadd.f32 %v4297, %v4650
      %v4685 = vld [vmem:[%s4298] sm:$0xf]
      %v4686 = vld [vmem:[%s4298 + $0x4] sm:$0xf]
      %v4687 = vld [vmem:[%s4298 + $0x8] sm:$0x1]
      %v4688 = vld [vmem:[%s4298 + $0xc] sm:$0xf]
      %v4689 = vld [vmem:[%s4298 + $0x10] sm:$0xf]
      %v4690 = vld [vmem:[%s4298 + $0x14] sm:$0x1]
      %v4691 = vld [vmem:[%s4298 + $0x18] sm:$0xf]
      %v4692 = vld [vmem:[%s4298 + $0x1c] sm:$0xf]
      %v4693 = vld [vmem:[%s4298 + $0x20] sm:$0x1]
      %v4694 = vld [vmem:[%s4298 + $0x24] sm:$0xf]
      %v4695 = vld [vmem:[%s4298 + $0x28] sm:$0xf]
      %v4696 = vld [vmem:[%s4298 + $0x2c] sm:$0x1]
      %v4697 = vld [vmem:[%s4298 + $0x30] sm:$0xf]
      %v4698 = vld [vmem:[%s4298 + $0x34] sm:$0xf]
      %v4699 = vld [vmem:[%s4298 + $0x38] sm:$0x1]
      %v4700 = vld [vmem:[%s4298 + $0x3c] sm:$0xf]
      %v4701 = vld [vmem:[%s4298 + $0x40] sm:$0xf]
      %v4702 = vld [vmem:[%s4298 + $0x44] sm:$0x1]
      %v4703 = vld [vmem:[%s4298 + $0x48] sm:$0xf]
      %v4704 = vld [vmem:[%s4298 + $0x4c] sm:$0xf]
      %v4705 = vld [vmem:[%s4298 + $0x50] sm:$0x1]
      %v4706 = vld [vmem:[%s4298 + $0x54] sm:$0xf]
      %v4707 = vld [vmem:[%s4298 + $0x58] sm:$0xf]
      %v4708 = vld [vmem:[%s4298 + $0x5c] sm:$0x1]
      %v4709 = vld [vmem:[%s4298 + $0x60] sm:$0xf]
      %v4710 = vld [vmem:[%s4298 + $0x64] sm:$0xf]
      %v4711 = vld [vmem:[%s4298 + $0x68] sm:$0x1]
      %v4712 = vld [vmem:[%s4298 + $0x6c] sm:$0xf]
      %v4713 = vld [vmem:[%s4298 + $0x70] sm:$0xf]
      %v4714 = vld [vmem:[%s4298 + $0x74] sm:$0x1]
      %v4715 = vld [vmem:[%s4298 + $0x78] sm:$0xf]
      %v4716 = vld [vmem:[%s4298 + $0x7c] sm:$0xf]
      %v4717 = vld [vmem:[%s4298 + $0x80] sm:$0x1]
      %v4718 = vld [vmem:[%s4298 + $0x84] sm:$0xf]
      %v4719 = vld [vmem:[%s4298 + $0x88] sm:$0xf]
      %v4720 = vld [vmem:[%s4298 + $0x8c] sm:$0x1]
      %v4721 = vld [vmem:[%s4298 + $0x90] sm:$0xf]
      %v4722 = vld [vmem:[%s4298 + $0x94] sm:$0xf]
      %v4723 = vld [vmem:[%s4298 + $0x98] sm:$0x1]
      %v4724 = vld [vmem:[%s4298 + $0x9c] sm:$0xf]
      %v4725 = vld [vmem:[%s4298 + $0xa0] sm:$0xf]
      %v4726 = vld [vmem:[%s4298 + $0xa4] sm:$0x1]
      %v4727 = vld [vmem:[%s4298 + $0xa8] sm:$0xf]
      %v4728 = vld [vmem:[%s4298 + $0xac] sm:$0xf]
      %v4729 = vld [vmem:[%s4298 + $0xb0] sm:$0x1]
      %v4730 = vld [vmem:[%s4298 + $0xb4] sm:$0xf]
      %v4731 = vld [vmem:[%s4298 + $0xb8] sm:$0xf]
      %v4732 = vld [vmem:[%s4298 + $0xbc] sm:$0x1]
      %v4734 = vshrl.u32 %v4685, 16
      %v4736 = vrot.slane %v4734, 4
      %v4737 = vshll.u32 %v4685, 16
      %v4739 = vrot.slane %v4737, 5
      %v4740 = vor.u32 %v4736, %v4739
      %v4741 = vrot.slane %v4740, 4
      %v4743 = vshll.u32 %v4686, 16
      %v4745 = vrot.slane %v4743, 5
      %v4746 = vsel %vm1195, %v4741, %v4745
      %v4747 = vshrl.u32 %v4686, 16
      %v4749 = vrot.slane %v4747, 4
      %v4750 = vor.u32 %v4749, %v4745
      %v4751 = vrot.slane %v4750, 4
      %v4753 = vshll.u32 %v4687, 16
      %v4755 = vrot.slane %v4753, 5
      %v4756 = vsel %vm1195, %v4751, %v4755
      %v4758 = vshrl.u32 %v4688, 16
      %v4760 = vrot.slane %v4758, 4
      %v4761 = vshll.u32 %v4688, 16
      %v4763 = vrot.slane %v4761, 5
      %v4764 = vor.u32 %v4760, %v4763
      %v4765 = vrot.slane %v4764, 4
      %v4767 = vshll.u32 %v4689, 16
      %v4769 = vrot.slane %v4767, 5
      %v4770 = vsel %vm1195, %v4765, %v4769
      %v4771 = vshrl.u32 %v4689, 16
      %v4773 = vrot.slane %v4771, 4
      %v4774 = vor.u32 %v4773, %v4769
      %v4775 = vrot.slane %v4774, 4
      %v4777 = vshll.u32 %v4690, 16
      %v4779 = vrot.slane %v4777, 5
      %v4780 = vsel %vm1195, %v4775, %v4779
      %v4782 = vshrl.u32 %v4691, 16
      %v4784 = vrot.slane %v4782, 4
      %v4785 = vshll.u32 %v4691, 16
      %v4787 = vrot.slane %v4785, 5
      %v4788 = vor.u32 %v4784, %v4787
      %v4789 = vrot.slane %v4788, 4
      %v4791 = vshll.u32 %v4692, 16
      %v4793 = vrot.slane %v4791, 5
      %v4794 = vsel %vm1195, %v4789, %v4793
      %v4795 = vshrl.u32 %v4692, 16
      %v4797 = vrot.slane %v4795, 4
      %v4798 = vor.u32 %v4797, %v4793
      %v4799 = vrot.slane %v4798, 4
      %v4801 = vshll.u32 %v4693, 16
      %v4803 = vrot.slane %v4801, 5
      %v4804 = vsel %vm1195, %v4799, %v4803
      %v4806 = vshrl.u32 %v4694, 16
      %v4808 = vrot.slane %v4806, 4
      %v4809 = vshll.u32 %v4694, 16
      %v4811 = vrot.slane %v4809, 5
      %v4812 = vor.u32 %v4808, %v4811
      %v4813 = vrot.slane %v4812, 4
      %v4815 = vshll.u32 %v4695, 16
      %v4817 = vrot.slane %v4815, 5
      %v4818 = vsel %vm1195, %v4813, %v4817
      %v4819 = vshrl.u32 %v4695, 16
      %v4821 = vrot.slane %v4819, 4
      %v4822 = vor.u32 %v4821, %v4817
      %v4823 = vrot.slane %v4822, 4
      %v4825 = vshll.u32 %v4696, 16
      %v4827 = vrot.slane %v4825, 5
      %v4828 = vsel %vm1195, %v4823, %v4827
      %v4830 = vshrl.u32 %v4697, 16
      %v4832 = vrot.slane %v4830, 4
      %v4833 = vshll.u32 %v4697, 16
      %v4835 = vrot.slane %v4833, 5
      %v4836 = vor.u32 %v4832, %v4835
      %v4837 = vrot.slane %v4836, 4
      %v4839 = vshll.u32 %v4698, 16
      %v4841 = vrot.slane %v4839, 5
      %v4842 = vsel %vm1195, %v4837, %v4841
      %v4843 = vshrl.u32 %v4698, 16
      %v4845 = vrot.slane %v4843, 4
      %v4846 = vor.u32 %v4845, %v4841
      %v4847 = vrot.slane %v4846, 4
      %v4849 = vshll.u32 %v4699, 16
      %v4851 = vrot.slane %v4849, 5
      %v4852 = vsel %vm1195, %v4847, %v4851
      %v4854 = vshrl.u32 %v4700, 16
      %v4856 = vrot.slane %v4854, 4
      %v4857 = vshll.u32 %v4700, 16
      %v4859 = vrot.slane %v4857, 5
      %v4860 = vor.u32 %v4856, %v4859
      %v4861 = vrot.slane %v4860, 4
      %v4863 = vshll.u32 %v4701, 16
      %v4865 = vrot.slane %v4863, 5
      %v4866 = vsel %vm1195, %v4861, %v4865
      %v4867 = vshrl.u32 %v4701, 16
      %v4869 = vrot.slane %v4867, 4
      %v4870 = vor.u32 %v4869, %v4865
      %v4871 = vrot.slane %v4870, 4
      %v4873 = vshll.u32 %v4702, 16
      %v4875 = vrot.slane %v4873, 5
      %v4876 = vsel %vm1195, %v4871, %v4875
      %v4878 = vshrl.u32 %v4703, 16
      %v4880 = vrot.slane %v4878, 4
      %v4881 = vshll.u32 %v4703, 16
      %v4883 = vrot.slane %v4881, 5
      %v4884 = vor.u32 %v4880, %v4883
      %v4885 = vrot.slane %v4884, 4
      %v4887 = vshll.u32 %v4704, 16
      %v4889 = vrot.slane %v4887, 5
      %v4890 = vsel %vm1195, %v4885, %v4889
      %v4891 = vshrl.u32 %v4704, 16
      %v4893 = vrot.slane %v4891, 4
      %v4894 = vor.u32 %v4893, %v4889
      %v4895 = vrot.slane %v4894, 4
      %v4897 = vshll.u32 %v4705, 16
      %v4899 = vrot.slane %v4897, 5
      %v4900 = vsel %vm1195, %v4895, %v4899
      %v4902 = vshrl.u32 %v4706, 16
      %v4904 = vrot.slane %v4902, 4
      %v4905 = vshll.u32 %v4706, 16
      %v4907 = vrot.slane %v4905, 5
      %v4908 = vor.u32 %v4904, %v4907
      %v4909 = vrot.slane %v4908, 4
      %v4911 = vshll.u32 %v4707, 16
      %v4913 = vrot.slane %v4911, 5
      %v4914 = vsel %vm1195, %v4909, %v4913
      %v4915 = vshrl.u32 %v4707, 16
      %v4917 = vrot.slane %v4915, 4
      %v4918 = vor.u32 %v4917, %v4913
      %v4919 = vrot.slane %v4918, 4
      %v4921 = vshll.u32 %v4708, 16
      %v4923 = vrot.slane %v4921, 5
      %v4924 = vsel %vm1195, %v4919, %v4923
      %v4926 = vshrl.u32 %v4709, 16
      %v4928 = vrot.slane %v4926, 4
      %v4929 = vshll.u32 %v4709, 16
      %v4931 = vrot.slane %v4929, 5
      %v4932 = vor.u32 %v4928, %v4931
      %v4933 = vrot.slane %v4932, 4
      %v4935 = vshll.u32 %v4710, 16
      %v4937 = vrot.slane %v4935, 5
      %v4938 = vsel %vm1195, %v4933, %v4937
      %v4939 = vshrl.u32 %v4710, 16
      %v4941 = vrot.slane %v4939, 4
      %v4942 = vor.u32 %v4941, %v4937
      %v4943 = vrot.slane %v4942, 4
      %v4945 = vshll.u32 %v4711, 16
      %v4947 = vrot.slane %v4945, 5
      %v4948 = vsel %vm1195, %v4943, %v4947
      %v4950 = vshrl.u32 %v4712, 16
      %v4952 = vrot.slane %v4950, 4
      %v4953 = vshll.u32 %v4712, 16
      %v4955 = vrot.slane %v4953, 5
      %v4956 = vor.u32 %v4952, %v4955
      %v4957 = vrot.slane %v4956, 4
      %v4959 = vshll.u32 %v4713, 16
      %v4961 = vrot.slane %v4959, 5
      %v4962 = vsel %vm1195, %v4957, %v4961
      %v4963 = vshrl.u32 %v4713, 16
      %v4965 = vrot.slane %v4963, 4
      %v4966 = vor.u32 %v4965, %v4961
      %v4967 = vrot.slane %v4966, 4
      %v4969 = vshll.u32 %v4714, 16
      %v4971 = vrot.slane %v4969, 5
      %v4972 = vsel %vm1195, %v4967, %v4971
      %v4974 = vshrl.u32 %v4715, 16
      %v4976 = vrot.slane %v4974, 4
      %v4977 = vshll.u32 %v4715, 16
      %v4979 = vrot.slane %v4977, 5
      %v4980 = vor.u32 %v4976, %v4979
      %v4981 = vrot.slane %v4980, 4
      %v4983 = vshll.u32 %v4716, 16
      %v4985 = vrot.slane %v4983, 5
      %v4986 = vsel %vm1195, %v4981, %v4985
      %v4987 = vshrl.u32 %v4716, 16
      %v4989 = vrot.slane %v4987, 4
      %v4990 = vor.u32 %v4989, %v4985
      %v4991 = vrot.slane %v4990, 4
      %v4993 = vshll.u32 %v4717, 16
      %v4995 = vrot.slane %v4993, 5
      %v4996 = vsel %vm1195, %v4991, %v4995
      %v4998 = vshrl.u32 %v4718, 16
      %v5000 = vrot.slane %v4998, 4
      %v5001 = vshll.u32 %v4718, 16
      %v5003 = vrot.slane %v5001, 5
      %v5004 = vor.u32 %v5000, %v5003
      %v5005 = vrot.slane %v5004, 4
      %v5007 = vshll.u32 %v4719, 16
      %v5009 = vrot.slane %v5007, 5
      %v5010 = vsel %vm1195, %v5005, %v5009
      %v5011 = vshrl.u32 %v4719, 16
      %v5013 = vrot.slane %v5011, 4
      %v5014 = vor.u32 %v5013, %v5009
      %v5015 = vrot.slane %v5014, 4
      %v5017 = vshll.u32 %v4720, 16
      %v5019 = vrot.slane %v5017, 5
      %v5020 = vsel %vm1195, %v5015, %v5019
      %v5022 = vshrl.u32 %v4721, 16
      %v5024 = vrot.slane %v5022, 4
      %v5025 = vshll.u32 %v4721, 16
      %v5027 = vrot.slane %v5025, 5
      %v5028 = vor.u32 %v5024, %v5027
      %v5029 = vrot.slane %v5028, 4
      %v5031 = vshll.u32 %v4722, 16
      %v5033 = vrot.slane %v5031, 5
      %v5034 = vsel %vm1195, %v5029, %v5033
      %v5035 = vshrl.u32 %v4722, 16
      %v5037 = vrot.slane %v5035, 4
      %v5038 = vor.u32 %v5037, %v5033
      %v5039 = vrot.slane %v5038, 4
      %v5041 = vshll.u32 %v4723, 16
      %v5043 = vrot.slane %v5041, 5
      %v5044 = vsel %vm1195, %v5039, %v5043
      %v5046 = vshrl.u32 %v4724, 16
      %v5048 = vrot.slane %v5046, 4
      %v5049 = vshll.u32 %v4724, 16
      %v5051 = vrot.slane %v5049, 5
      %v5052 = vor.u32 %v5048, %v5051
      %v5053 = vrot.slane %v5052, 4
      %v5055 = vshll.u32 %v4725, 16
      %v5057 = vrot.slane %v5055, 5
      %v5058 = vsel %vm1195, %v5053, %v5057
      %v5059 = vshrl.u32 %v4725, 16
      %v5061 = vrot.slane %v5059, 4
      %v5062 = vor.u32 %v5061, %v5057
      %v5063 = vrot.slane %v5062, 4
      %v5065 = vshll.u32 %v4726, 16
      %v5067 = vrot.slane %v5065, 5
      %v5068 = vsel %vm1195, %v5063, %v5067
      %v5070 = vshrl.u32 %v4727, 16
      %v5072 = vrot.slane %v5070, 4
      %v5073 = vshll.u32 %v4727, 16
      %v5075 = vrot.slane %v5073, 5
      %v5076 = vor.u32 %v5072, %v5075
      %v5077 = vrot.slane %v5076, 4
      %v5079 = vshll.u32 %v4728, 16
      %v5081 = vrot.slane %v5079, 5
      %v5082 = vsel %vm1195, %v5077, %v5081
      %v5083 = vshrl.u32 %v4728, 16
      %v5085 = vrot.slane %v5083, 4
      %v5086 = vor.u32 %v5085, %v5081
      %v5087 = vrot.slane %v5086, 4
      %v5089 = vshll.u32 %v4729, 16
      %v5091 = vrot.slane %v5089, 5
      %v5092 = vsel %vm1195, %v5087, %v5091
      %v5094 = vshrl.u32 %v4730, 16
      %v5096 = vrot.slane %v5094, 4
      %v5097 = vshll.u32 %v4730, 16
      %v5099 = vrot.slane %v5097, 5
      %v5100 = vor.u32 %v5096, %v5099
      %v5101 = vrot.slane %v5100, 4
      %v5103 = vshll.u32 %v4731, 16
      %v5105 = vrot.slane %v5103, 5
      %v5106 = vsel %vm1195, %v5101, %v5105
      %v5107 = vshrl.u32 %v4731, 16
      %v5109 = vrot.slane %v5107, 4
      %v5110 = vor.u32 %v5109, %v5105
      %v5111 = vrot.slane %v5110, 4
      %v5113 = vshll.u32 %v4732, 16
      %v5115 = vrot.slane %v5113, 5
      %v5116 = vsel %vm1195, %v5111, %v5115
      %s5117 = scalar_lea.vmem %s3, 448
      %v5118 = vld [vmem:[%s5117] sm:$0xf]
      %v5119 = vld [vmem:[%s5117 + $0x4] sm:$0xf]
      %v5120 = vld [vmem:[%s5117 + $0x8] sm:$0xf]
      %v5121 = vld [vmem:[%s5117 + $0xc] sm:$0xf]
      %v5122 = vld [vmem:[%s5117 + $0x10] sm:$0xf]
      %v5123 = vld [vmem:[%s5117 + $0x14] sm:$0xf]
      %v5124 = vld [vmem:[%s5117 + $0x18] sm:$0xf]
      %v5125 = vld [vmem:[%s5117 + $0x1c] sm:$0xf]
      %v5126 = vld [vmem:[%s5117 + $0x20] sm:$0xf]
      %v5127 = vld [vmem:[%s5117 + $0x24] sm:$0xf]
      %v5128 = vld [vmem:[%s5117 + $0x28] sm:$0xf]
      %v5129 = vld [vmem:[%s5117 + $0x2c] sm:$0xf]
      %v5130 = vld [vmem:[%s5117 + $0x30] sm:$0xf]
      %v5131 = vld [vmem:[%s5117 + $0x34] sm:$0xf]
      %v5132 = vld [vmem:[%s5117 + $0x38] sm:$0xf]
      %v5133 = vld [vmem:[%s5117 + $0x3c] sm:$0xf]
      %v5134 = vunpack.c.l.b16 %v4746
      %v5135 = vunpack.c.l.b16 %v4756
      %v5136 = vunpack.c.l.b16 %v4770
      %v5137 = vunpack.c.l.b16 %v4780
      %v5138 = vunpack.c.l.b16 %v4794
      %v5139 = vunpack.c.l.b16 %v4804
      %v5140 = vunpack.c.l.b16 %v4818
      %v5141 = vunpack.c.l.b16 %v4828
      %v5142 = vunpack.c.l.b16 %v4842
      %v5143 = vunpack.c.l.b16 %v4852
      %v5144 = vunpack.c.l.b16 %v4866
      %v5145 = vunpack.c.l.b16 %v4876
      %v5146 = vunpack.c.l.b16 %v4890
      %v5147 = vunpack.c.l.b16 %v4900
      %v5148 = vunpack.c.l.b16 %v4914
      %v5149 = vunpack.c.l.b16 %v4924
      %v5150 = vunpack.c.l.b16 %v4938
      %v5151 = vunpack.c.l.b16 %v4948
      %v5152 = vunpack.c.l.b16 %v4962
      %v5153 = vunpack.c.l.b16 %v4972
      %v5154 = vunpack.c.l.b16 %v4986
      %v5155 = vunpack.c.l.b16 %v4996
      %v5156 = vunpack.c.l.b16 %v5010
      %v5157 = vunpack.c.l.b16 %v5020
      %v5158 = vunpack.c.l.b16 %v5034
      %v5159 = vunpack.c.l.b16 %v5044
      %v5160 = vunpack.c.l.b16 %v5058
      %v5161 = vunpack.c.l.b16 %v5068
      %v5162 = vunpack.c.l.b16 %v5082
      %v5163 = vunpack.c.l.b16 %v5092
      %v5164 = vunpack.c.l.b16 %v5106
      %v5165 = vunpack.c.l.b16 %v5116
      %v5166 = vpack.c.b16 %v5135, %v5134
      %v5167 = vpack.c.b16 %v5137, %v5136
      %v5168 = vpack.c.b16 %v5139, %v5138
      %v5169 = vpack.c.b16 %v5141, %v5140
      %v5170 = vpack.c.b16 %v5143, %v5142
      %v5171 = vpack.c.b16 %v5145, %v5144
      %v5172 = vpack.c.b16 %v5147, %v5146
      %v5173 = vpack.c.b16 %v5149, %v5148
      %v5174 = vpack.c.b16 %v5151, %v5150
      %v5175 = vpack.c.b16 %v5153, %v5152
      %v5176 = vpack.c.b16 %v5155, %v5154
      %v5177 = vpack.c.b16 %v5157, %v5156
      %v5178 = vpack.c.b16 %v5159, %v5158
      %v5179 = vpack.c.b16 %v5161, %v5160
      %v5180 = vpack.c.b16 %v5163, %v5162
      %v5181 = vpack.c.b16 %v5165, %v5164
      %v5214 = vunpack.c.l.b16 %v5118
      %v5215 = vunpack.c.l.b16 %v5119
      %v5216 = vunpack.c.l.b16 %v5120
      %v5217 = vunpack.c.l.b16 %v5121
      %v5218 = vunpack.c.l.b16 %v5122
      %v5219 = vunpack.c.l.b16 %v5123
      %v5220 = vunpack.c.l.b16 %v5124
      %v5221 = vunpack.c.l.b16 %v5125
      %v5222 = vunpack.c.l.b16 %v5126
      %v5223 = vunpack.c.l.b16 %v5127
      %v5224 = vunpack.c.l.b16 %v5128
      %v5225 = vunpack.c.l.b16 %v5129
      %v5226 = vunpack.c.l.b16 %v5130
      %v5227 = vunpack.c.l.b16 %v5131
      %v5228 = vunpack.c.l.b16 %v5132
      %v5229 = vunpack.c.l.b16 %v5133
      %v5230 = vpack.c.b16 %v5215, %v5214
      %v5231 = vpack.c.b16 %v5217, %v5216
      %v5232 = vpack.c.b16 %v5219, %v5218
      %v5233 = vpack.c.b16 %v5221, %v5220
      %v5234 = vpack.c.b16 %v5223, %v5222
      %v5235 = vpack.c.b16 %v5225, %v5224
      %v5236 = vpack.c.b16 %v5227, %v5226
      %v5237 = vpack.c.b16 %v5229, %v5228
      %5246 = vmatprep.subr.bf16.mxu0 0
      %5247 = vmatpush1.bf16.msra.mxu0 %v5230
      %5248 = vmatprep.subr.bf16.mxu0 0
      %5249 = vmatpush1.bf16.msra.mxu0 %v5231
      %5250 = vmatprep.subr.bf16.mxu0 0
      %5251 = vmatpush1.bf16.msra.mxu0 %v5232
      %5252 = vmatprep.subr.bf16.mxu0 0
      %5253 = vmatpush1.bf16.msra.mxu0 %v5233
      %5254 = vmatprep.subr.bf16.mxu0 0
      %5255 = vmatpush1.bf16.msra.mxu0 %v5234
      %5256 = vmatprep.subr.bf16.mxu0 0
      %5257 = vmatpush1.bf16.msra.mxu0 %v5235
      %5258 = vmatprep.subr.bf16.mxu0 0
      %5259 = vmatpush1.bf16.msra.mxu0 %v5236
      %5260 = vmatprep.subr.bf16.mxu0 0
      %5261 = vmatpush1.bf16.msra.mxu0 %v5237
      %5262 = vmatprep.subr.bf16.mxu0 0
      %5263 = vmatpush1.bf16.msra.mxu0 0
      %5264 = vmatprep.subr.bf16.mxu0 0
      %5265 = vmatpush1.bf16.msra.mxu0 0
      %5266 = vmatprep.subr.bf16.mxu0 0
      %5267 = vmatpush1.bf16.msra.mxu0 0
      %5268 = vmatprep.subr.bf16.mxu0 0
      %5269 = vmatpush1.bf16.msra.mxu0 0
      %5270 = vmatprep.subr.bf16.mxu0 0
      %5271 = vmatpush1.bf16.msra.mxu0 0
      %5272 = vmatprep.subr.bf16.mxu0 0
      %5273 = vmatpush1.bf16.msra.mxu0 0
      %5274 = vmatprep.subr.bf16.mxu0 0
      %5275 = vmatpush1.bf16.msra.mxu0 0
      %5276 = vmatprep.subr.bf16.mxu0 0
      %5277 = vmatpush1.bf16.msra.mxu0 0
      %5278 = vmatprep.mubr.bf16.mxu0 0
      %5279 = vmatmul.mubr.bf16.gmra.mrb[0].mxu0 %v5166
      %v5280 = vpop.f32.mrb[0].mxu0
      %v5281 = vadd.f32 0.0, %v5280
      %v5282 = vpop.f32.mrb[0].mxu0
      %v5283 = vpop.f32.mrb[0].mxu0
      %v5284 = vadd.f32 0.0, %v5283
      %v5285 = vpop.f32.mrb[0].mxu0
      %5286 = vmatprep.mubr.bf16.mxu0 0
      %5287 = vmatmul.mubr.bf16.gmra.mrb[0].mxu0 %v5167
      %v5288 = vpop.f32.mrb[0].mxu0
      %v5289 = vadd.f32 0.0, %v5288
      %v5290 = vpop.f32.mrb[0].mxu0
      %v5291 = vpop.f32.mrb[0].mxu0
      %v5292 = vadd.f32 0.0, %v5291
      %v5293 = vpop.f32.mrb[0].mxu0
      %5294 = vmatprep.mubr.bf16.mxu0 0
      %5295 = vmatmul.mubr.bf16.gmra.mrb[0].mxu0 %v5168
      %v5296 = vpop.f32.mrb[0].mxu0
      %v5297 = vadd.f32 0.0, %v5296
      %v5298 = vpop.f32.mrb[0].mxu0
      %v5299 = vpop.f32.mrb[0].mxu0
      %v5300 = vadd.f32 0.0, %v5299
      %v5301 = vpop.f32.mrb[0].mxu0
      %5302 = vmatprep.mubr.bf16.mxu0 0
      %5303 = vmatmul.mubr.bf16.gmra.mrb[0].mxu0 %v5169
      %v5304 = vpop.f32.mrb[0].mxu0
      %v5305 = vadd.f32 0.0, %v5304
      %v5306 = vpop.f32.mrb[0].mxu0
      %v5307 = vpop.f32.mrb[0].mxu0
      %v5308 = vadd.f32 0.0, %v5307
      %v5309 = vpop.f32.mrb[0].mxu0
      %5310 = vmatprep.mubr.bf16.mxu0 0
      %5311 = vmatmul.mubr.bf16.gmra.mrb[0].mxu0 %v5170
      %v5312 = vpop.f32.mrb[0].mxu0
      %v5313 = vadd.f32 0.0, %v5312
      %v5314 = vpop.f32.mrb[0].mxu0
      %v5315 = vpop.f32.mrb[0].mxu0
      %v5316 = vadd.f32 0.0, %v5315
      %v5317 = vpop.f32.mrb[0].mxu0
      %5318 = vmatprep.mubr.bf16.mxu0 0
      %5319 = vmatmul.mubr.bf16.gmra.mrb[0].mxu0 %v5171
      %v5320 = vpop.f32.mrb[0].mxu0
      %v5321 = vadd.f32 0.0, %v5320
      %v5322 = vpop.f32.mrb[0].mxu0
      %v5323 = vpop.f32.mrb[0].mxu0
      %v5324 = vadd.f32 0.0, %v5323
      %v5325 = vpop.f32.mrb[0].mxu0
      %5326 = vmatprep.mubr.bf16.mxu0 0
      %5327 = vmatmul.mubr.bf16.gmra.mrb[0].mxu0 %v5172
      %v5328 = vpop.f32.mrb[0].mxu0
      %v5329 = vadd.f32 0.0, %v5328
      %v5330 = vpop.f32.mrb[0].mxu0
      %v5331 = vpop.f32.mrb[0].mxu0
      %v5332 = vadd.f32 0.0, %v5331
      %v5333 = vpop.f32.mrb[0].mxu0
      %5334 = vmatprep.mubr.bf16.mxu0 0
      %5335 = vmatmul.mubr.bf16.gmra.mrb[0].mxu0 %v5173
      %v5336 = vpop.f32.mrb[0].mxu0
      %v5337 = vadd.f32 0.0, %v5336
      %v5338 = vpop.f32.mrb[0].mxu0
      %v5339 = vpop.f32.mrb[0].mxu0
      %v5340 = vadd.f32 0.0, %v5339
      %v5341 = vpop.f32.mrb[0].mxu0
      %5342 = vmatprep.mubr.bf16.mxu0 0
      %5343 = vmatmul.mubr.bf16.gmra.mrb[0].mxu0 %v5174
      %v5344 = vpop.f32.mrb[0].mxu0
      %v5345 = vadd.f32 0.0, %v5344
      %v5346 = vpop.f32.mrb[0].mxu0
      %v5347 = vpop.f32.mrb[0].mxu0
      %v5348 = vadd.f32 0.0, %v5347
      %v5349 = vpop.f32.mrb[0].mxu0
      %5350 = vmatprep.mubr.bf16.mxu0 0
      %5351 = vmatmul.mubr.bf16.gmra.mrb[0].mxu0 %v5175
      %v5352 = vpop.f32.mrb[0].mxu0
      %v5353 = vadd.f32 0.0, %v5352
      %v5354 = vpop.f32.mrb[0].mxu0
      %v5355 = vpop.f32.mrb[0].mxu0
      %v5356 = vadd.f32 0.0, %v5355
      %v5357 = vpop.f32.mrb[0].mxu0
      %5358 = vmatprep.mubr.bf16.mxu0 0
      %5359 = vmatmul.mubr.bf16.gmra.mrb[0].mxu0 %v5176
      %v5360 = vpop.f32.mrb[0].mxu0
      %v5361 = vadd.f32 0.0, %v5360
      %v5362 = vpop.f32.mrb[0].mxu0
      %v5363 = vpop.f32.mrb[0].mxu0
      %v5364 = vadd.f32 0.0, %v5363
      %v5365 = vpop.f32.mrb[0].mxu0
      %5366 = vmatprep.mubr.bf16.mxu0 0
      %5367 = vmatmul.mubr.bf16.gmra.mrb[0].mxu0 %v5177
      %v5368 = vpop.f32.mrb[0].mxu0
      %v5369 = vadd.f32 0.0, %v5368
      %v5370 = vpop.f32.mrb[0].mxu0
      %v5371 = vpop.f32.mrb[0].mxu0
      %v5372 = vadd.f32 0.0, %v5371
      %v5373 = vpop.f32.mrb[0].mxu0
      %5374 = vmatprep.mubr.bf16.mxu0 0
      %5375 = vmatmul.mubr.bf16.gmra.mrb[0].mxu0 %v5178
      %v5376 = vpop.f32.mrb[0].mxu0
      %v5377 = vadd.f32 0.0, %v5376
      %v5378 = vpop.f32.mrb[0].mxu0
      %v5379 = vpop.f32.mrb[0].mxu0
      %v5380 = vadd.f32 0.0, %v5379
      %v5381 = vpop.f32.mrb[0].mxu0
      %5382 = vmatprep.mubr.bf16.mxu0 0
      %5383 = vmatmul.mubr.bf16.gmra.mrb[0].mxu0 %v5179
      %v5384 = vpop.f32.mrb[0].mxu0
      %v5385 = vadd.f32 0.0, %v5384
      %v5386 = vpop.f32.mrb[0].mxu0
      %v5387 = vpop.f32.mrb[0].mxu0
      %v5388 = vadd.f32 0.0, %v5387
      %v5389 = vpop.f32.mrb[0].mxu0
      %5390 = vmatprep.mubr.bf16.mxu0 0
      %5391 = vmatmul.mubr.bf16.gmra.mrb[0].mxu0 %v5180
      %v5392 = vpop.f32.mrb[0].mxu0
      %v5393 = vadd.f32 0.0, %v5392
      %v5394 = vpop.f32.mrb[0].mxu0
      %v5395 = vpop.f32.mrb[0].mxu0
      %v5396 = vadd.f32 0.0, %v5395
      %v5397 = vpop.f32.mrb[0].mxu0
      %5398 = vmatprep.mubr.bf16.mxu0 0
      %5399 = vmatmul.mubr.bf16.gmra.mrb[0].mxu0 %v5181
      %v5400 = vpop.f32.mrb[0].mxu0
      %v5401 = vadd.f32 0.0, %v5400
      %v5402 = vpop.f32.mrb[0].mxu0
      %v5403 = vpop.f32.mrb[0].mxu0
      %v5404 = vadd.f32 0.0, %v5403
      %v5405 = vpop.f32.mrb[0].mxu0
      %5406 = vdwg.mxu0
      %v5407 = vadd.f32 %v4653, %v5281
      %v5408 = vadd.f32 %v4654, %v5284
      %v5409 = vadd.f32 %v4655, %v5289
      %v5410 = vadd.f32 %v4656, %v5292
      %v5411 = vadd.f32 %v4657, %v5297
      %v5412 = vadd.f32 %v4658, %v5300
      %v5413 = vadd.f32 %v4659, %v5305
      %v5414 = vadd.f32 %v4660, %v5308
      %v5415 = vadd.f32 %v4661, %v5313
      %v5416 = vadd.f32 %v4662, %v5316
      %v5417 = vadd.f32 %v4663, %v5321
      %v5418 = vadd.f32 %v4664, %v5324
      %v5419 = vadd.f32 %v4665, %v5329
      %v5420 = vadd.f32 %v4666, %v5332
      %v5421 = vadd.f32 %v4667, %v5337
      %v5422 = vadd.f32 %v4668, %v5340
      %v5423 = vadd.f32 %v4669, %v5345
      %v5424 = vadd.f32 %v4670, %v5348
      %v5425 = vadd.f32 %v4671, %v5353
      %v5426 = vadd.f32 %v4672, %v5356
      %v5427 = vadd.f32 %v4673, %v5361
      %v5428 = vadd.f32 %v4674, %v5364
      %v5429 = vadd.f32 %v4675, %v5369
      %v5430 = vadd.f32 %v4676, %v5372
      %v5431 = vadd.f32 %v4677, %v5377
      %v5432 = vadd.f32 %v4678, %v5380
      %v5433 = vadd.f32 %v4679, %v5385
      %v5434 = vadd.f32 %v4680, %v5388
      %v5435 = vadd.f32 %v4681, %v5393
      %v5436 = vadd.f32 %v4682, %v5396
      %v5437 = vadd.f32 %v4683, %v5401
      %v5438 = vadd.f32 %v4684, %v5404
      %v5439 = vld [vmem:[%s4298] sm:$0xe]
      %v5440 = vld [vmem:[%s4298 + $0xc] sm:$0xe]
      %v5441 = vld [vmem:[%s4298 + $0x18] sm:$0xe]
      %v5442 = vld [vmem:[%s4298 + $0x24] sm:$0xe]
      %v5443 = vld [vmem:[%s4298 + $0x30] sm:$0xe]
      %v5444 = vld [vmem:[%s4298 + $0x3c] sm:$0xe]
      %v5445 = vld [vmem:[%s4298 + $0x48] sm:$0xe]
      %v5446 = vld [vmem:[%s4298 + $0x54] sm:$0xe]
      %v5447 = vld [vmem:[%s4298 + $0x60] sm:$0xe]
      %v5448 = vld [vmem:[%s4298 + $0x6c] sm:$0xe]
      %v5449 = vld [vmem:[%s4298 + $0x78] sm:$0xe]
      %v5450 = vld [vmem:[%s4298 + $0x84] sm:$0xe]
      %v5451 = vld [vmem:[%s4298 + $0x90] sm:$0xe]
      %v5452 = vld [vmem:[%s4298 + $0x9c] sm:$0xe]
      %v5453 = vld [vmem:[%s4298 + $0xa8] sm:$0xe]
      %v5454 = vld [vmem:[%s4298 + $0xb4] sm:$0xe]
      %v5503 = vrot.slane %v5439, 5
      %v5504 = vrot.slane %v5503, 4
      %v5505 = vrot.slane %v4686, 5
      %v5506 = vsel %vm2225, %v5504, %v5505
      %v5507 = vrot.slane %v5505, 4
      %v5508 = vrot.slane %v4687, 5
      %v5509 = vsel %vm2225, %v5507, %v5508
      %v5510 = vrot.slane %v5440, 5
      %v5511 = vrot.slane %v5510, 4
      %v5512 = vrot.slane %v4689, 5
      %v5513 = vsel %vm2225, %v5511, %v5512
      %v5514 = vrot.slane %v5512, 4
      %v5515 = vrot.slane %v4690, 5
      %v5516 = vsel %vm2225, %v5514, %v5515
      %v5517 = vrot.slane %v5441, 5
      %v5518 = vrot.slane %v5517, 4
      %v5519 = vrot.slane %v4692, 5
      %v5520 = vsel %vm2225, %v5518, %v5519
      %v5521 = vrot.slane %v5519, 4
      %v5522 = vrot.slane %v4693, 5
      %v5523 = vsel %vm2225, %v5521, %v5522
      %v5524 = vrot.slane %v5442, 5
      %v5525 = vrot.slane %v5524, 4
      %v5526 = vrot.slane %v4695, 5
      %v5527 = vsel %vm2225, %v5525, %v5526
      %v5528 = vrot.slane %v5526, 4
      %v5529 = vrot.slane %v4696, 5
      %v5530 = vsel %vm2225, %v5528, %v5529
      %v5531 = vrot.slane %v5443, 5
      %v5532 = vrot.slane %v5531, 4
      %v5533 = vrot.slane %v4698, 5
      %v5534 = vsel %vm2225, %v5532, %v5533
      %v5535 = vrot.slane %v5533, 4
      %v5536 = vrot.slane %v4699, 5
      %v5537 = vsel %vm2225, %v5535, %v5536
      %v5538 = vrot.slane %v5444, 5
      %v5539 = vrot.slane %v5538, 4
      %v5540 = vrot.slane %v4701, 5
      %v5541 = vsel %vm2225, %v5539, %v5540
      %v5542 = vrot.slane %v5540, 4
      %v5543 = vrot.slane %v4702, 5
      %v5544 = vsel %vm2225, %v5542, %v5543
      %v5545 = vrot.slane %v5445, 5
      %v5546 = vrot.slane %v5545, 4
      %v5547 = vrot.slane %v4704, 5
      %v5548 = vsel %vm2225, %v5546, %v5547
      %v5549 = vrot.slane %v5547, 4
      %v5550 = vrot.slane %v4705, 5
      %v5551 = vsel %vm2225, %v5549, %v5550
      %v5552 = vrot.slane %v5446, 5
      %v5553 = vrot.slane %v5552, 4
      %v5554 = vrot.slane %v4707, 5
      %v5555 = vsel %vm2225, %v5553, %v5554
      %v5556 = vrot.slane %v5554, 4
      %v5557 = vrot.slane %v4708, 5
      %v5558 = vsel %vm2225, %v5556, %v5557
      %v5559 = vrot.slane %v5447, 5
      %v5560 = vrot.slane %v5559, 4
      %v5561 = vrot.slane %v4710, 5
      %v5562 = vsel %vm2225, %v5560, %v5561
      %v5563 = vrot.slane %v5561, 4
      %v5564 = vrot.slane %v4711, 5
      %v5565 = vsel %vm2225, %v5563, %v5564
      %v5566 = vrot.slane %v5448, 5
      %v5567 = vrot.slane %v5566, 4
      %v5568 = vrot.slane %v4713, 5
      %v5569 = vsel %vm2225, %v5567, %v5568
      %v5570 = vrot.slane %v5568, 4
      %v5571 = vrot.slane %v4714, 5
      %v5572 = vsel %vm2225, %v5570, %v5571
      %v5573 = vrot.slane %v5449, 5
      %v5574 = vrot.slane %v5573, 4
      %v5575 = vrot.slane %v4716, 5
      %v5576 = vsel %vm2225, %v5574, %v5575
      %v5577 = vrot.slane %v5575, 4
      %v5578 = vrot.slane %v4717, 5
      %v5579 = vsel %vm2225, %v5577, %v5578
      %v5580 = vrot.slane %v5450, 5
      %v5581 = vrot.slane %v5580, 4
      %v5582 = vrot.slane %v4719, 5
      %v5583 = vsel %vm2225, %v5581, %v5582
      %v5584 = vrot.slane %v5582, 4
      %v5585 = vrot.slane %v4720, 5
      %v5586 = vsel %vm2225, %v5584, %v5585
      %v5587 = vrot.slane %v5451, 5
      %v5588 = vrot.slane %v5587, 4
      %v5589 = vrot.slane %v4722, 5
      %v5590 = vsel %vm2225, %v5588, %v5589
      %v5591 = vrot.slane %v5589, 4
      %v5592 = vrot.slane %v4723, 5
      %v5593 = vsel %vm2225, %v5591, %v5592
      %v5594 = vrot.slane %v5452, 5
      %v5595 = vrot.slane %v5594, 4
      %v5596 = vrot.slane %v4725, 5
      %v5597 = vsel %vm2225, %v5595, %v5596
      %v5598 = vrot.slane %v5596, 4
      %v5599 = vrot.slane %v4726, 5
      %v5600 = vsel %vm2225, %v5598, %v5599
      %v5601 = vrot.slane %v5453, 5
      %v5602 = vrot.slane %v5601, 4
      %v5603 = vrot.slane %v4728, 5
      %v5604 = vsel %vm2225, %v5602, %v5603
      %v5605 = vrot.slane %v5603, 4
      %v5606 = vrot.slane %v4729, 5
      %v5607 = vsel %vm2225, %v5605, %v5606
      %v5608 = vrot.slane %v5454, 5
      %v5609 = vrot.slane %v5608, 4
      %v5610 = vrot.slane %v4731, 5
      %v5611 = vsel %vm2225, %v5609, %v5610
      %v5612 = vrot.slane %v5610, 4
      %v5613 = vrot.slane %v4732, 5
      %v5614 = vsel %vm2225, %v5612, %v5613
      %s5615 = scalar_lea.vmem %s3, 512
      %v5616 = vld [vmem:[%s5615] sm:$0xf]
      %v5617 = vld [vmem:[%s5615 + $0x4] sm:$0xf]
      %v5618 = vld [vmem:[%s5615 + $0x8] sm:$0xf]
      %v5619 = vld [vmem:[%s5615 + $0xc] sm:$0xf]
      %v5620 = vld [vmem:[%s5615 + $0x10] sm:$0xf]
      %v5621 = vld [vmem:[%s5615 + $0x14] sm:$0xf]
      %v5622 = vld [vmem:[%s5615 + $0x18] sm:$0xf]
      %v5623 = vld [vmem:[%s5615 + $0x1c] sm:$0xf]
      %v5624 = vld [vmem:[%s5615 + $0x20] sm:$0xf]
      %v5625 = vld [vmem:[%s5615 + $0x24] sm:$0xf]
      %v5626 = vld [vmem:[%s5615 + $0x28] sm:$0xf]
      %v5627 = vld [vmem:[%s5615 + $0x2c] sm:$0xf]
      %v5628 = vld [vmem:[%s5615 + $0x30] sm:$0xf]
      %v5629 = vld [vmem:[%s5615 + $0x34] sm:$0xf]
      %v5630 = vld [vmem:[%s5615 + $0x38] sm:$0xf]
      %v5631 = vld [vmem:[%s5615 + $0x3c] sm:$0xf]
      %v5632 = vunpack.c.l.b16 %v5506
      %v5633 = vunpack.c.l.b16 %v5509
      %v5634 = vunpack.c.l.b16 %v5513
      %v5635 = vunpack.c.l.b16 %v5516
      %v5636 = vunpack.c.l.b16 %v5520
      %v5637 = vunpack.c.l.b16 %v5523
      %v5638 = vunpack.c.l.b16 %v5527
      %v5639 = vunpack.c.l.b16 %v5530
      %v5640 = vunpack.c.l.b16 %v5534
      %v5641 = vunpack.c.l.b16 %v5537
      %v5642 = vunpack.c.l.b16 %v5541
      %v5643 = vunpack.c.l.b16 %v5544
      %v5644 = vunpack.c.l.b16 %v5548
      %v5645 = vunpack.c.l.b16 %v5551
      %v5646 = vunpack.c.l.b16 %v5555
      %v5647 = vunpack.c.l.b16 %v5558
      %v5648 = vunpack.c.l.b16 %v5562
      %v5649 = vunpack.c.l.b16 %v5565
      %v5650 = vunpack.c.l.b16 %v5569
      %v5651 = vunpack.c.l.b16 %v5572
      %v5652 = vunpack.c.l.b16 %v5576
      %v5653 = vunpack.c.l.b16 %v5579
      %v5654 = vunpack.c.l.b16 %v5583
      %v5655 = vunpack.c.l.b16 %v5586
      %v5656 = vunpack.c.l.b16 %v5590
      %v5657 = vunpack.c.l.b16 %v5593
      %v5658 = vunpack.c.l.b16 %v5597
      %v5659 = vunpack.c.l.b16 %v5600
      %v5660 = vunpack.c.l.b16 %v5604
      %v5661 = vunpack.c.l.b16 %v5607
      %v5662 = vunpack.c.l.b16 %v5611
      %v5663 = vunpack.c.l.b16 %v5614
      %v5664 = vpack.c.b16 %v5633, %v5632
      %v5665 = vpack.c.b16 %v5635, %v5634
      %v5666 = vpack.c.b16 %v5637, %v5636
      %v5667 = vpack.c.b16 %v5639, %v5638
      %v5668 = vpack.c.b16 %v5641, %v5640
      %v5669 = vpack.c.b16 %v5643, %v5642
      %v5670 = vpack.c.b16 %v5645, %v5644
      %v5671 = vpack.c.b16 %v5647, %v5646
      %v5672 = vpack.c.b16 %v5649, %v5648
      %v5673 = vpack.c.b16 %v5651, %v5650
      %v5674 = vpack.c.b16 %v5653, %v5652
      %v5675 = vpack.c.b16 %v5655, %v5654
      %v5676 = vpack.c.b16 %v5657, %v5656
      %v5677 = vpack.c.b16 %v5659, %v5658
      %v5678 = vpack.c.b16 %v5661, %v5660
      %v5679 = vpack.c.b16 %v5663, %v5662
      %v5712 = vunpack.c.l.b16 %v5616
      %v5713 = vunpack.c.l.b16 %v5617
      %v5714 = vunpack.c.l.b16 %v5618
      %v5715 = vunpack.c.l.b16 %v5619
      %v5716 = vunpack.c.l.b16 %v5620
      %v5717 = vunpack.c.l.b16 %v5621
      %v5718 = vunpack.c.l.b16 %v5622
      %v5719 = vunpack.c.l.b16 %v5623
      %v5720 = vunpack.c.l.b16 %v5624
      %v5721 = vunpack.c.l.b16 %v5625
      %v5722 = vunpack.c.l.b16 %v5626
      %v5723 = vunpack.c.l.b16 %v5627
      %v5724 = vunpack.c.l.b16 %v5628
      %v5725 = vunpack.c.l.b16 %v5629
      %v5726 = vunpack.c.l.b16 %v5630
      %v5727 = vunpack.c.l.b16 %v5631
      %v5728 = vpack.c.b16 %v5713, %v5712
      %v5729 = vpack.c.b16 %v5715, %v5714
      %v5730 = vpack.c.b16 %v5717, %v5716
      %v5731 = vpack.c.b16 %v5719, %v5718
      %v5732 = vpack.c.b16 %v5721, %v5720
      %v5733 = vpack.c.b16 %v5723, %v5722
      %v5734 = vpack.c.b16 %v5725, %v5724
      %v5735 = vpack.c.b16 %v5727, %v5726
      %5744 = vmatprep.subr.bf16.mxu0 0
      %5745 = vmatpush1.bf16.msra.mxu0 %v5728
      %5746 = vmatprep.subr.bf16.mxu0 0
      %5747 = vmatpush1.bf16.msra.mxu0 %v5729
      %5748 = vmatprep.subr.bf16.mxu0 0
      %5749 = vmatpush1.bf16.msra.mxu0 %v5730
      %5750 = vmatprep.subr.bf16.mxu0 0
      %5751 = vmatpush1.bf16.msra.mxu0 %v5731
      %5752 = vmatprep.subr.bf16.mxu0 0
      %5753 = vmatpush1.bf16.msra.mxu0 %v5732
      %5754 = vmatprep.subr.bf16.mxu0 0
      %5755 = vmatpush1.bf16.msra.mxu0 %v5733
      %5756 = vmatprep.subr.bf16.mxu0 0
      %5757 = vmatpush1.bf16.msra.mxu0 %v5734
      %5758 = vmatprep.subr.bf16.mxu0 0
      %5759 = vmatpush1.bf16.msra.mxu0 %v5735
      %5760 = vmatprep.subr.bf16.mxu0 0
      %5761 = vmatpush1.bf16.msra.mxu0 0
      %5762 = vmatprep.subr.bf16.mxu0 0
      %5763 = vmatpush1.bf16.msra.mxu0 0
      %5764 = vmatprep.subr.bf16.mxu0 0
      %5765 = vmatpush1.bf16.msra.mxu0 0
      %5766 = vmatprep.subr.bf16.mxu0 0
      %5767 = vmatpush1.bf16.msra.mxu0 0
      %5768 = vmatprep.subr.bf16.mxu0 0
      %5769 = vmatpush1.bf16.msra.mxu0 0
      %5770 = vmatprep.subr.bf16.mxu0 0
      %5771 = vmatpush1.bf16.msra.mxu0 0
      %5772 = vmatprep.subr.bf16.mxu0 0
      %5773 = vmatpush1.bf16.msra.mxu0 0
      %5774 = vmatprep.subr.bf16.mxu0 0
      %5775 = vmatpush1.bf16.msra.mxu0 0
      %5776 = vmatprep.mubr.bf16.mxu0 0
      %5777 = vmatmul.mubr.bf16.gmra.mrb[0].mxu0 %v5664
      %v5778 = vpop.f32.mrb[0].mxu0
      %v5779 = vadd.f32 0.0, %v5778
      %v5780 = vpop.f32.mrb[0].mxu0
      %v5781 = vpop.f32.mrb[0].mxu0
      %v5782 = vadd.f32 0.0, %v5781
      %v5783 = vpop.f32.mrb[0].mxu0
      %5784 = vmatprep.mubr.bf16.mxu0 0
      %5785 = vmatmul.mubr.bf16.gmra.mrb[0].mxu0 %v5665
      %v5786 = vpop.f32.mrb[0].mxu0
      %v5787 = vadd.f32 0.0, %v5786
      %v5788 = vpop.f32.mrb[0].mxu0
      %v5789 = vpop.f32.mrb[0].mxu0
      %v5790 = vadd.f32 0.0, %v5789
      %v5791 = vpop.f32.mrb[0].mxu0
      %5792 = vmatprep.mubr.bf16.mxu0 0
      %5793 = vmatmul.mubr.bf16.gmra.mrb[0].mxu0 %v5666
      %v5794 = vpop.f32.mrb[0].mxu0
      %v5795 = vadd.f32 0.0, %v5794
      %v5796 = vpop.f32.mrb[0].mxu0
      %v5797 = vpop.f32.mrb[0].mxu0
      %v5798 = vadd.f32 0.0, %v5797
      %v5799 = vpop.f32.mrb[0].mxu0
      %5800 = vmatprep.mubr.bf16.mxu0 0
      %5801 = vmatmul.mubr.bf16.gmra.mrb[0].mxu0 %v5667
      %v5802 = vpop.f32.mrb[0].mxu0
      %v5803 = vadd.f32 0.0, %v5802
      %v5804 = vpop.f32.mrb[0].mxu0
      %v5805 = vpop.f32.mrb[0].mxu0
      %v5806 = vadd.f32 0.0, %v5805
      %v5807 = vpop.f32.mrb[0].mxu0
      %5808 = vmatprep.mubr.bf16.mxu0 0
      %5809 = vmatmul.mubr.bf16.gmra.mrb[0].mxu0 %v5668
      %v5810 = vpop.f32.mrb[0].mxu0
      %v5811 = vadd.f32 0.0, %v5810
      %v5812 = vpop.f32.mrb[0].mxu0
      %v5813 = vpop.f32.mrb[0].mxu0
      %v5814 = vadd.f32 0.0, %v5813
      %v5815 = vpop.f32.mrb[0].mxu0
      %5816 = vmatprep.mubr.bf16.mxu0 0
      %5817 = vmatmul.mubr.bf16.gmra.mrb[0].mxu0 %v5669
      %v5818 = vpop.f32.mrb[0].mxu0
      %v5819 = vadd.f32 0.0, %v5818
      %v5820 = vpop.f32.mrb[0].mxu0
      %v5821 = vpop.f32.mrb[0].mxu0
      %v5822 = vadd.f32 0.0, %v5821
      %v5823 = vpop.f32.mrb[0].mxu0
      %5824 = vmatprep.mubr.bf16.mxu0 0
      %5825 = vmatmul.mubr.bf16.gmra.mrb[0].mxu0 %v5670
      %v5826 = vpop.f32.mrb[0].mxu0
      %v5827 = vadd.f32 0.0, %v5826
      %v5828 = vpop.f32.mrb[0].mxu0
      %v5829 = vpop.f32.mrb[0].mxu0
      %v5830 = vadd.f32 0.0, %v5829
      %v5831 = vpop.f32.mrb[0].mxu0
      %5832 = vmatprep.mubr.bf16.mxu0 0
      %5833 = vmatmul.mubr.bf16.gmra.mrb[0].mxu0 %v5671
      %v5834 = vpop.f32.mrb[0].mxu0
      %v5835 = vadd.f32 0.0, %v5834
      %v5836 = vpop.f32.mrb[0].mxu0
      %v5837 = vpop.f32.mrb[0].mxu0
      %v5838 = vadd.f32 0.0, %v5837
      %v5839 = vpop.f32.mrb[0].mxu0
      %5840 = vmatprep.mubr.bf16.mxu0 0
      %5841 = vmatmul.mubr.bf16.gmra.mrb[0].mxu0 %v5672
      %v5842 = vpop.f32.mrb[0].mxu0
      %v5843 = vadd.f32 0.0, %v5842
      %v5844 = vpop.f32.mrb[0].mxu0
      %v5845 = vpop.f32.mrb[0].mxu0
      %v5846 = vadd.f32 0.0, %v5845
      %v5847 = vpop.f32.mrb[0].mxu0
      %5848 = vmatprep.mubr.bf16.mxu0 0
      %5849 = vmatmul.mubr.bf16.gmra.mrb[0].mxu0 %v5673
      %v5850 = vpop.f32.mrb[0].mxu0
      %v5851 = vadd.f32 0.0, %v5850
      %v5852 = vpop.f32.mrb[0].mxu0
      %v5853 = vpop.f32.mrb[0].mxu0
      %v5854 = vadd.f32 0.0, %v5853
      %v5855 = vpop.f32.mrb[0].mxu0
      %5856 = vmatprep.mubr.bf16.mxu0 0
      %5857 = vmatmul.mubr.bf16.gmra.mrb[0].mxu0 %v5674
      %v5858 = vpop.f32.mrb[0].mxu0
      %v5859 = vadd.f32 0.0, %v5858
      %v5860 = vpop.f32.mrb[0].mxu0
      %v5861 = vpop.f32.mrb[0].mxu0
      %v5862 = vadd.f32 0.0, %v5861
      %v5863 = vpop.f32.mrb[0].mxu0
      %5864 = vmatprep.mubr.bf16.mxu0 0
      %5865 = vmatmul.mubr.bf16.gmra.mrb[0].mxu0 %v5675
      %v5866 = vpop.f32.mrb[0].mxu0
      %v5867 = vadd.f32 0.0, %v5866
      %v5868 = vpop.f32.mrb[0].mxu0
      %v5869 = vpop.f32.mrb[0].mxu0
      %v5870 = vadd.f32 0.0, %v5869
      %v5871 = vpop.f32.mrb[0].mxu0
      %5872 = vmatprep.mubr.bf16.mxu0 0
      %5873 = vmatmul.mubr.bf16.gmra.mrb[0].mxu0 %v5676
      %v5874 = vpop.f32.mrb[0].mxu0
      %v5875 = vadd.f32 0.0, %v5874
      %v5876 = vpop.f32.mrb[0].mxu0
      %v5877 = vpop.f32.mrb[0].mxu0
      %v5878 = vadd.f32 0.0, %v5877
      %v5879 = vpop.f32.mrb[0].mxu0
      %5880 = vmatprep.mubr.bf16.mxu0 0
      %5881 = vmatmul.mubr.bf16.gmra.mrb[0].mxu0 %v5677
      %v5882 = vpop.f32.mrb[0].mxu0
      %v5883 = vadd.f32 0.0, %v5882
      %v5884 = vpop.f32.mrb[0].mxu0
      %v5885 = vpop.f32.mrb[0].mxu0
      %v5886 = vadd.f32 0.0, %v5885
      %v5887 = vpop.f32.mrb[0].mxu0
      %5888 = vmatprep.mubr.bf16.mxu0 0
      %5889 = vmatmul.mubr.bf16.gmra.mrb[0].mxu0 %v5678
      %v5890 = vpop.f32.mrb[0].mxu0
      %v5891 = vadd.f32 0.0, %v5890
      %v5892 = vpop.f32.mrb[0].mxu0
      %v5893 = vpop.f32.mrb[0].mxu0
      %v5894 = vadd.f32 0.0, %v5893
      %v5895 = vpop.f32.mrb[0].mxu0
      %5896 = vmatprep.mubr.bf16.mxu0 0
      %5897 = vmatmul.mubr.bf16.gmra.mrb[0].mxu0 %v5679
      %v5898 = vpop.f32.mrb[0].mxu0
      %v5899 = vadd.f32 0.0, %v5898
      %v5900 = vpop.f32.mrb[0].mxu0
      %v5901 = vpop.f32.mrb[0].mxu0
      %v5902 = vadd.f32 0.0, %v5901
      %v5903 = vpop.f32.mrb[0].mxu0
      %5904 = vdwg.mxu0
      %v5905 = vadd.f32 %v5407, %v5779
      %v5906 = vadd.f32 %v5408, %v5782
      %v5907 = vadd.f32 %v5409, %v5787
      %v5908 = vadd.f32 %v5410, %v5790
      %v5909 = vadd.f32 %v5411, %v5795
      %v5910 = vadd.f32 %v5412, %v5798
      %v5911 = vadd.f32 %v5413, %v5803
      %v5912 = vadd.f32 %v5414, %v5806
      %v5913 = vadd.f32 %v5415, %v5811
      %v5914 = vadd.f32 %v5416, %v5814
      %v5915 = vadd.f32 %v5417, %v5819
      %v5916 = vadd.f32 %v5418, %v5822
      %v5917 = vadd.f32 %v5419, %v5827
      %v5918 = vadd.f32 %v5420, %v5830
      %v5919 = vadd.f32 %v5421, %v5835
      %v5920 = vadd.f32 %v5422, %v5838
      %v5921 = vadd.f32 %v5423, %v5843
      %v5922 = vadd.f32 %v5424, %v5846
      %v5923 = vadd.f32 %v5425, %v5851
      %v5924 = vadd.f32 %v5426, %v5854
      %v5925 = vadd.f32 %v5427, %v5859
      %v5926 = vadd.f32 %v5428, %v5862
      %v5927 = vadd.f32 %v5429, %v5867
      %v5928 = vadd.f32 %v5430, %v5870
      %v5929 = vadd.f32 %v5431, %v5875
      %v5930 = vadd.f32 %v5432, %v5878
      %v5931 = vadd.f32 %v5433, %v5883
      %v5932 = vadd.f32 %v5434, %v5886
      %v5933 = vadd.f32 %v5435, %v5891
      %v5934 = vadd.f32 %v5436, %v5894
      %v5935 = vadd.f32 %v5437, %v5899
      %v5936 = vadd.f32 %v5438, %v5902
      %v5937 = vld [vmem:[%s4] sm:$0x1]
      %v5939 = vlaneseq
      %v5940 = vshrl.u32 %v5939, 7
      %v5941 = vsub.s32 0, %v5940
      %v5942 = vrot.slane %v5937, %v5941
      %v5944 = vadd.f32 %v5905, %v5942
      %v5945 = vadd.f32 %v5906, %v5942
      %v5946 = vadd.f32 %v5907, %v5942
      %v5947 = vadd.f32 %v5908, %v5942
      %v5948 = vadd.f32 %v5909, %v5942
      %v5949 = vadd.f32 %v5910, %v5942
      %v5950 = vadd.f32 %v5911, %v5942
      %v5951 = vadd.f32 %v5912, %v5942
      %v5952 = vadd.f32 %v5913, %v5942
      %v5953 = vadd.f32 %v5914, %v5942
      %v5954 = vadd.f32 %v5915, %v5942
      %v5955 = vadd.f32 %v5916, %v5942
      %v5956 = vadd.f32 %v5917, %v5942
      %v5957 = vadd.f32 %v5918, %v5942
      %v5958 = vadd.f32 %v5919, %v5942
      %v5959 = vadd.f32 %v5920, %v5942
      %v5960 = vadd.f32 %v5921, %v5942
      %v5961 = vadd.f32 %v5922, %v5942
      %v5962 = vadd.f32 %v5923, %v5942
      %v5963 = vadd.f32 %v5924, %v5942
      %v5964 = vadd.f32 %v5925, %v5942
      %v5965 = vadd.f32 %v5926, %v5942
      %v5966 = vadd.f32 %v5927, %v5942
      %v5967 = vadd.f32 %v5928, %v5942
      %v5968 = vadd.f32 %v5929, %v5942
      %v5969 = vadd.f32 %v5930, %v5942
      %v5970 = vadd.f32 %v5931, %v5942
      %v5971 = vadd.f32 %v5932, %v5942
      %v5972 = vadd.f32 %v5933, %v5942
      %v5973 = vadd.f32 %v5934, %v5942
      %v5974 = vadd.f32 %v5935, %v5942
      %v5975 = vadd.f32 %v5936, %v5942
      %v5976 = vmax.f32 %v5944, 0.0
      %v5977 = vmax.f32 %v5945, 0.0
      %v5978 = vmax.f32 %v5946, 0.0
      %v5979 = vmax.f32 %v5947, 0.0
      %v5980 = vmax.f32 %v5948, 0.0
      %v5981 = vmax.f32 %v5949, 0.0
      %v5982 = vmax.f32 %v5950, 0.0
      %v5983 = vmax.f32 %v5951, 0.0
      %v5984 = vmax.f32 %v5952, 0.0
      %v5985 = vmax.f32 %v5953, 0.0
      %v5986 = vmax.f32 %v5954, 0.0
      %v5987 = vmax.f32 %v5955, 0.0
      %v5988 = vmax.f32 %v5956, 0.0
      %v5989 = vmax.f32 %v5957, 0.0
      %v5990 = vmax.f32 %v5958, 0.0
      %v5991 = vmax.f32 %v5959, 0.0
      %v5992 = vmax.f32 %v5960, 0.0
      %v5993 = vmax.f32 %v5961, 0.0
      %v5994 = vmax.f32 %v5962, 0.0
      %v5995 = vmax.f32 %v5963, 0.0
      %v5996 = vmax.f32 %v5964, 0.0
      %v5997 = vmax.f32 %v5965, 0.0
      %v5998 = vmax.f32 %v5966, 0.0
      %v5999 = vmax.f32 %v5967, 0.0
      %v6000 = vmax.f32 %v5968, 0.0
      %v6001 = vmax.f32 %v5969, 0.0
      %v6002 = vmax.f32 %v5970, 0.0
      %v6003 = vmax.f32 %v5971, 0.0
      %v6004 = vmax.f32 %v5972, 0.0
      %v6005 = vmax.f32 %v5973, 0.0
      %v6006 = vmax.f32 %v5974, 0.0
      %v6007 = vmax.f32 %v5975, 0.0
      %v6008 = vadd.f32 %v5976, %v226
      %v6009 = vadd.f32 %v5977, %v227
      %v6010 = vadd.f32 %v5978, %v228
      %v6011 = vadd.f32 %v5979, %v229
      %v6012 = vadd.f32 %v5980, %v230
      %v6013 = vadd.f32 %v5981, %v231
      %v6014 = vadd.f32 %v5982, %v232
      %v6015 = vadd.f32 %v5983, %v233
      %v6016 = vadd.f32 %v5984, %v234
      %v6017 = vadd.f32 %v5985, %v235
      %v6018 = vadd.f32 %v5986, %v236
      %v6019 = vadd.f32 %v5987, %v237
      %v6020 = vadd.f32 %v5988, %v238
      %v6021 = vadd.f32 %v5989, %v239
      %v6022 = vadd.f32 %v5990, %v240
      %v6023 = vadd.f32 %v5991, %v241
      %v6024 = vadd.f32 %v5992, %v242
      %v6025 = vadd.f32 %v5993, %v243
      %v6026 = vadd.f32 %v5994, %v244
      %v6027 = vadd.f32 %v5995, %v245
      %v6028 = vadd.f32 %v5996, %v246
      %v6029 = vadd.f32 %v5997, %v247
      %v6030 = vadd.f32 %v5998, %v248
      %v6031 = vadd.f32 %v5999, %v249
      %v6032 = vadd.f32 %v6000, %v250
      %v6033 = vadd.f32 %v6001, %v251
      %v6034 = vadd.f32 %v6002, %v252
      %v6035 = vadd.f32 %v6003, %v253
      %v6036 = vadd.f32 %v6004, %v254
      %v6037 = vadd.f32 %v6005, %v255
      %v6038 = vadd.f32 %v6006, %v256
      %v6039 = vadd.f32 %v6007, %v257
      %v6040 = vmax.f32 %v6008, 0.0
      %v6041 = vmax.f32 %v6009, 0.0
      %v6042 = vmax.f32 %v6010, 0.0
      %v6043 = vmax.f32 %v6011, 0.0
      %v6044 = vmax.f32 %v6012, 0.0
      %v6045 = vmax.f32 %v6013, 0.0
      %v6046 = vmax.f32 %v6014, 0.0
      %v6047 = vmax.f32 %v6015, 0.0
      %v6048 = vmax.f32 %v6016, 0.0
      %v6049 = vmax.f32 %v6017, 0.0
      %v6050 = vmax.f32 %v6018, 0.0
      %v6051 = vmax.f32 %v6019, 0.0
      %v6052 = vmax.f32 %v6020, 0.0
      %v6053 = vmax.f32 %v6021, 0.0
      %v6054 = vmax.f32 %v6022, 0.0
      %v6055 = vmax.f32 %v6023, 0.0
      %v6056 = vmax.f32 %v6024, 0.0
      %v6057 = vmax.f32 %v6025, 0.0
      %v6058 = vmax.f32 %v6026, 0.0
      %v6059 = vmax.f32 %v6027, 0.0
      %v6060 = vmax.f32 %v6028, 0.0
      %v6061 = vmax.f32 %v6029, 0.0
      %v6062 = vmax.f32 %v6030, 0.0
      %v6063 = vmax.f32 %v6031, 0.0
      %v6064 = vmax.f32 %v6032, 0.0
      %v6065 = vmax.f32 %v6033, 0.0
      %v6066 = vmax.f32 %v6034, 0.0
      %v6067 = vmax.f32 %v6035, 0.0
      %v6068 = vmax.f32 %v6036, 0.0
      %v6069 = vmax.f32 %v6037, 0.0
      %v6070 = vmax.f32 %v6038, 0.0
      %v6071 = vmax.f32 %v6039, 0.0
      %6072 = vst [vmem:[%s224] sm:$0xff] %v6040
      %6073 = vst [vmem:[%s224 + $0x8] sm:$0xff] %v6041
      %6074 = vst [vmem:[%s224 + $0x10] sm:$0xff] %v6042
      %6075 = vst [vmem:[%s224 + $0x18] sm:$0xff] %v6043
      %6076 = vst [vmem:[%s224 + $0x20] sm:$0xff] %v6044
      %6077 = vst [vmem:[%s224 + $0x28] sm:$0xff] %v6045
      %6078 = vst [vmem:[%s224 + $0x30] sm:$0xff] %v6046
      %6079 = vst [vmem:[%s224 + $0x38] sm:$0xff] %v6047
      %6080 = vst [vmem:[%s224 + $0x40] sm:$0xff] %v6048
      %6081 = vst [vmem:[%s224 + $0x48] sm:$0xff] %v6049
      %6082 = vst [vmem:[%s224 + $0x50] sm:$0xff] %v6050
      %6083 = vst [vmem:[%s224 + $0x58] sm:$0xff] %v6051
      %6084 = vst [vmem:[%s224 + $0x60] sm:$0xff] %v6052
      %6085 = vst [vmem:[%s224 + $0x68] sm:$0xff] %v6053
      %6086 = vst [vmem:[%s224 + $0x70] sm:$0xff] %v6054
      %6087 = vst [vmem:[%s224 + $0x78] sm:$0xff] %v6055
      %6088 = vst [vmem:[%s224 + $0x80] sm:$0xff] %v6056
      %6089 = vst [vmem:[%s224 + $0x88] sm:$0xff] %v6057
      %6090 = vst [vmem:[%s224 + $0x90] sm:$0xff] %v6058
      %6091 = vst [vmem:[%s224 + $0x98] sm:$0xff] %v6059
      %6092 = vst [vmem:[%s224 + $0xa0] sm:$0xff] %v6060
      %6093 = vst [vmem:[%s224 + $0xa8] sm:$0xff] %v6061
      %6094 = vst [vmem:[%s224 + $0xb0] sm:$0xff] %v6062
      %6095 = vst [vmem:[%s224 + $0xb8] sm:$0xff] %v6063
      %6096 = vst [vmem:[%s224 + $0xc0] sm:$0xff] %v6064
      %6097 = vst [vmem:[%s224 + $0xc8] sm:$0xff] %v6065
      %6098 = vst [vmem:[%s224 + $0xd0] sm:$0xff] %v6066
      %6099 = vst [vmem:[%s224 + $0xd8] sm:$0xff] %v6067
      %6100 = vst [vmem:[%s224 + $0xe0] sm:$0xff] %v6068
      %6101 = vst [vmem:[%s224 + $0xe8] sm:$0xff] %v6069
      %6102 = vst [vmem:[%s224 + $0xf0] sm:$0xff] %v6070
      %6103 = vst [vmem:[%s224 + $0xf8] sm:$0xff] %v6071
      %p6104 = scmp.lt.s32.totalorder %s16, 1
      %s6105 = scalar_select %p6104, %s16, 1
      %s6106 = smul.addr %s6105, 32
      %s6107 = smul.addr %s6106, 8
      %s6108 = scalar_lea.vmem %s5, %s6107
      // Predicated region
      $region41: #{resnet_bottleneck_block_forward.1} parent=39 // pred_check
        %p6109 = pneg %p144
      $region42: #{resnet_bottleneck_block_forward.1} parent=39 // pred_check_branch
        %6111 = sbr.rel (%p6109) target = $region44
      $region43: #{resnet_bottleneck_block_forward.1} parent=39 // pred_region
        _
      $region44: #{resnet_bottleneck_block_forward.1} parent=39 // pred_fallthru
        _
    $region40: #{resnet_bottleneck_block_forward.1} parent=5 // pred_fallthru
      _
    %p6112 = scmp.le.s32.totalorder 2, %s11
    // Predicated region
    $region45: #{resnet_bottleneck_block_forward.1} parent=5 // pred_check
      %p6113 = pneg %p6112
    $region46: #{resnet_bottleneck_block_forward.1} parent=5 // pred_check_branch
      %6115 = sbr.rel (%p6113) target = $region48
    $region47: #{resnet_bottleneck_block_forward.1} parent=5 // pred_region
      %s6116 = ssub.s32 %s11, 2
      // Predicated region
      $region49: #{resnet_bottleneck_block_forward.1} parent=47 // pred_check
        %p6117 = pneg %p150
      $region50: #{resnet_bottleneck_block_forward.1} parent=47 // pred_check_branch
        %6119 = sbr.rel (%p6117) target = $region52
      $region51: #{resnet_bottleneck_block_forward.1} parent=47 // pred_region
        %p6120 = scmp.lt.s32.totalorder %s17, 1
        %s6121 = scalar_select %p6120, %s17, 1
        %s6122 = smul.addr %s6121, 32
        %s6123 = smul.addr %s6122, 8
        %s6124 = scalar_lea.vmem %s5, %s6123
      $region52: #{resnet_bottleneck_block_forward.1} parent=47 // pred_fallthru
        _
    $region48: #{resnet_bottleneck_block_forward.1} parent=5 // pred_fallthru
      _
  $region6: #{resnet_bottleneck_block_forward.1} parent=0 // loop_footer
    %s15 = sadd.s32 1, %s11
  $region7: #{resnet_bottleneck_block_forward.1} parent=0 // loop_footer_branch
    %10 = sbr.rel target = $region3
  $region8: #{resnet_bottleneck_block_forward.1} parent=0 // loop_exit
    _

</llo_original>
